<compile_context>
chip_gen: v6e
topology: v6e:2x2x1
jax: 0.10.0
libtpu: 0.0.40
codegen_flags: <defaults>
</compile_context>

<pallas_src>
import functools

import jax
import jax.numpy as jnp
from jax.experimental import pallas as pl
from jax.experimental.pallas import tpu as pltpu


# -----------------------------------------------------------------------------
# Config (deterministic synthetic model — no checkpoint load)
# -----------------------------------------------------------------------------
class SpyreConfig:
    vocab_size = 256
    hidden = 128
    n_heads = 4
    head_dim = 32          # hidden // n_heads
    n_layers = 2
    ffn = 256
    max_positions = 32
    dtype = jnp.float32    # non-sendnn backend -> float32 in the PyTorch module
    ln_eps = 1e-5


# -----------------------------------------------------------------------------
# Per-(sequence, layer) kernel.  grid = (B, L); residual carried in VMEM scratch.
# -----------------------------------------------------------------------------
def _layer_kernel(
    x_ref, mask_ref,
    ln1g_ref, ln1b_ref, qkvw_ref, qkvb_ref, ow_ref, ob_ref,
    ln2g_ref, ln2b_ref, m1w_ref, m1b_ref, m2w_ref, m2b_ref,
    lnfg_ref, lnfb_ref, lmw_ref, lmb_ref,
    logits_ref, k_out_ref, v_out_ref,
    x_res_ref,
    *, n_heads, head_dim, hidden, eps):

    f32 = jnp.float32
    bf16 = jnp.bfloat16
    layer = pl.program_id(1)
    n_layers = pl.num_programs(1)
    scale = 1.0 / (head_dim ** 0.5)

    def mm(a, w):
        # [M, K] @ [K, N] -> [M, N]; bf16 MXU operands, f32 accumulation.
        return jax.lax.dot_general(a, w, (((1,), (0,)), ((), ())),
                                   preferred_element_type=f32)

    def mm_nt(a, b):
        # [M, K] @ [N, K]^T -> [M, N]
        return jax.lax.dot_general(a, b, (((1,), (1,)), ((), ())),
                                   preferred_element_type=f32)

    def layernorm(x, g, b):
        mu = jnp.mean(x, axis=-1, keepdims=True)
        d = x - mu
        var = jnp.mean(d * d, axis=-1, keepdims=True)
        return d * jax.lax.rsqrt(var + eps) * g + b

    # Layer 0 of this sequence: load embedding activations into the resident
    # scratch (persists across the "arbitrary" layer axis).
    @pl.when(layer == 0)
    def _():
        x_res_ref[...] = x_ref[...].astype(f32)

    x = x_res_ref[...]                        # [S, D] f32
    mask_add = mask_ref[...].astype(f32)      # [S, S] additive (0 / -1e30)

    # --- attention block (pre-LN) ---
    h1 = layernorm(x, ln1g_ref[...], ln1b_ref[...]).astype(bf16)
    qkv = mm(h1, qkvw_ref[...]) + qkvb_ref[...]           # [S, 3D] f32
    q_f = qkv[:, 0 * hidden:1 * hidden] * scale           # fold softmax scale into Q
    k_f = qkv[:, 1 * hidden:2 * hidden]
    v_f = qkv[:, 2 * hidden:3 * hidden]

    # past_key_value_states analog (prefill): lane-dense [S, H*Dh] per (layer, seq).
    k_out_ref[...] = k_f.astype(k_out_ref.dtype)
    v_out_ref[...] = v_f.astype(v_out_ref.dtype)

    # bf16 MXU operands cast once per layer (hoisted out of the head loop).
    q_b = q_f.astype(bf16)
    k_b = k_f.astype(bf16)
    v_b = v_f.astype(bf16)

    heads = []
    for h in range(n_heads):                  # static unroll (H small)
        sl = slice(h * head_dim, (h + 1) * head_dim)
        s = mm_nt(q_b[:, sl], k_b[:, sl]) + mask_add      # [S, S] f32
        s = s - jnp.max(s, axis=-1, keepdims=True)
        p = jnp.exp(s)
        p = p * pl.reciprocal(jnp.sum(p, axis=-1, keepdims=True), approx=True)
        heads.append(mm(p.astype(bf16), v_b[:, sl]))      # [S, Dh] f32
    # Concat heads along the lane axis; ONE K=D output projection.
    attn = jnp.concatenate(heads, axis=-1).astype(bf16)   # [S, D]
    x = x + mm(attn, ow_ref[...]) + ob_ref[...]           # residual

    # --- MLP block (pre-LN), fused tanh-GELU ---
    # TODO(synk): reference model may use exact erf-GELU; tanh approx used.
    h2 = layernorm(x, ln2g_ref[...], ln2b_ref[...]).astype(bf16)
    m = mm(h2, m1w_ref[...]) + m1b_ref[...]               # [S, F] f32
    m = 0.5 * m * (1.0 + jnp.tanh(
        0.7978845608028654 * (m + 0.044715 * m * m * m)))
    x = x + mm(m.astype(bf16), m2w_ref[...]) + m2b_ref[...]   # residual

    x_res_ref[...] = x                        # carry residual to next layer

    # --- only_last_token=True: final LN + LM head on the last row only ---
    @pl.when(layer == n_layers - 1)
    def _():
        x_last = x[-1:, :]                                 # static sublane slice
        x_last = layernorm(x_last, lnfg_ref[...], lnfb_ref[...])
        logits = mm(x_last.astype(bf16), lmw_ref[...]) + lmb_ref[...]
        logits_ref[...] = logits.astype(logits_ref.dtype)  # [1, V]


# -----------------------------------------------------------------------------
# Parameters (stacked per-layer; MXU weights live in bf16 in HBM)
# -----------------------------------------------------------------------------
def init_params(key, cfg):
    L, D, F = cfg.n_layers, cfg.hidden, cfg.ffn
    V, P = cfg.vocab_size, cfg.max_positions
    wdt = jnp.bfloat16   # matmul weights: bf16 in HBM (half DMA / VMEM bytes)

    def nrm(k, shape, dtype, std=0.02):
        return (std * jax.random.normal(k, shape, dtype=jnp.float32)).astype(dtype)

    ks = jax.random.split(key, 7)
    return {
        "wte": nrm(ks[0], (V, D), cfg.dtype),
        "wpe": nrm(ks[1], (P, D), cfg.dtype),
        "ln1_g": jnp.ones((L, 1, D), cfg.dtype),
        "ln1_b": jnp.zeros((L, 1, D), cfg.dtype),
        "qkv_w": nrm(ks[2], (L, D, 3 * D), wdt),
        "qkv_b": jnp.zeros((L, 1, 3 * D), cfg.dtype),
        "o_w": nrm(ks[3], (L, D, D), wdt),
        "o_b": jnp.zeros((L, 1, D), cfg.dtype),
        "ln2_g": jnp.ones((L, 1, D), cfg.dtype),
        "ln2_b": jnp.zeros((L, 1, D), cfg.dtype),
        "mlp1_w": nrm(ks[4], (L, D, F), wdt),
        "mlp1_b": jnp.zeros((L, 1, F), cfg.dtype),
        "mlp2_w": nrm(ks[5], (L, F, D), wdt),
        "mlp2_b": jnp.zeros((L, 1, D), cfg.dtype),
        "ln_f_g": jnp.ones((1, D), cfg.dtype),
        "ln_f_b": jnp.zeros((1, D), cfg.dtype),
        "lm_head_w": nrm(ks[6], (D, V), wdt),
        "lm_head_b": jnp.zeros((1, V), cfg.dtype),
    }


# -----------------------------------------------------------------------------
# SpyreCausalLM.forward equivalent (prefill)
# -----------------------------------------------------------------------------
def spyre_causal_lm_forward(params, cfg, input_ids, positions, masks,
                            is_prompt, indices):
    """
    input_ids: [B, S] int32, positions: [B, S] int32,
    masks:     [B, S, S] float32 additive attention mask (0 / -1e30),
    is_prompt: bool (prompt pass -> past KV cache cleared),
    indices:   [N] int32 row selection applied to the last-token logits.
    Returns (logits[indices], past_key_value_states).
    """
    B, S = input_ids.shape
    D, H, Dh, F = cfg.hidden, cfg.n_heads, cfg.head_dim, cfg.ffn
    L, V = cfg.n_layers, cfg.vocab_size

    if is_prompt:
        past_key_value_states = None  # mirrors `self.past_key_value_states = None`
        del past_key_value_states
    # TODO(synk): decode-step KV-cache consumption (past_key_value_states reuse
    # / append) is not exercised here; this implements the prefill pass.

    # Embedding lookup + position embedding (glue; gather has no tiled hot path)
    x = (params["wte"][input_ids] + params["wpe"][positions]).astype(cfg.dtype)  # [B,S,D]
    masks = masks.astype(jnp.float32)                                            # [B,S,S]

    kernel = functools.partial(_layer_kernel, n_heads=H, head_dim=Dh,
                               hidden=D, eps=cfg.ln_eps)

    per_seq = lambda b, l: (b, 0, 0)      # fetched once per sequence
    per_layer = lambda b, l: (l, 0, 0)    # streamed per layer (auto-pipelined)
    shared = lambda b, l: (0, 0)          # fetched once

    in_specs = [
        pl.BlockSpec((None, S, D), per_seq),           # x
        pl.BlockSpec((None, S, S), per_seq),           # mask
        pl.BlockSpec((None, 1, D), per_layer),         # ln1_g
        pl.BlockSpec((None, 1, D), per_layer),         # ln1_b
        pl.BlockSpec((None, D, 3 * D), per_layer),     # qkv_w
        pl.BlockSpec((None, 1, 3 * D), per_layer),     # qkv_b
        pl.BlockSpec((None, D, D), per_layer),         # o_w
        pl.BlockSpec((None, 1, D), per_layer),         # o_b
        pl.BlockSpec((None, 1, D), per_layer),         # ln2_g
        pl.BlockSpec((None, 1, D), per_layer),         # ln2_b
        pl.BlockSpec((None, D, F), per_layer),         # mlp1_w
        pl.BlockSpec((None, 1, F), per_layer),         # mlp1_b
        pl.BlockSpec((None, F, D), per_layer),         # mlp2_w
        pl.BlockSpec((None, 1, D), per_layer),         # mlp2_b
        pl.BlockSpec((1, D), shared),                  # ln_f_g
        pl.BlockSpec((1, D), shared),                  # ln_f_b
        pl.BlockSpec((D, V), shared),                  # lm_head_w
        pl.BlockSpec((1, V), shared),                  # lm_head_b
    ]
    out_specs = (
        pl.BlockSpec((None, 1, V), per_seq),                          # logits
        pl.BlockSpec((None, None, S, D), lambda b, l: (l, b, 0, 0)),  # K cache
        pl.BlockSpec((None, None, S, D), lambda b, l: (l, b, 0, 0)),  # V cache
    )

    inputs = (x, masks,
              params["ln1_g"], params["ln1_b"], params["qkv_w"], params["qkv_b"],
              params["o_w"], params["o_b"], params["ln2_g"], params["ln2_b"],
              params["mlp1_w"], params["mlp1_b"], params["mlp2_w"], params["mlp2_b"],
              params["ln_f_g"], params["ln_f_b"],
              params["lm_head_w"], params["lm_head_b"])

    logits, k_all, v_all = pl.pallas_call(
        kernel,
        grid=(B, L),
        out_shape=(jax.ShapeDtypeStruct((B, 1, V), cfg.dtype),
                   jax.ShapeDtypeStruct((L, B, S, D), cfg.dtype),
                   jax.ShapeDtypeStruct((L, B, S, D), cfg.dtype)),
        in_specs=in_specs,
        out_specs=out_specs,
        scratch_shapes=[pltpu.VMEM((S, D), jnp.float32)],   # resident residual
        compiler_params=pltpu.CompilerParams(
            dimension_semantics=("parallel", "arbitrary"),
            vmem_limit_bytes=32 * 1024 * 1024),
    )(*inputs)

    logits = logits.reshape(B, V)

    # past_key_value_states analog: lane-dense [B, S, H, Dh] per layer
    # (reshape only — no post-kernel HBM transpose).
    k_all = k_all.reshape(L, B, S, H, Dh)
    v_all = v_all.reshape(L, B, S, H, Dh)
    new_kv = [(k_all[l], v_all[l]) for l in range(L)]

    # TODO(synk): torch._dynamo.mark_dynamic on KV tensors has no JAX equivalent.
    logits = logits[indices]                  # logits[self.indices]
    return logits, new_kv


# -----------------------------------------------------------------------------
# main
# -----------------------------------------------------------------------------
if __name__ == "__main__":
    cfg = SpyreConfig()
    B, S = 2, 8

    key = jax.random.PRNGKey(0)
    kp, ki = jax.random.split(key)
    params = init_params(kp, cfg)

    input_ids = jax.random.randint(ki, (B, S), 0, cfg.vocab_size, dtype=jnp.int32)
    positions = jnp.broadcast_to(jnp.arange(S, dtype=jnp.int32)[None, :], (B, S))

    # additive causal mask: 0 where attendable, -1e30 where masked
    causal = jnp.tril(jnp.ones((S, S), dtype=bool))
    masks = jnp.where(causal, 0.0, -1e30).astype(jnp.float32)
    masks = jnp.broadcast_to(masks[None, :, :], (B, S, S))

    indices = jnp.arange(B, dtype=jnp.int32)   # self.indices (select all sequences)

    @jax.jit
    def prefill(input_ids, positions, masks, indices):
        return spyre_causal_lm_forward(params, cfg, input_ids, positions, masks,
                                       is_prompt=True, indices=indices)

    logits, past_kv = prefill(input_ids, positions, masks, indices)
    logits = jax.block_until_ready(logits)

    assert logits.shape == (B, cfg.vocab_size)
    assert logits.dtype == cfg.dtype
    assert bool(jnp.all(jnp.isfinite(logits)))
    assert len(past_kv) == cfg.n_layers
    assert past_kv[0][0].shape == (B, S, cfg.n_heads, cfg.head_dim)
    assert bool(jnp.all(jnp.isfinite(past_kv[0][0])))
    print("KERNEL_OK")
</pallas_src>

<mosaic_0001>
module attributes {stable_mosaic.version = 11 : i64} {
  func.func @_layer_kernel(%arg0: i32, %arg1: i32, %arg2: memref<1x8x128xf32, #tpu.memory_space<vmem>>, %arg3: memref<1x8x8xf32, #tpu.memory_space<vmem>>, %arg4: memref<1x1x128xf32, #tpu.memory_space<vmem>>, %arg5: memref<1x1x128xf32, #tpu.memory_space<vmem>>, %arg6: memref<1x128x384xbf16, #tpu.memory_space<vmem>>, %arg7: memref<1x1x384xf32, #tpu.memory_space<vmem>>, %arg8: memref<1x128x128xbf16, #tpu.memory_space<vmem>>, %arg9: memref<1x1x128xf32, #tpu.memory_space<vmem>>, %arg10: memref<1x1x128xf32, #tpu.memory_space<vmem>>, %arg11: memref<1x1x128xf32, #tpu.memory_space<vmem>>, %arg12: memref<1x128x256xbf16, #tpu.memory_space<vmem>>, %arg13: memref<1x1x256xf32, #tpu.memory_space<vmem>>, %arg14: memref<1x256x128xbf16, #tpu.memory_space<vmem>>, %arg15: memref<1x1x128xf32, #tpu.memory_space<vmem>>, %arg16: memref<1x128xf32, #tpu.memory_space<vmem>>, %arg17: memref<1x128xf32, #tpu.memory_space<vmem>>, %arg18: memref<128x256xbf16, #tpu.memory_space<vmem>>, %arg19: memref<1x256xf32, #tpu.memory_space<vmem>>, %arg20: memref<1x1x256xf32, #tpu.memory_space<vmem>>, %arg21: memref<1x1x8x128xf32, #tpu.memory_space<vmem>>, %arg22: memref<1x1x8x128xf32, #tpu.memory_space<vmem>>, %arg23: memref<8x128xf32, #tpu.memory_space<vmem>>) attributes {dimension_semantics = [#tpu.dimension_semantics<parallel>, #tpu.dimension_semantics<arbitrary>], iteration_bounds = array<i64: 2, 2>, scalar_prefetch = 0 : i64, scratch_operands = 1 : i64, tpu.core_type = #tpu.core_type<tc>, window_params = [{transform_indices = @transform_0, window_bounds = array<i64: 1, 8, 128>}, {transform_indices = @transform_1, window_bounds = array<i64: 1, 8, 8>}, {transform_indices = @transform_2, window_bounds = array<i64: 1, 1, 128>}, {transform_indices = @transform_3, window_bounds = array<i64: 1, 1, 128>}, {transform_indices = @transform_4, window_bounds = array<i64: 1, 128, 384>}, {transform_indices = @transform_5, window_bounds = array<i64: 1, 1, 384>}, {transform_indices = @transform_6, window_bounds = array<i64: 1, 128, 128>}, {transform_indices = @transform_7, window_bounds = array<i64: 1, 1, 128>}, {transform_indices = @transform_8, window_bounds = array<i64: 1, 1, 128>}, {transform_indices = @transform_9, window_bounds = array<i64: 1, 1, 128>}, {transform_indices = @transform_10, window_bounds = array<i64: 1, 128, 256>}, {transform_indices = @transform_11, window_bounds = array<i64: 1, 1, 256>}, {transform_indices = @transform_12, window_bounds = array<i64: 1, 256, 128>}, {transform_indices = @transform_13, window_bounds = array<i64: 1, 1, 128>}, {pipeline_mode = #tpu.pipeline_mode<synchronous>, transform_indices = @transform_14, window_bounds = array<i64: 1, 128>}, {pipeline_mode = #tpu.pipeline_mode<synchronous>, transform_indices = @transform_15, window_bounds = array<i64: 1, 128>}, {pipeline_mode = #tpu.pipeline_mode<synchronous>, transform_indices = @transform_16, window_bounds = array<i64: 128, 256>}, {pipeline_mode = #tpu.pipeline_mode<synchronous>, transform_indices = @transform_17, window_bounds = array<i64: 1, 256>}, {transform_indices = @transform_18, window_bounds = array<i64: 1, 1, 256>}, {transform_indices = @transform_19, window_bounds = array<i64: 1, 1, 8, 128>}, {transform_indices = @transform_20, window_bounds = array<i64: 1, 1, 8, 128>}]} {
    %c0_i32 = arith.constant 0 : i32
    %0 = arith.cmpi eq, %arg1, %c0_i32 : i32
    %1 = arith.extui %0 : i1 to i32
    %c0_i32_0 = arith.constant 0 : i32
    %2 = arith.cmpi ne, %1, %c0_i32_0 : i32
    scf.if %2 {
      %c0_86 = arith.constant 0 : index
      %c0_87 = arith.constant 0 : index
      %c0_88 = arith.constant 0 : index
      %188 = vector.load %arg2[%c0_86, %c0_87, %c0_88] : memref<1x8x128xf32, #tpu.memory_space<vmem>>, vector<1x8x128xf32>
      %189 = vector.shape_cast %188 : vector<1x8x128xf32> to vector<8x128xf32>
      %c0_89 = arith.constant 0 : index
      %c0_90 = arith.constant 0 : index
      %190 = vector.load %arg23[%c0_89, %c0_90] : memref<8x128xf32, #tpu.memory_space<vmem>>, vector<8x128xf32>
      tpu.vector_store %arg23[%c0_89, %c0_90], %189 {strides = array<i32>} : memref<8x128xf32, #tpu.memory_space<vmem>>, vector<8x128xf32>,
    } else {
    }
    %c0 = arith.constant 0 : index
    %c0_1 = arith.constant 0 : index
    %3 = vector.load %arg23[%c0, %c0_1] : memref<8x128xf32, #tpu.memory_space<vmem>>, vector<8x128xf32>
    %c0_2 = arith.constant 0 : index
    %c0_3 = arith.constant 0 : index
    %c0_4 = arith.constant 0 : index
    %4 = vector.load %arg3[%c0_2, %c0_3, %c0_4] : memref<1x8x8xf32, #tpu.memory_space<vmem>>, vector<1x8x8xf32>
    %5 = vector.shape_cast %4 : vector<1x8x8xf32> to vector<8x8xf32>
    %c0_5 = arith.constant 0 : index
    %c0_6 = arith.constant 0 : index
    %c0_7 = arith.constant 0 : index
    %6 = vector.load %arg4[%c0_5, %c0_6, %c0_7] : memref<1x1x128xf32, #tpu.memory_space<vmem>>, vector<1x1x128xf32>
    %7 = vector.shape_cast %6 : vector<1x1x128xf32> to vector<1x128xf32>
    %c0_8 = arith.constant 0 : index
    %c0_9 = arith.constant 0 : index
    %c0_10 = arith.constant 0 : index
    %8 = vector.load %arg5[%c0_8, %c0_9, %c0_10] : memref<1x1x128xf32, #tpu.memory_space<vmem>>, vector<1x1x128xf32>
    %9 = vector.shape_cast %8 : vector<1x1x128xf32> to vector<1x128xf32>
    %cst = arith.constant dense<0.000000e+00> : vector<8xf32>
    %10 = vector.multi_reduction <add>, %3, %cst [1] : vector<8x128xf32> to vector<8xf32>
    %11 = vector.shape_cast %10 : vector<8xf32> to vector<8x1xf32>
    %cst_11 = arith.constant 1.280000e+02 : f32
    %12 = vector.broadcast %cst_11 : f32 to vector<8x1xf32>
    %13 = arith.divf %11, %12 : vector<8x1xf32>
    %14 = vector.broadcast %13 : vector<8x1xf32> to vector<8x128xf32>
    %15 = arith.subf %3, %14 : vector<8x128xf32>
    %16 = arith.mulf %15, %15 : vector<8x128xf32>
    %cst_12 = arith.constant dense<0.000000e+00> : vector<8xf32>
    %17 = vector.multi_reduction <add>, %16, %cst_12 [1] : vector<8x128xf32> to vector<8xf32>
    %18 = vector.shape_cast %17 : vector<8xf32> to vector<8x1xf32>
    %cst_13 = arith.constant 1.280000e+02 : f32
    %19 = vector.broadcast %cst_13 : f32 to vector<8x1xf32>
    %20 = arith.divf %18, %19 : vector<8x1xf32>
    %cst_14 = arith.constant 9.99999974E-6 : f32
    %21 = vector.broadcast %cst_14 : f32 to vector<8x1xf32>
    %22 = arith.addf %20, %21 : vector<8x1xf32>
    %23 = math.rsqrt %22 : vector<8x1xf32>
    %24 = vector.broadcast %23 : vector<8x1xf32> to vector<8x128xf32>
    %25 = arith.mulf %15, %24 : vector<8x128xf32>
    %26 = vector.broadcast %7 : vector<1x128xf32> to vector<8x128xf32>
    %27 = arith.mulf %25, %26 : vector<8x128xf32>
    %28 = vector.broadcast %9 : vector<1x128xf32> to vector<8x128xf32>
    %29 = arith.addf %27, %28 : vector<8x128xf32>
    %30 = arith.truncf %29 : vector<8x128xf32> to vector<8x128xbf16>
    %c0_15 = arith.constant 0 : index
    %c0_16 = arith.constant 0 : index
    %c0_17 = arith.constant 0 : index
    %31 = vector.load %arg6[%c0_15, %c0_16, %c0_17] : memref<1x128x384xbf16, #tpu.memory_space<vmem>>, vector<1x128x384xbf16>
    %32 = vector.shape_cast %31 : vector<1x128x384xbf16> to vector<128x384xbf16>
    %cst_18 = arith.constant dense<0.000000e+00> : vector<8x384xf32>
    %33 = tpu.matmul %30, %32, %cst_18 {dimension_numbers = #tpu.dot_dimension_numbers<[1], [0], [0], [1], [0, 0, 1, 1], [], []>} : vector<8x128xbf16>, vector<128x384xbf16>, vector<8x384xf32> -> vector<8x384xf32>
    %c0_19 = arith.constant 0 : index
    %c0_20 = arith.constant 0 : index
    %c0_21 = arith.constant 0 : index
    %34 = vector.load %arg7[%c0_19, %c0_20, %c0_21] : memref<1x1x384xf32, #tpu.memory_space<vmem>>, vector<1x1x384xf32>
    %35 = vector.shape_cast %34 : vector<1x1x384xf32> to vector<1x384xf32>
    %36 = vector.broadcast %35 : vector<1x384xf32> to vector<8x384xf32>
    %37 = arith.addf %33, %36 : vector<8x384xf32>
    %38 = vector.extract_strided_slice %37 {offsets = [0, 0], sizes = [8, 128], strides = [1, 1]} : vector<8x384xf32> to vector<8x128xf32>
    %cst_22 = arith.constant 0.176776692 : f32
    %39 = vector.broadcast %cst_22 : f32 to vector<8x128xf32>
    %40 = arith.mulf %38, %39 : vector<8x128xf32>
    %41 = vector.extract_strided_slice %37 {offsets = [0, 128], sizes = [8, 128], strides = [1, 1]} : vector<8x384xf32> to vector<8x128xf32>
    %42 = vector.extract_strided_slice %37 {offsets = [0, 256], sizes = [8, 128], strides = [1, 1]} : vector<8x384xf32> to vector<8x128xf32>
    %c0_23 = arith.constant 0 : index
    %c0_24 = arith.constant 0 : index
    %c0_25 = arith.constant 0 : index
    %c0_26 = arith.constant 0 : index
    %43 = vector.load %arg21[%c0_23, %c0_24, %c0_25, %c0_26] : memref<1x1x8x128xf32, #tpu.memory_space<vmem>>, vector<1x1x8x128xf32>
    %44 = vector.shape_cast %43 : vector<1x1x8x128xf32> to vector<8x128xf32>
    %45 = vector.shape_cast %41 : vector<8x128xf32> to vector<1x1x8x128xf32>
    tpu.vector_store %arg21[%c0_23, %c0_24, %c0_25, %c0_26], %45 {strides = array<i32>} : memref<1x1x8x128xf32, #tpu.memory_space<vmem>>, vector<1x1x8x128xf32>,
    %c0_27 = arith.constant 0 : index
    %c0_28 = arith.constant 0 : index
    %c0_29 = arith.constant 0 : index
    %c0_30 = arith.constant 0 : index
    %46 = vector.load %arg22[%c0_27, %c0_28, %c0_29, %c0_30] : memref<1x1x8x128xf32, #tpu.memory_space<vmem>>, vector<1x1x8x128xf32>
    %47 = vector.shape_cast %46 : vector<1x1x8x128xf32> to vector<8x128xf32>
    %48 = vector.shape_cast %42 : vector<8x128xf32> to vector<1x1x8x128xf32>
    tpu.vector_store %arg22[%c0_27, %c0_28, %c0_29, %c0_30], %48 {strides = array<i32>} : memref<1x1x8x128xf32, #tpu.memory_space<vmem>>, vector<1x1x8x128xf32>,
    %49 = arith.truncf %40 : vector<8x128xf32> to vector<8x128xbf16>
    %50 = arith.truncf %41 : vector<8x128xf32> to vector<8x128xbf16>
    %51 = arith.truncf %42 : vector<8x128xf32> to vector<8x128xbf16>
    %52 = vector.extract_strided_slice %49 {offsets = [0, 0], sizes = [8, 32], strides = [1, 1]} : vector<8x128xbf16> to vector<8x32xbf16>
    %53 = vector.extract_strided_slice %50 {offsets = [0, 0], sizes = [8, 32], strides = [1, 1]} : vector<8x128xbf16> to vector<8x32xbf16>
    %cst_31 = arith.constant dense<0.000000e+00> : vector<8x8xf32>
    %54 = tpu.matmul %52, %53, %cst_31 {dimension_numbers = #tpu.dot_dimension_numbers<[1], [1], [0], [0], [0, 0, 1, 0], [], []>} : vector<8x32xbf16>, vector<8x32xbf16>, vector<8x8xf32> -> vector<8x8xf32>
    %55 = arith.addf %54, %5 : vector<8x8xf32>
    %cst_32 = arith.constant dense<0xFF800000> : vector<8xf32>
    %56 = vector.multi_reduction <maximumf>, %55, %cst_32 [1] : vector<8x8xf32> to vector<8xf32>
    %57 = vector.shape_cast %56 : vector<8xf32> to vector<8x1xf32>
    %58 = vector.broadcast %57 : vector<8x1xf32> to vector<8x8xf32>
    %59 = arith.subf %55, %58 : vector<8x8xf32>
    %60 = math.exp %59 : vector<8x8xf32>
    %cst_33 = arith.constant dense<0.000000e+00> : vector<8xf32>
    %61 = vector.multi_reduction <add>, %60, %cst_33 [1] : vector<8x8xf32> to vector<8xf32>
    %62 = vector.shape_cast %61 : vector<8xf32> to vector<8x1xf32>
    %63 = tpu.reciprocal %62 {approx = true} : vector<8x1xf32> -> vector<8x1xf32>
    %64 = vector.broadcast %63 : vector<8x1xf32> to vector<8x8xf32>
    %65 = arith.mulf %60, %64 : vector<8x8xf32>
    %66 = arith.truncf %65 : vector<8x8xf32> to vector<8x8xbf16>
    %67 = vector.extract_strided_slice %51 {offsets = [0, 0], sizes = [8, 32], strides = [1, 1]} : vector<8x128xbf16> to vector<8x32xbf16>
    %cst_34 = arith.constant dense<0.000000e+00> : vector<8x32xf32>
    %68 = tpu.matmul %66, %67, %cst_34 {dimension_numbers = #tpu.dot_dimension_numbers<[1], [0], [0], [1], [0, 0, 1, 1], [], []>} : vector<8x8xbf16>, vector<8x32xbf16>, vector<8x32xf32> -> vector<8x32xf32>
    %69 = vector.extract_strided_slice %49 {offsets = [0, 32], sizes = [8, 32], strides = [1, 1]} : vector<8x128xbf16> to vector<8x32xbf16>
    %70 = vector.extract_strided_slice %50 {offsets = [0, 32], sizes = [8, 32], strides = [1, 1]} : vector<8x128xbf16> to vector<8x32xbf16>
    %cst_35 = arith.constant dense<0.000000e+00> : vector<8x8xf32>
    %71 = tpu.matmul %69, %70, %cst_35 {dimension_numbers = #tpu.dot_dimension_numbers<[1], [1], [0], [0], [0, 0, 1, 0], [], []>} : vector<8x32xbf16>, vector<8x32xbf16>, vector<8x8xf32> -> vector<8x8xf32>
    %72 = arith.addf %71, %5 : vector<8x8xf32>
    %cst_36 = arith.constant dense<0xFF800000> : vector<8xf32>
    %73 = vector.multi_reduction <maximumf>, %72, %cst_36 [1] : vector<8x8xf32> to vector<8xf32>
    %74 = vector.shape_cast %73 : vector<8xf32> to vector<8x1xf32>
    %75 = vector.broadcast %74 : vector<8x1xf32> to vector<8x8xf32>
    %76 = arith.subf %72, %75 : vector<8x8xf32>
    %77 = math.exp %76 : vector<8x8xf32>
    %cst_37 = arith.constant dense<0.000000e+00> : vector<8xf32>
    %78 = vector.multi_reduction <add>, %77, %cst_37 [1] : vector<8x8xf32> to vector<8xf32>
    %79 = vector.shape_cast %78 : vector<8xf32> to vector<8x1xf32>
    %80 = tpu.reciprocal %79 {approx = true} : vector<8x1xf32> -> vector<8x1xf32>
    %81 = vector.broadcast %80 : vector<8x1xf32> to vector<8x8xf32>
    %82 = arith.mulf %77, %81 : vector<8x8xf32>
    %83 = arith.truncf %82 : vector<8x8xf32> to vector<8x8xbf16>
    %84 = vector.extract_strided_slice %51 {offsets = [0, 32], sizes = [8, 32], strides = [1, 1]} : vector<8x128xbf16> to vector<8x32xbf16>
    %cst_38 = arith.constant dense<0.000000e+00> : vector<8x32xf32>
    %85 = tpu.matmul %83, %84, %cst_38 {dimension_numbers = #tpu.dot_dimension_numbers<[1], [0], [0], [1], [0, 0, 1, 1], [], []>} : vector<8x8xbf16>, vector<8x32xbf16>, vector<8x32xf32> -> vector<8x32xf32>
    %86 = vector.extract_strided_slice %49 {offsets = [0, 64], sizes = [8, 32], strides = [1, 1]} : vector<8x128xbf16> to vector<8x32xbf16>
    %87 = vector.extract_strided_slice %50 {offsets = [0, 64], sizes = [8, 32], strides = [1, 1]} : vector<8x128xbf16> to vector<8x32xbf16>
    %cst_39 = arith.constant dense<0.000000e+00> : vector<8x8xf32>
    %88 = tpu.matmul %86, %87, %cst_39 {dimension_numbers = #tpu.dot_dimension_numbers<[1], [1], [0], [0], [0, 0, 1, 0], [], []>} : vector<8x32xbf16>, vector<8x32xbf16>, vector<8x8xf32> -> vector<8x8xf32>
    %89 = arith.addf %88, %5 : vector<8x8xf32>
    %cst_40 = arith.constant dense<0xFF800000> : vector<8xf32>
    %90 = vector.multi_reduction <maximumf>, %89, %cst_40 [1] : vector<8x8xf32> to vector<8xf32>
    %91 = vector.shape_cast %90 : vector<8xf32> to vector<8x1xf32>
    %92 = vector.broadcast %91 : vector<8x1xf32> to vector<8x8xf32>
    %93 = arith.subf %89, %92 : vector<8x8xf32>
    %94 = math.exp %93 : vector<8x8xf32>
    %cst_41 = arith.constant dense<0.000000e+00> : vector<8xf32>
    %95 = vector.multi_reduction <add>, %94, %cst_41 [1] : vector<8x8xf32> to vector<8xf32>
    %96 = vector.shape_cast %95 : vector<8xf32> to vector<8x1xf32>
    %97 = tpu.reciprocal %96 {approx = true} : vector<8x1xf32> -> vector<8x1xf32>
    %98 = vector.broadcast %97 : vector<8x1xf32> to vector<8x8xf32>
    %99 = arith.mulf %94, %98 : vector<8x8xf32>
    %100 = arith.truncf %99 : vector<8x8xf32> to vector<8x8xbf16>
    %101 = vector.extract_strided_slice %51 {offsets = [0, 64], sizes = [8, 32], strides = [1, 1]} : vector<8x128xbf16> to vector<8x32xbf16>
    %cst_42 = arith.constant dense<0.000000e+00> : vector<8x32xf32>
    %102 = tpu.matmul %100, %101, %cst_42 {dimension_numbers = #tpu.dot_dimension_numbers<[1], [0], [0], [1], [0, 0, 1, 1], [], []>} : vector<8x8xbf16>, vector<8x32xbf16>, vector<8x32xf32> -> vector<8x32xf32>
    %103 = vector.extract_strided_slice %49 {offsets = [0, 96], sizes = [8, 32], strides = [1, 1]} : vector<8x128xbf16> to vector<8x32xbf16>
    %104 = vector.extract_strided_slice %50 {offsets = [0, 96], sizes = [8, 32], strides = [1, 1]} : vector<8x128xbf16> to vector<8x32xbf16>
    %cst_43 = arith.constant dense<0.000000e+00> : vector<8x8xf32>
    %105 = tpu.matmul %103, %104, %cst_43 {dimension_numbers = #tpu.dot_dimension_numbers<[1], [1], [0], [0], [0, 0, 1, 0], [], []>} : vector<8x32xbf16>, vector<8x32xbf16>, vector<8x8xf32> -> vector<8x8xf32>
    %106 = arith.addf %105, %5 : vector<8x8xf32>
    %cst_44 = arith.constant dense<0xFF800000> : vector<8xf32>
    %107 = vector.multi_reduction <maximumf>, %106, %cst_44 [1] : vector<8x8xf32> to vector<8xf32>
    %108 = vector.shape_cast %107 : vector<8xf32> to vector<8x1xf32>
    %109 = vector.broadcast %108 : vector<8x1xf32> to vector<8x8xf32>
    %110 = arith.subf %106, %109 : vector<8x8xf32>
    %111 = math.exp %110 : vector<8x8xf32>
    %cst_45 = arith.constant dense<0.000000e+00> : vector<8xf32>
    %112 = vector.multi_reduction <add>, %111, %cst_45 [1] : vector<8x8xf32> to vector<8xf32>
    %113 = vector.shape_cast %112 : vector<8xf32> to vector<8x1xf32>
    %114 = tpu.reciprocal %113 {approx = true} : vector<8x1xf32> -> vector<8x1xf32>
    %115 = vector.broadcast %114 : vector<8x1xf32> to vector<8x8xf32>
    %116 = arith.mulf %111, %115 : vector<8x8xf32>
    %117 = arith.truncf %116 : vector<8x8xf32> to vector<8x8xbf16>
    %118 = vector.extract_strided_slice %51 {offsets = [0, 96], sizes = [8, 32], strides = [1, 1]} : vector<8x128xbf16> to vector<8x32xbf16>
    %cst_46 = arith.constant dense<0.000000e+00> : vector<8x32xf32>
    %119 = tpu.matmul %117, %118, %cst_46 {dimension_numbers = #tpu.dot_dimension_numbers<[1], [0], [0], [1], [0, 0, 1, 1], [], []>} : vector<8x8xbf16>, vector<8x32xbf16>, vector<8x32xf32> -> vector<8x32xf32>
    %120 = tpu.concatenate %68, %85, %102, %119 in 1 : vector<8x32xf32>, vector<8x32xf32>, vector<8x32xf32>, vector<8x32xf32> -> vector<8x128xf32>
    %121 = arith.truncf %120 : vector<8x128xf32> to vector<8x128xbf16>
    %c0_47 = arith.constant 0 : index
    %c0_48 = arith.constant 0 : index
    %c0_49 = arith.constant 0 : index
    %122 = vector.load %arg8[%c0_47, %c0_48, %c0_49] : memref<1x128x128xbf16, #tpu.memory_space<vmem>>, vector<1x128x128xbf16>
    %123 = vector.shape_cast %122 : vector<1x128x128xbf16> to vector<128x128xbf16>
    %cst_50 = arith.constant dense<0.000000e+00> : vector<8x128xf32>
    %124 = tpu.matmul %121, %123, %cst_50 {dimension_numbers = #tpu.dot_dimension_numbers<[1], [0], [0], [1], [0, 0, 1, 1], [], []>} : vector<8x128xbf16>, vector<128x128xbf16>, vector<8x128xf32> -> vector<8x128xf32>
    %125 = arith.addf %3, %124 : vector<8x128xf32>
    %c0_51 = arith.constant 0 : index
    %c0_52 = arith.constant 0 : index
    %c0_53 = arith.constant 0 : index
    %126 = vector.load %arg9[%c0_51, %c0_52, %c0_53] : memref<1x1x128xf32, #tpu.memory_space<vmem>>, vector<1x1x128xf32>
    %127 = vector.shape_cast %126 : vector<1x1x128xf32> to vector<1x128xf32>
    %128 = vector.broadcast %127 : vector<1x128xf32> to vector<8x128xf32>
    %129 = arith.addf %125, %128 : vector<8x128xf32>
    %c0_54 = arith.constant 0 : index
    %c0_55 = arith.constant 0 : index
    %c0_56 = arith.constant 0 : index
    %130 = vector.load %arg10[%c0_54, %c0_55, %c0_56] : memref<1x1x128xf32, #tpu.memory_space<vmem>>, vector<1x1x128xf32>
    %131 = vector.shape_cast %130 : vector<1x1x128xf32> to vector<1x128xf32>
    %c0_57 = arith.constant 0 : index
    %c0_58 = arith.constant 0 : index
    %c0_59 = arith.constant 0 : index
    %132 = vector.load %arg11[%c0_57, %c0_58, %c0_59] : memref<1x1x128xf32, #tpu.memory_space<vmem>>, vector<1x1x128xf32>
    %133 = vector.shape_cast %132 : vector<1x1x128xf32> to vector<1x128xf32>
    %cst_60 = arith.constant dense<0.000000e+00> : vector<8xf32>
    %134 = vector.multi_reduction <add>, %129, %cst_60 [1] : vector<8x128xf32> to vector<8xf32>
    %135 = vector.shape_cast %134 : vector<8xf32> to vector<8x1xf32>
    %cst_61 = arith.constant 1.280000e+02 : f32
    %136 = vector.broadcast %cst_61 : f32 to vector<8x1xf32>
    %137 = arith.divf %135, %136 : vector<8x1xf32>
    %138 = vector.broadcast %137 : vector<8x1xf32> to vector<8x128xf32>
    %139 = arith.subf %129, %138 : vector<8x128xf32>
    %140 = arith.mulf %139, %139 : vector<8x128xf32>
    %cst_62 = arith.constant dense<0.000000e+00> : vector<8xf32>
    %141 = vector.multi_reduction <add>, %140, %cst_62 [1] : vector<8x128xf32> to vector<8xf32>
    %142 = vector.shape_cast %141 : vector<8xf32> to vector<8x1xf32>
    %cst_63 = arith.constant 1.280000e+02 : f32
    %143 = vector.broadcast %cst_63 : f32 to vector<8x1xf32>
    %144 = arith.divf %142, %143 : vector<8x1xf32>
    %cst_64 = arith.constant 9.99999974E-6 : f32
    %145 = vector.broadcast %cst_64 : f32 to vector<8x1xf32>
    %146 = arith.addf %144, %145 : vector<8x1xf32>
    %147 = math.rsqrt %146 : vector<8x1xf32>
    %148 = vector.broadcast %147 : vector<8x1xf32> to vector<8x128xf32>
    %149 = arith.mulf %139, %148 : vector<8x128xf32>
    %150 = vector.broadcast %131 : vector<1x128xf32> to vector<8x128xf32>
    %151 = arith.mulf %149, %150 : vector<8x128xf32>
    %152 = vector.broadcast %133 : vector<1x128xf32> to vector<8x128xf32>
    %153 = arith.addf %151, %152 : vector<8x128xf32>
    %154 = arith.truncf %153 : vector<8x128xf32> to vector<8x128xbf16>
    %c0_65 = arith.constant 0 : index
    %c0_66 = arith.constant 0 : index
    %c0_67 = arith.constant 0 : index
    %155 = vector.load %arg12[%c0_65, %c0_66, %c0_67] : memref<1x128x256xbf16, #tpu.memory_space<vmem>>, vector<1x128x256xbf16>
    %156 = vector.shape_cast %155 : vector<1x128x256xbf16> to vector<128x256xbf16>
    %cst_68 = arith.constant dense<0.000000e+00> : vector<8x256xf32>
    %157 = tpu.matmul %154, %156, %cst_68 {dimension_numbers = #tpu.dot_dimension_numbers<[1], [0], [0], [1], [0, 0, 1, 1], [], []>} : vector<8x128xbf16>, vector<128x256xbf16>, vector<8x256xf32> -> vector<8x256xf32>
    %c0_69 = arith.constant 0 : index
    %c0_70 = arith.constant 0 : index
    %c0_71 = arith.constant 0 : index
    %158 = vector.load %arg13[%c0_69, %c0_70, %c0_71] : memref<1x1x256xf32, #tpu.memory_space<vmem>>, vector<1x1x256xf32>
    %159 = vector.shape_cast %158 : vector<1x1x256xf32> to vector<1x256xf32>
    %160 = vector.broadcast %159 : vector<1x256xf32> to vector<8x256xf32>
    %161 = arith.addf %157, %160 : vector<8x256xf32>
    %cst_72 = arith.constant 5.000000e-01 : f32
    %162 = vector.broadcast %cst_72 : f32 to vector<8x256xf32>
    %163 = arith.mulf %162, %161 : vector<8x256xf32>
    %cst_73 = arith.constant 4.471500e-02 : f32
    %164 = vector.broadcast %cst_73 : f32 to vector<8x256xf32>
    %165 = arith.mulf %164, %161 : vector<8x256xf32>
    %166 = arith.mulf %165, %161 : vector<8x256xf32>
    %167 = arith.mulf %166, %161 : vector<8x256xf32>
    %168 = arith.addf %161, %167 : vector<8x256xf32>
    %cst_74 = arith.constant 0.797884583 : f32
    %169 = vector.broadcast %cst_74 : f32 to vector<8x256xf32>
    %170 = arith.mulf %169, %168 : vector<8x256xf32>
    %171 = math.tanh %170 : vector<8x256xf32>
    %cst_75 = arith.constant 1.000000e+00 : f32
    %172 = vector.broadcast %cst_75 : f32 to vector<8x256xf32>
    %173 = arith.addf %172, %171 : vector<8x256xf32>
    %174 = arith.mulf %163, %173 : vector<8x256xf32>
    %175 = arith.truncf %174 : vector<8x256xf32> to vector<8x256xbf16>
    %c0_76 = arith.constant 0 : index
    %c0_77 = arith.constant 0 : index
    %c0_78 = arith.constant 0 : index
    %176 = vector.load %arg14[%c0_76, %c0_77, %c0_78] : memref<1x256x128xbf16, #tpu.memory_space<vmem>>, vector<1x256x128xbf16>
    %177 = vector.shape_cast %176 : vector<1x256x128xbf16> to vector<256x128xbf16>
    %cst_79 = arith.constant dense<0.000000e+00> : vector<8x128xf32>
    %178 = tpu.matmul %175, %177, %cst_79 {dimension_numbers = #tpu.dot_dimension_numbers<[1], [0], [0], [1], [0, 0, 1, 1], [], []>} : vector<8x256xbf16>, vector<256x128xbf16>, vector<8x128xf32> -> vector<8x128xf32>
    %179 = arith.addf %129, %178 : vector<8x128xf32>
    %c0_80 = arith.constant 0 : index
    %c0_81 = arith.constant 0 : index
    %c0_82 = arith.constant 0 : index
    %180 = vector.load %arg15[%c0_80, %c0_81, %c0_82] : memref<1x1x128xf32, #tpu.memory_space<vmem>>, vector<1x1x128xf32>
    %181 = vector.shape_cast %180 : vector<1x1x128xf32> to vector<1x128xf32>
    %182 = vector.broadcast %181 : vector<1x128xf32> to vector<8x128xf32>
    %183 = arith.addf %179, %182 : vector<8x128xf32>
    %c0_83 = arith.constant 0 : index
    %c0_84 = arith.constant 0 : index
    %184 = vector.load %arg23[%c0_83, %c0_84] : memref<8x128xf32, #tpu.memory_space<vmem>>, vector<8x128xf32>
    tpu.vector_store %arg23[%c0_83, %c0_84], %183 {strides = array<i32>} : memref<8x128xf32, #tpu.memory_space<vmem>>, vector<8x128xf32>,
    %c1_i32 = arith.constant 1 : i32
    %185 = arith.cmpi eq, %arg1, %c1_i32 : i32
    %186 = arith.extui %185 : i1 to i32
    %c0_i32_85 = arith.constant 0 : i32
    %187 = arith.cmpi ne, %186, %c0_i32_85 : i32
    scf.if %187 {
      %188 = vector.extract_strided_slice %183 {offsets = [7, 0], sizes = [1, 128], strides = [1, 1]} : vector<8x128xf32> to vector<1x128xf32>
      %c0_86 = arith.constant 0 : index
      %c0_87 = arith.constant 0 : index
      %189 = vector.load %arg16[%c0_86, %c0_87] : memref<1x128xf32, #tpu.memory_space<vmem>>, vector<1x128xf32>
      %c0_88 = arith.constant 0 : index
      %c0_89 = arith.constant 0 : index
      %190 = vector.load %arg17[%c0_88, %c0_89] : memref<1x128xf32, #tpu.memory_space<vmem>>, vector<1x128xf32>
      %cst_90 = arith.constant dense<0.000000e+00> : vector<1xf32>
      %191 = vector.multi_reduction <add>, %188, %cst_90 [1] : vector<1x128xf32> to vector<1xf32>
      %192 = vector.shape_cast %191 : vector<1xf32> to vector<1x1xf32>
      %cst_91 = arith.constant 1.280000e+02 : f32
      %193 = vector.broadcast %cst_91 : f32 to vector<1x1xf32>
      %194 = arith.divf %192, %193 : vector<1x1xf32>
      %195 = vector.broadcast %194 : vector<1x1xf32> to vector<1x128xf32>
      %196 = arith.subf %188, %195 : vector<1x128xf32>
      %197 = arith.mulf %196, %196 : vector<1x128xf32>
      %cst_92 = arith.constant dense<0.000000e+00> : vector<1xf32>
      %198 = vector.multi_reduction <add>, %197, %cst_92 [1] : vector<1x128xf32> to vector<1xf32>
      %199 = vector.shape_cast %198 : vector<1xf32> to vector<1x1xf32>
      %cst_93 = arith.constant 1.280000e+02 : f32
      %200 = vector.broadcast %cst_93 : f32 to vector<1x1xf32>
      %201 = arith.divf %199, %200 : vector<1x1xf32>
      %cst_94 = arith.constant 9.99999974E-6 : f32
      %202 = vector.broadcast %cst_94 : f32 to vector<1x1xf32>
      %203 = arith.addf %201, %202 : vector<1x1xf32>
      %204 = math.rsqrt %203 : vector<1x1xf32>
      %205 = vector.broadcast %204 : vector<1x1xf32> to vector<1x128xf32>
      %206 = arith.mulf %196, %205 : vector<1x128xf32>
      %207 = arith.mulf %206, %189 : vector<1x128xf32>
      %208 = arith.addf %207, %190 : vector<1x128xf32>
      %209 = arith.truncf %208 : vector<1x128xf32> to vector<1x128xbf16>
      %c0_95 = arith.constant 0 : index
      %c0_96 = arith.constant 0 : index
      %210 = vector.load %arg18[%c0_95, %c0_96] : memref<128x256xbf16, #tpu.memory_space<vmem>>, vector<128x256xbf16>
      %cst_97 = arith.constant dense<0.000000e+00> : vector<1x256xf32>
      %211 = tpu.matmul %209, %210, %cst_97 {dimension_numbers = #tpu.dot_dimension_numbers<[1], [0], [0], [1], [0, 0, 1, 1], [], []>} : vector<1x128xbf16>, vector<128x256xbf16>, vector<1x256xf32> -> vector<1x256xf32>
      %c0_98 = arith.constant 0 : index
      %c0_99 = arith.constant 0 : index
      %212 = vector.load %arg19[%c0_98, %c0_99] : memref<1x256xf32, #tpu.memory_space<vmem>>, vector<1x256xf32>
      %213 = arith.addf %211, %212 : vector<1x256xf32>
      %c0_100 = arith.constant 0 : index
      %c0_101 = arith.constant 0 : index
      %c0_102 = arith.constant 0 : index
      %214 = vector.load %arg20[%c0_100, %c0_101, %c0_102] : memref<1x1x256xf32, #tpu.memory_space<vmem>>, vector<1x1x256xf32>
      %215 = vector.shape_cast %214 : vector<1x1x256xf32> to vector<1x256xf32>
      %216 = vector.shape_cast %213 : vector<1x256xf32> to vector<1x1x256xf32>
      tpu.vector_store %arg20[%c0_100, %c0_101, %c0_102], %216 {strides = array<i32>} : memref<1x1x256xf32, #tpu.memory_space<vmem>>, vector<1x1x256xf32>,
    } else {
    }
    return
  }
  func.func @transform_0(%arg0: i32, %arg1: i32) -> (i32, i32, i32) {
    %c0_i32 = arith.constant 0 : i32
    %c0_i32_0 = arith.constant 0 : i32
    %c0_i32_1 = arith.constant 0 : i32
    return %arg0, %c0_i32, %c0_i32_0 : i32, i32, i32
  }
  func.func @transform_1(%arg0: i32, %arg1: i32) -> (i32, i32, i32) {
    %c0_i32 = arith.constant 0 : i32
    %c0_i32_0 = arith.constant 0 : i32
    %c0_i32_1 = arith.constant 0 : i32
    return %arg0, %c0_i32, %c0_i32_0 : i32, i32, i32
  }
  func.func @transform_2(%arg0: i32, %arg1: i32) -> (i32, i32, i32) {
    %c0_i32 = arith.constant 0 : i32
    %c0_i32_0 = arith.constant 0 : i32
    %c0_i32_1 = arith.constant 0 : i32
    return %arg1, %c0_i32, %c0_i32_0 : i32, i32, i32
  }
  func.func @transform_3(%arg0: i32, %arg1: i32) -> (i32, i32, i32) {
    %c0_i32 = arith.constant 0 : i32
    %c0_i32_0 = arith.constant 0 : i32
    %c0_i32_1 = arith.constant 0 : i32
    return %arg1, %c0_i32, %c0_i32_0 : i32, i32, i32
  }
  func.func @transform_4(%arg0: i32, %arg1: i32) -> (i32, i32, i32) {
    %c0_i32 = arith.constant 0 : i32
    %c0_i32_0 = arith.constant 0 : i32
    %c0_i32_1 = arith.constant 0 : i32
    return %arg1, %c0_i32, %c0_i32_0 : i32, i32, i32
  }
  func.func @transform_5(%arg0: i32, %arg1: i32) -> (i32, i32, i32) {
    %c0_i32 = arith.constant 0 : i32
    %c0_i32_0 = arith.constant 0 : i32
    %c0_i32_1 = arith.constant 0 : i32
    return %arg1, %c0_i32, %c0_i32_0 : i32, i32, i32
  }
  func.func @transform_6(%arg0: i32, %arg1: i32) -> (i32, i32, i32) {
    %c0_i32 = arith.constant 0 : i32
    %c0_i32_0 = arith.constant 0 : i32
    %c0_i32_1 = arith.constant 0 : i32
    return %arg1, %c0_i32, %c0_i32_0 : i32, i32, i32
  }
  func.func @transform_7(%arg0: i32, %arg1: i32) -> (i32, i32, i32) {
    %c0_i32 = arith.constant 0 : i32
    %c0_i32_0 = arith.constant 0 : i32
    %c0_i32_1 = arith.constant 0 : i32
    return %arg1, %c0_i32, %c0_i32_0 : i32, i32, i32
  }
  func.func @transform_8(%arg0: i32, %arg1: i32) -> (i32, i32, i32) {
    %c0_i32 = arith.constant 0 : i32
    %c0_i32_0 = arith.constant 0 : i32
    %c0_i32_1 = arith.constant 0 : i32
    return %arg1, %c0_i32, %c0_i32_0 : i32, i32, i32
  }
  func.func @transform_9(%arg0: i32, %arg1: i32) -> (i32, i32, i32) {
    %c0_i32 = arith.constant 0 : i32
    %c0_i32_0 = arith.constant 0 : i32
    %c0_i32_1 = arith.constant 0 : i32
    return %arg1, %c0_i32, %c0_i32_0 : i32, i32, i32
  }
  func.func @transform_10(%arg0: i32, %arg1: i32) -> (i32, i32, i32) {
    %c0_i32 = arith.constant 0 : i32
    %c0_i32_0 = arith.constant 0 : i32
    %c0_i32_1 = arith.constant 0 : i32
    return %arg1, %c0_i32, %c0_i32_0 : i32, i32, i32
  }
  func.func @transform_11(%arg0: i32, %arg1: i32) -> (i32, i32, i32) {
    %c0_i32 = arith.constant 0 : i32
    %c0_i32_0 = arith.constant 0 : i32
    %c0_i32_1 = arith.constant 0 : i32
    return %arg1, %c0_i32, %c0_i32_0 : i32, i32, i32
  }
  func.func @transform_12(%arg0: i32, %arg1: i32) -> (i32, i32, i32) {
    %c0_i32 = arith.constant 0 : i32
    %c0_i32_0 = arith.constant 0 : i32
    %c0_i32_1 = arith.constant 0 : i32
    return %arg1, %c0_i32, %c0_i32_0 : i32, i32, i32
  }
  func.func @transform_13(%arg0: i32, %arg1: i32) -> (i32, i32, i32) {
    %c0_i32 = arith.constant 0 : i32
    %c0_i32_0 = arith.constant 0 : i32
    %c0_i32_1 = arith.constant 0 : i32
    return %arg1, %c0_i32, %c0_i32_0 : i32, i32, i32
  }
  func.func @transform_14(%arg0: i32, %arg1: i32) -> (i32, i32) {
    %c0_i32 = arith.constant 0 : i32
    %c0_i32_0 = arith.constant 0 : i32
    %c0_i32_1 = arith.constant 0 : i32
    return %c0_i32, %c0_i32_0 : i32, i32
  }
  func.func @transform_15(%arg0: i32, %arg1: i32) -> (i32, i32) {
    %c0_i32 = arith.constant 0 : i32
    %c0_i32_0 = arith.constant 0 : i32
    %c0_i32_1 = arith.constant 0 : i32
    return %c0_i32, %c0_i32_0 : i32, i32
  }
  func.func @transform_16(%arg0: i32, %arg1: i32) -> (i32, i32) {
    %c0_i32 = arith.constant 0 : i32
    %c0_i32_0 = arith.constant 0 : i32
    %c0_i32_1 = arith.constant 0 : i32
    return %c0_i32, %c0_i32_0 : i32, i32
  }
  func.func @transform_17(%arg0: i32, %arg1: i32) -> (i32, i32) {
    %c0_i32 = arith.constant 0 : i32
    %c0_i32_0 = arith.constant 0 : i32
    %c0_i32_1 = arith.constant 0 : i32
    return %c0_i32, %c0_i32_0 : i32, i32
  }
  func.func @transform_18(%arg0: i32, %arg1: i32) -> (i32, i32, i32) {
    %c0_i32 = arith.constant 0 : i32
    %c0_i32_0 = arith.constant 0 : i32
    %c0_i32_1 = arith.constant 0 : i32
    return %arg0, %c0_i32, %c0_i32_0 : i32, i32, i32
  }
  func.func @transform_19(%arg0: i32, %arg1: i32) -> (i32, i32, i32, i32) {
    %c0_i32 = arith.constant 0 : i32
    %c0_i32_0 = arith.constant 0 : i32
    %c0_i32_1 = arith.constant 0 : i32
    return %arg1, %arg0, %c0_i32, %c0_i32_0 : i32, i32, i32, i32
  }
  func.func @transform_20(%arg0: i32, %arg1: i32) -> (i32, i32, i32, i32) {
    %c0_i32 = arith.constant 0 : i32
    %c0_i32_0 = arith.constant 0 : i32
    %c0_i32_1 = arith.constant 0 : i32
    return %arg1, %arg0, %c0_i32, %c0_i32_0 : i32, i32, i32, i32
  }
}

</mosaic_0001>

<llo_original>
// kernel: squeeze.4
$region0: #{squeeze.4}
  %s0 = inlined_call_operand.vmem [shape: f32[1,2,8,128], index: 0, kind: input, shape index: {}]
  %s1 = inlined_call_operand.hbm [shape: f32[2,8,4,32], index: 1, kind: output, shape index: {}]
  $region1: #{squeeze.4} parent=0
    #allocation0 [shape = 'u8[32768]{0}', space=vmem, size = 0x8000, scoped, tag = 'operand span for operand 1']
    #allocation1 [shape = 's32[1]{0}', space=sflag, size = 0x4, scoped, tag = 'scoped memory for squeeze.4']
    #allocation2 [shape = 'u8[65536]{0}', space=vmem, size = 0x10000, scoped, tag = 'scoped mem for output reshape']
    %2 = vsyncpa [#allocation1], 0
    %v3 = vld [vmem:[%s0] sm:$0xff]
    %vm4 = vcmask 261120
    %5 = vst.msk [vmem:[#allocation2] ss:$8 sm:$0xf] %vm4, %v3
    %6 = vst.msk [vmem:[#allocation2] ss:$8 sm:$0xf0] %vm4, %v3
    %s7 = scalar_lea.vmem %s0, 8
    %v8 = vld [vmem:[%s7] sm:$0xff]
    %vm9 = vcmask 261120
    %s10 = scalar_lea.vmem [#allocation2], 64
    %11 = vst.msk [vmem:[%s10] ss:$8 sm:$0xf] %vm9, %v8
    %s12 = scalar_lea.vmem [#allocation2], 64
    %13 = vst.msk [vmem:[%s12] ss:$8 sm:$0xf0] %vm9, %v8
    %v14 = vld [vmem:[%s0] sm:$0xff]
    %15 = vrot.lane.b32.xlu0 %v14, 96
    %v16 = vpop.permute.xlu0 %15
    %vm17 = vcmask 261120
    %s18 = scalar_lea.vmem [#allocation2], 1
    %19 = vst.msk [vmem:[%s18] ss:$8 sm:$0xf] %vm17, %v16
    %s20 = scalar_lea.vmem [#allocation2], 1
    %21 = vst.msk [vmem:[%s20] ss:$8 sm:$0xf0] %vm17, %v16
    %s22 = scalar_lea.vmem %s0, 8
    %v23 = vld [vmem:[%s22] sm:$0xff]
    %24 = vrot.lane.b32.xlu0 %v23, 96
    %v25 = vpop.permute.xlu0 %24
    %vm26 = vcmask 261120
    %s27 = scalar_lea.vmem [#allocation2], 65
    %28 = vst.msk [vmem:[%s27] ss:$8 sm:$0xf] %vm26, %v25
    %s29 = scalar_lea.vmem [#allocation2], 65
    %30 = vst.msk [vmem:[%s29] ss:$8 sm:$0xf0] %vm26, %v25
    %v31 = vld [vmem:[%s0] sm:$0xff]
    %32 = vrot.lane.b32.xlu0 %v31, 64
    %v33 = vpop.permute.xlu0 %32
    %vm34 = vcmask 261120
    %s35 = scalar_lea.vmem [#allocation2], 2
    %36 = vst.msk [vmem:[%s35] ss:$8 sm:$0xf] %vm34, %v33
    %s37 = scalar_lea.vmem [#allocation2], 2
    %38 = vst.msk [vmem:[%s37] ss:$8 sm:$0xf0] %vm34, %v33
    %s39 = scalar_lea.vmem %s0, 8
    %v40 = vld [vmem:[%s39] sm:$0xff]
    %41 = vrot.lane.b32.xlu0 %v40, 64
    %v42 = vpop.permute.xlu0 %41
    %vm43 = vcmask 261120
    %s44 = scalar_lea.vmem [#allocation2], 66
    %45 = vst.msk [vmem:[%s44] ss:$8 sm:$0xf] %vm43, %v42
    %s46 = scalar_lea.vmem [#allocation2], 66
    %47 = vst.msk [vmem:[%s46] ss:$8 sm:$0xf0] %vm43, %v42
    %v48 = vld [vmem:[%s0] sm:$0xff]
    %49 = vrot.lane.b32.xlu0 %v48, 32
    %v50 = vpop.permute.xlu0 %49
    %vm51 = vcmask 261120
    %s52 = scalar_lea.vmem [#allocation2], 3
    %53 = vst.msk [vmem:[%s52] ss:$8 sm:$0xf] %vm51, %v50
    %s54 = scalar_lea.vmem [#allocation2], 3
    %55 = vst.msk [vmem:[%s54] ss:$8 sm:$0xf0] %vm51, %v50
    %s56 = scalar_lea.vmem %s0, 8
    %v57 = vld [vmem:[%s56] sm:$0xff]
    %58 = vrot.lane.b32.xlu0 %v57, 32
    %v59 = vpop.permute.xlu0 %58
    %vm60 = vcmask 261120
    %s61 = scalar_lea.vmem [#allocation2], 67
    %62 = vst.msk [vmem:[%s61] ss:$8 sm:$0xf] %vm60, %v59
    %s63 = scalar_lea.vmem [#allocation2], 67
    %64 = vst.msk [vmem:[%s63] ss:$8 sm:$0xf0] %vm60, %v59
    %s66 = sshll.u32 1, 4
    %s67 = ssub.s32 %s66, 1
    %v69 = vld [vmem:[#allocation2] sm:%s67]
    %s70 = sshll.u32 1, 4
    %s71 = ssub.s32 %s70, 1
    %72 = vst [vmem:[#allocation0] sm:%s71] %v69
    %s73 = scalar_lea.vmem [#allocation2], 8
    %v74 = vld [vmem:[%s73] sm:%s67]
    %s75 = sshll.u32 1, 4
    %s76 = ssub.s32 %s75, 1
    %s77 = scalar_lea.vmem [#allocation0], 4
    %78 = vst [vmem:[%s77] sm:%s76] %v74
    %s79 = scalar_lea.vmem [#allocation2], 16
    %v80 = vld [vmem:[%s79] sm:%s67]
    %s81 = sshll.u32 1, 4
    %s82 = ssub.s32 %s81, 1
    %s83 = smul.addr 4, 2
    %s84 = scalar_lea.vmem [#allocation0], %s83
    %85 = vst [vmem:[%s84] sm:%s82] %v80
    %s86 = scalar_lea.vmem [#allocation2], 24
    %v87 = vld [vmem:[%s86] sm:%s67]
    %s88 = sshll.u32 1, 4
    %s89 = ssub.s32 %s88, 1
    %s90 = smul.addr 4, 3
    %s91 = scalar_lea.vmem [#allocation0], %s90
    %92 = vst [vmem:[%s91] sm:%s89] %v87
    %s93 = scalar_lea.vmem [#allocation2], 32
    %v94 = vld [vmem:[%s93] sm:%s67]
    %s95 = sshll.u32 1, 4
    %s96 = ssub.s32 %s95, 1
    %s97 = smul.addr 4, 4
    %s98 = scalar_lea.vmem [#allocation0], %s97
    %99 = vst [vmem:[%s98] sm:%s96] %v94
    %s100 = scalar_lea.vmem [#allocation2], 40
    %v101 = vld [vmem:[%s100] sm:%s67]
    %s102 = sshll.u32 1, 4
    %s103 = ssub.s32 %s102, 1
    %s104 = smul.addr 4, 5
    %s105 = scalar_lea.vmem [#allocation0], %s104
    %106 = vst [vmem:[%s105] sm:%s103] %v101
    %s107 = scalar_lea.vmem [#allocation2], 48
    %v108 = vld [vmem:[%s107] sm:%s67]
    %s109 = sshll.u32 1, 4
    %s110 = ssub.s32 %s109, 1
    %s111 = smul.addr 4, 6
    %s112 = scalar_lea.vmem [#allocation0], %s111
    %113 = vst [vmem:[%s112] sm:%s110] %v108
    %s114 = scalar_lea.vmem [#allocation2], 56
    %v115 = vld [vmem:[%s114] sm:%s67]
    %s116 = sshll.u32 1, 4
    %s117 = ssub.s32 %s116, 1
    %s118 = smul.addr 4, 7
    %s119 = scalar_lea.vmem [#allocation0], %s118
    %120 = vst [vmem:[%s119] sm:%s117] %v115
    %s121 = scalar_lea.vmem [#allocation2], 64
    %v122 = vld [vmem:[%s121] sm:%s67]
    %s123 = sshll.u32 1, 4
    %s124 = ssub.s32 %s123, 1
    %s125 = smul.addr 4, 8
    %s126 = scalar_lea.vmem [#allocation0], %s125
    %127 = vst [vmem:[%s126] sm:%s124] %v122
    %s128 = scalar_lea.vmem [#allocation2], 72
    %v129 = vld [vmem:[%s128] sm:%s67]
    %s130 = sshll.u32 1, 4
    %s131 = ssub.s32 %s130, 1
    %s132 = smul.addr 4, 9
    %s133 = scalar_lea.vmem [#allocation0], %s132
    %134 = vst [vmem:[%s133] sm:%s131] %v129
    %s135 = scalar_lea.vmem [#allocation2], 80
    %v136 = vld [vmem:[%s135] sm:%s67]
    %s137 = sshll.u32 1, 4
    %s138 = ssub.s32 %s137, 1
    %s139 = smul.addr 4, 10
    %s140 = scalar_lea.vmem [#allocation0], %s139
    %141 = vst [vmem:[%s140] sm:%s138] %v136
    %s142 = scalar_lea.vmem [#allocation2], 88
    %v143 = vld [vmem:[%s142] sm:%s67]
    %s144 = sshll.u32 1, 4
    %s145 = ssub.s32 %s144, 1
    %s146 = smul.addr 4, 11
    %s147 = scalar_lea.vmem [#allocation0], %s146
    %148 = vst [vmem:[%s147] sm:%s145] %v143
    %s149 = scalar_lea.vmem [#allocation2], 96
    %v150 = vld [vmem:[%s149] sm:%s67]
    %s151 = sshll.u32 1, 4
    %s152 = ssub.s32 %s151, 1
    %s153 = smul.addr 4, 12
    %s154 = scalar_lea.vmem [#allocation0], %s153
    %155 = vst [vmem:[%s154] sm:%s152] %v150
    %s156 = scalar_lea.vmem [#allocation2], 104
    %v157 = vld [vmem:[%s156] sm:%s67]
    %s158 = sshll.u32 1, 4
    %s159 = ssub.s32 %s158, 1
    %s160 = smul.addr 4, 13
    %s161 = scalar_lea.vmem [#allocation0], %s160
    %162 = vst [vmem:[%s161] sm:%s159] %v157
    %s163 = scalar_lea.vmem [#allocation2], 112
    %v164 = vld [vmem:[%s163] sm:%s67]
    %s165 = sshll.u32 1, 4
    %s166 = ssub.s32 %s165, 1
    %s167 = smul.addr 4, 14
    %s168 = scalar_lea.vmem [#allocation0], %s167
    %169 = vst [vmem:[%s168] sm:%s166] %v164
    %s170 = scalar_lea.vmem [#allocation2], 120
    %v171 = vld [vmem:[%s170] sm:%s67]
    %s172 = sshll.u32 1, 4
    %s173 = ssub.s32 %s172, 1
    %s174 = smul.addr 4, 15
    %s175 = scalar_lea.vmem [#allocation0], %s174
    %176 = vst [vmem:[%s175] sm:%s173] %v171
    %s178 = ssub.s32 1024, 1024
    %179 = vsyncadd [#allocation1], %s178
    %s181 = sshll.u32 [#allocation0], 4
    %s182 = int_to_ptr.vmem [resolvable:$true] %s181
    %184 = dma.vmem_to_hbm [thread:$0]  %s182, 1024, %s1, [#allocation1]
    %185 = dma.done [#allocation1], 1024
    %186 = vsyncpa [#allocation1], 1

// kernel: prefill.1
$region0: #{prefill.1}
  #allocation0 [shape = 'u32[]', space=smem, size = 0x4, offset = 0x4, fixed_abs, tag = 'smem constant byte address 0x4 - core index']
  #allocation1 [shape = 'u32[144,128]{1,0:T(1,128)}', space=vmem, size = 0x12000, scoped, tag = 'internal scratch']
  #allocation2 [shape = 'f32[8,128]{1,0:T(8,128)}', space=vmem, size = 0x1000, scoped, tag = 'scratch operand']
  %s0 = inlined_call_operand.vmem [shape: f32[2,8,128], index: 0, kind: input, shape index: {}]
  %s1 = inlined_call_operand.vmem [shape: f32[2,8,8], index: 1, kind: input, shape index: {}]
  %s2 = inlined_call_operand.vmem [shape: f32[2,1,128], index: 2, kind: input, shape index: {}, may-alias: {2,8}]
  %s3 = inlined_call_operand.vmem [shape: f32[2,1,128], index: 3, kind: input, shape index: {}, may-alias: {3,7,9,13}]
  %s4 = inlined_call_operand.hbm [shape: bf16[2,128,384], index: 4, kind: input, shape index: {}]
  %s5 = inlined_call_operand.vmem [shape: f32[2,1,384], index: 5, kind: input, shape index: {}]
  %s6 = inlined_call_operand.hbm [shape: bf16[2,128,128], index: 6, kind: input, shape index: {}]
  %s7 = inlined_call_operand.vmem [shape: f32[2,1,128], index: 7, kind: input, shape index: {}, may-alias: {3,7,9,13}]
  %s8 = inlined_call_operand.vmem [shape: f32[2,1,128], index: 8, kind: input, shape index: {}, may-alias: {2,8}]
  %s9 = inlined_call_operand.vmem [shape: f32[2,1,128], index: 9, kind: input, shape index: {}, may-alias: {3,7,9,13}]
  %s10 = inlined_call_operand.vmem [shape: bf16[2,128,256], index: 10, kind: input, shape index: {}]
  %s11 = inlined_call_operand.vmem [shape: f32[2,1,256], index: 11, kind: input, shape index: {}]
  %s12 = inlined_call_operand.hbm [shape: bf16[2,256,128], index: 12, kind: input, shape index: {}]
  %s13 = inlined_call_operand.vmem [shape: f32[2,1,128], index: 13, kind: input, shape index: {}, may-alias: {3,7,9,13}]
  %s14 = inlined_call_operand.vmem [shape: f32[1,128], index: 14, kind: input, shape index: {}]
  %s15 = inlined_call_operand.vmem [shape: f32[1,128], index: 15, kind: input, shape index: {}]
  %s16 = inlined_call_operand.hbm [shape: bf16[128,256], index: 16, kind: input, shape index: {}]
  %s17 = inlined_call_operand.vmem [shape: f32[1,256], index: 17, kind: input, shape index: {}]
  %s18 = inlined_call_operand.vmem [shape: f32[2,1,256], index: 18, kind: output, shape index: {0}]
  %s19 = inlined_call_operand.vmem [shape: f32[2,2,8,128], index: 19, kind: output, shape index: {1}]
  %s20 = inlined_call_operand.vmem [shape: f32[2,2,8,128], index: 20, kind: output, shape index: {2}]
  %21 = xla_tuple %s18, %s19, %s20
  %s22 = sld [smem:[#allocation0]]
  $region145: #{prefill.1} parent=0
    _
  %s24 = ssub.s32 1, %s22
  %s25 = scalar_select 0, %s24, %s22
  $region1: #{prefill.1} parent=0
    #allocation3 [shape = 'u8[196608]{0}', space=vmem, size = 0x30000, scoped, tag = 'input window, operand 4']
    #allocation4 [shape = 's32[2]{0}', space=sflag, size = 0x8, scoped, tag = 'scoped memory for prefill.1']
    #allocation5 [shape = 'u8[65536]{0}', space=vmem, size = 0x10000, scoped, tag = 'input window, operand 6']
    #allocation6 [shape = 's32[2]{0}', space=sflag, size = 0x8, scoped, tag = 'scoped memory for prefill.1']
    #allocation7 [shape = 'u8[131072]{0}', space=vmem, size = 0x20000, scoped, tag = 'input window, operand 12']
    #allocation8 [shape = 'u8[65536]{0}', space=vmem, size = 0x10000, scoped, tag = 'input window, operand 16, single buffered']
    #allocation9 [shape = 's32[1]{0}', space=sflag, size = 0x4, scoped, tag = 'scoped memory for prefill.1']
    %26 = vsyncpa [#allocation4], 0
    %s27 = scalar_lea.sflag [#allocation4], 1
    %28 = vsyncpa %s27, 0
    %29 = vsyncpa [#allocation6], 0
    %s30 = scalar_lea.sflag [#allocation6], 1
    %31 = vsyncpa %s30, 0
    %32 = vsyncpa [#allocation9], 0
    loop: start=0, step=1, limit=6
    $region2: #{prefill.1} parent=1 // loop_pre_header
      _
    $region3: #{prefill.1} parent=1 // loop_header
      %s34 = sphi 0, %s38
      %p35 = scmp.ge.s32.totalorder %s34, 6
      %s41 = sphi 0, %s53
      %s42 = sphi 0, %s49
      %s43 = sphi 0, %s41
      %s44 = sphi 0, %s42
      %s45 = sphi 0, %s43
      %s46 = sphi 0, %s44
      %s56 = sphi 0, %s58
      %s59 = sphi 0, %s56
      %s60 = sphi 0, %s59
      %s76 = sphi 0, %s60
      %s82 = sphi 0, %s84
      %s85 = sphi 0, %s82
      %s86 = sphi 0, %s85
      %s102 = sphi 0, %s86
      %s108 = sphi 0, %s110
      %s111 = sphi 0, %s108
      %s112 = sphi 0, %s111
      %s128 = sphi 0, %s112
      %s134 = sphi 0, %s136
      %s137 = sphi 0, %s134
      %s138 = sphi 0, %s137
      %s154 = sphi 0, %s138
      %s160 = sphi 0, %s162
      %s163 = sphi 0, %s160
      %s164 = sphi 0, %s163
      %s180 = sphi 0, %s164
      %s186 = sphi 0, %s188
      %s189 = sphi 0, %s186
      %s190 = sphi 0, %s189
      %s206 = sphi 0, %s190
      %s212 = sphi 0, %s214
      %s215 = sphi 0, %s212
      %s216 = sphi 0, %s215
      %s232 = sphi 0, %s216
      %s238 = sphi 0, %s240
      %s241 = sphi 0, %s238
      %s242 = sphi 0, %s241
      %s258 = sphi 0, %s242
      %s264 = sphi 0, %s266
      %s267 = sphi 0, %s264
      %s268 = sphi 0, %s267
      %s284 = sphi 0, %s268
      %s290 = sphi 0, %s292
      %s293 = sphi 0, %s290
      %s294 = sphi 0, %s293
      %s310 = sphi 0, %s294
      %s316 = sphi 0, %s318
      %s319 = sphi 0, %s316
      %s320 = sphi 0, %s319
      %s336 = sphi 0, %s320
      %s342 = sphi 0, %s344
      %s345 = sphi 0, %s342
      %s346 = sphi 0, %s345
      %s362 = sphi 0, %s346
      %s368 = sphi 0, %s370
      %s371 = sphi 0, %s368
      %s372 = sphi 0, %s371
      %s388 = sphi 0, %s372
      %s394 = sphi 0, %s396
      %s397 = sphi 0, %s394
      %s398 = sphi 0, %s397
      %s414 = sphi 0, %s398
      %s418 = sphi 0, %s418
      %s420 = sphi 0, %s418
      %s421 = sphi 0, %s420
      %s435 = sphi 0, %s421
      %s439 = sphi 0, %s439
      %s441 = sphi 0, %s439
      %s442 = sphi 0, %s441
      %s456 = sphi 0, %s442
      %s460 = sphi 0, %s460
      %s462 = sphi 0, %s460
      %s463 = sphi 0, %s462
      %s477 = sphi 0, %s463
      %s481 = sphi 0, %s481
      %s483 = sphi 0, %s481
      %s484 = sphi 0, %s483
      %s498 = sphi 0, %s484
      %s504 = sphi 0, %s506
      %s507 = sphi 0, %s504
      %s508 = sphi 0, %s507
      %s524 = sphi 0, %s508
      %s532 = sphi 0, %s534
      %s535 = sphi 0, %s532
      %s536 = sphi 0, %s535
      %s552 = sphi 0, %s536
      %s560 = sphi 0, %s562
      %s563 = sphi 0, %s560
      %s564 = sphi 0, %s563
      %s580 = sphi 0, %s564
    $region4: #{prefill.1} parent=1 // loop_header_branch
      %37 = sbr.rel (%p35) target = $region8
    $region5: #{prefill.1} parent=1 // loop_body
      %s39 = ssub.s32 %s34, 1
      %s40 = ssub.s32 %s34, 2
      %s47 = sadd.s32 1, %s42
      %p48 = scmp.ge.s32.totalorder %s47, 2
      %s49 = scalar_select %p48, 0, %s47
      %s50 = sadd.s32 1, %s41
      %s51 = scalar_select %p48, %s50, %s41
      %p52 = scmp.ge.s32.totalorder %s51, 2
      %s53 = scalar_select %p52, 0, %s51
      %s54 = ssub.s32 %s41, %s53
      %p55 = scmp.eq.s32.totalorder %s54, 0
      %s57 = sadd.s32 %s56, 1
      %s58 = scalar_select %p55, %s56, %s57
      %p61 = pneg %p55
      %p62 = scmp.eq.s32.totalorder %s34, 3
      %p63 = por %p61, %p62
      %p64 = scmp.ne.s32.totalorder %s56, %s59
      %p65 = scmp.eq.s32.totalorder %s34, 0
      %p66 = por %p64, %p65
      %p67 = scmp.ne.s32.totalorder %s56, %s59
      %p68 = scmp.eq.s32.totalorder %s39, 3
      %p69 = por %p67, %p68
      %p70 = scmp.ne.s32.totalorder %s59, %s60
      %p71 = scmp.eq.s32.totalorder %s39, 0
      %p72 = por %p70, %p71
      %p73 = scmp.ne.s32.totalorder %s59, %s60
      %p74 = scmp.eq.s32.totalorder %s40, 3
      %p75 = por %p73, %p74
      %p77 = scmp.ne.s32.totalorder %s60, %s76
      %p78 = scmp.eq.s32.totalorder %s40, 0
      %p79 = por %p77, %p78
      %s80 = ssub.s32 %s41, %s53
      %p81 = scmp.eq.s32.totalorder %s80, 0
      %s83 = sadd.s32 %s82, 1
      %s84 = scalar_select %p81, %s82, %s83
      %p87 = pneg %p81
      %p88 = scmp.eq.s32.totalorder %s34, 3
      %p89 = por %p87, %p88
      %p90 = scmp.ne.s32.totalorder %s82, %s85
      %p91 = scmp.eq.s32.totalorder %s34, 0
      %p92 = por %p90, %p91
      %p93 = scmp.ne.s32.totalorder %s82, %s85
      %p94 = scmp.eq.s32.totalorder %s39, 3
      %p95 = por %p93, %p94
      %p96 = scmp.ne.s32.totalorder %s85, %s86
      %p97 = scmp.eq.s32.totalorder %s39, 0
      %p98 = por %p96, %p97
      %p99 = scmp.ne.s32.totalorder %s85, %s86
      %p100 = scmp.eq.s32.totalorder %s40, 3
      %p101 = por %p99, %p100
      %p103 = scmp.ne.s32.totalorder %s86, %s102
      %p104 = scmp.eq.s32.totalorder %s40, 0
      %p105 = por %p103, %p104
      %s106 = ssub.s32 %s42, %s49
      %p107 = scmp.eq.s32.totalorder %s106, 0
      %s109 = sadd.s32 %s108, 1
      %s110 = scalar_select %p107, %s108, %s109
      %p113 = pneg %p107
      %p114 = scmp.eq.s32.totalorder %s34, 3
      %p115 = por %p113, %p114
      %p116 = scmp.ne.s32.totalorder %s108, %s111
      %p117 = scmp.eq.s32.totalorder %s34, 0
      %p118 = por %p116, %p117
      %p119 = scmp.ne.s32.totalorder %s108, %s111
      %p120 = scmp.eq.s32.totalorder %s39, 3
      %p121 = por %p119, %p120
      %p122 = scmp.ne.s32.totalorder %s111, %s112
      %p123 = scmp.eq.s32.totalorder %s39, 0
      %p124 = por %p122, %p123
      %p125 = scmp.ne.s32.totalorder %s111, %s112
      %p126 = scmp.eq.s32.totalorder %s40, 3
      %p127 = por %p125, %p126
      %p129 = scmp.ne.s32.totalorder %s112, %s128
      %p130 = scmp.eq.s32.totalorder %s40, 0
      %p131 = por %p129, %p130
      %s132 = ssub.s32 %s42, %s49
      %p133 = scmp.eq.s32.totalorder %s132, 0
      %s135 = sadd.s32 %s134, 1
      %s136 = scalar_select %p133, %s134, %s135
      %p139 = pneg %p133
      %p140 = scmp.eq.s32.totalorder %s34, 3
      %p141 = por %p139, %p140
      %p142 = scmp.ne.s32.totalorder %s134, %s137
      %p143 = scmp.eq.s32.totalorder %s34, 0
      %p144 = por %p142, %p143
      %p145 = scmp.ne.s32.totalorder %s134, %s137
      %p146 = scmp.eq.s32.totalorder %s39, 3
      %p147 = por %p145, %p146
      %p148 = scmp.ne.s32.totalorder %s137, %s138
      %p149 = scmp.eq.s32.totalorder %s39, 0
      %p150 = por %p148, %p149
      %p151 = scmp.ne.s32.totalorder %s137, %s138
      %p152 = scmp.eq.s32.totalorder %s40, 3
      %p153 = por %p151, %p152
      %p155 = scmp.ne.s32.totalorder %s138, %s154
      %p156 = scmp.eq.s32.totalorder %s40, 0
      %p157 = por %p155, %p156
      %s158 = ssub.s32 %s42, %s49
      %p159 = scmp.eq.s32.totalorder %s158, 0
      %s161 = sadd.s32 %s160, 1
      %s162 = scalar_select %p159, %s160, %s161
      %p165 = pneg %p159
      %p166 = scmp.eq.s32.totalorder %s34, 3
      %p167 = por %p165, %p166
      %p168 = scmp.ne.s32.totalorder %s160, %s163
      %p169 = scmp.eq.s32.totalorder %s34, 0
      %p170 = por %p168, %p169
      %p171 = scmp.ne.s32.totalorder %s160, %s163
      %p172 = scmp.eq.s32.totalorder %s39, 3
      %p173 = por %p171, %p172
      %p174 = scmp.ne.s32.totalorder %s163, %s164
      %p175 = scmp.eq.s32.totalorder %s39, 0
      %p176 = por %p174, %p175
      %p177 = scmp.ne.s32.totalorder %s163, %s164
      %p178 = scmp.eq.s32.totalorder %s40, 3
      %p179 = por %p177, %p178
      %p181 = scmp.ne.s32.totalorder %s164, %s180
      %p182 = scmp.eq.s32.totalorder %s40, 0
      %p183 = por %p181, %p182
      %s184 = ssub.s32 %s42, %s49
      %p185 = scmp.eq.s32.totalorder %s184, 0
      %s187 = sadd.s32 %s186, 1
      %s188 = scalar_select %p185, %s186, %s187
      %p191 = pneg %p185
      %p192 = scmp.eq.s32.totalorder %s34, 3
      %p193 = por %p191, %p192
      %p194 = scmp.ne.s32.totalorder %s186, %s189
      %p195 = scmp.eq.s32.totalorder %s34, 0
      %p196 = por %p194, %p195
      %p197 = scmp.ne.s32.totalorder %s186, %s189
      %p198 = scmp.eq.s32.totalorder %s39, 3
      %p199 = por %p197, %p198
      %p200 = scmp.ne.s32.totalorder %s189, %s190
      %p201 = scmp.eq.s32.totalorder %s39, 0
      %p202 = por %p200, %p201
      %p203 = scmp.ne.s32.totalorder %s189, %s190
      %p204 = scmp.eq.s32.totalorder %s40, 3
      %p205 = por %p203, %p204
      %p207 = scmp.ne.s32.totalorder %s190, %s206
      %p208 = scmp.eq.s32.totalorder %s40, 0
      %p209 = por %p207, %p208
      %s210 = ssub.s32 %s42, %s49
      %p211 = scmp.eq.s32.totalorder %s210, 0
      %s213 = sadd.s32 %s212, 1
      %s214 = scalar_select %p211, %s212, %s213
      %p217 = pneg %p211
      %p218 = scmp.eq.s32.totalorder %s34, 3
      %p219 = por %p217, %p218
      %p220 = scmp.ne.s32.totalorder %s212, %s215
      %p221 = scmp.eq.s32.totalorder %s34, 0
      %p222 = por %p220, %p221
      %p223 = scmp.ne.s32.totalorder %s212, %s215
      %p224 = scmp.eq.s32.totalorder %s39, 3
      %p225 = por %p223, %p224
      %p226 = scmp.ne.s32.totalorder %s215, %s216
      %p227 = scmp.eq.s32.totalorder %s39, 0
      %p228 = por %p226, %p227
      %p229 = scmp.ne.s32.totalorder %s215, %s216
      %p230 = scmp.eq.s32.totalorder %s40, 3
      %p231 = por %p229, %p230
      %p233 = scmp.ne.s32.totalorder %s216, %s232
      %p234 = scmp.eq.s32.totalorder %s40, 0
      %p235 = por %p233, %p234
      %s236 = ssub.s32 %s42, %s49
      %p237 = scmp.eq.s32.totalorder %s236, 0
      %s239 = sadd.s32 %s238, 1
      %s240 = scalar_select %p237, %s238, %s239
      %p243 = pneg %p237
      %p244 = scmp.eq.s32.totalorder %s34, 3
      %p245 = por %p243, %p244
      %p246 = scmp.ne.s32.totalorder %s238, %s241
      %p247 = scmp.eq.s32.totalorder %s34, 0
      %p248 = por %p246, %p247
      %p249 = scmp.ne.s32.totalorder %s238, %s241
      %p250 = scmp.eq.s32.totalorder %s39, 3
      %p251 = por %p249, %p250
      %p252 = scmp.ne.s32.totalorder %s241, %s242
      %p253 = scmp.eq.s32.totalorder %s39, 0
      %p254 = por %p252, %p253
      %p255 = scmp.ne.s32.totalorder %s241, %s242
      %p256 = scmp.eq.s32.totalorder %s40, 3
      %p257 = por %p255, %p256
      %p259 = scmp.ne.s32.totalorder %s242, %s258
      %p260 = scmp.eq.s32.totalorder %s40, 0
      %p261 = por %p259, %p260
      %s262 = ssub.s32 %s42, %s49
      %p263 = scmp.eq.s32.totalorder %s262, 0
      %s265 = sadd.s32 %s264, 1
      %s266 = scalar_select %p263, %s264, %s265
      %p269 = pneg %p263
      %p270 = scmp.eq.s32.totalorder %s34, 3
      %p271 = por %p269, %p270
      %p272 = scmp.ne.s32.totalorder %s264, %s267
      %p273 = scmp.eq.s32.totalorder %s34, 0
      %p274 = por %p272, %p273
      %p275 = scmp.ne.s32.totalorder %s264, %s267
      %p276 = scmp.eq.s32.totalorder %s39, 3
      %p277 = por %p275, %p276
      %p278 = scmp.ne.s32.totalorder %s267, %s268
      %p279 = scmp.eq.s32.totalorder %s39, 0
      %p280 = por %p278, %p279
      %p281 = scmp.ne.s32.totalorder %s267, %s268
      %p282 = scmp.eq.s32.totalorder %s40, 3
      %p283 = por %p281, %p282
      %p285 = scmp.ne.s32.totalorder %s268, %s284
      %p286 = scmp.eq.s32.totalorder %s40, 0
      %p287 = por %p285, %p286
      %s288 = ssub.s32 %s42, %s49
      %p289 = scmp.eq.s32.totalorder %s288, 0
      %s291 = sadd.s32 %s290, 1
      %s292 = scalar_select %p289, %s290, %s291
      %p295 = pneg %p289
      %p296 = scmp.eq.s32.totalorder %s34, 3
      %p297 = por %p295, %p296
      %p298 = scmp.ne.s32.totalorder %s290, %s293
      %p299 = scmp.eq.s32.totalorder %s34, 0
      %p300 = por %p298, %p299
      %p301 = scmp.ne.s32.totalorder %s290, %s293
      %p302 = scmp.eq.s32.totalorder %s39, 3
      %p303 = por %p301, %p302
      %p304 = scmp.ne.s32.totalorder %s293, %s294
      %p305 = scmp.eq.s32.totalorder %s39, 0
      %p306 = por %p304, %p305
      %p307 = scmp.ne.s32.totalorder %s293, %s294
      %p308 = scmp.eq.s32.totalorder %s40, 3
      %p309 = por %p307, %p308
      %p311 = scmp.ne.s32.totalorder %s294, %s310
      %p312 = scmp.eq.s32.totalorder %s40, 0
      %p313 = por %p311, %p312
      %s314 = ssub.s32 %s42, %s49
      %p315 = scmp.eq.s32.totalorder %s314, 0
      %s317 = sadd.s32 %s316, 1
      %s318 = scalar_select %p315, %s316, %s317
      %p321 = pneg %p315
      %p322 = scmp.eq.s32.totalorder %s34, 3
      %p323 = por %p321, %p322
      %p324 = scmp.ne.s32.totalorder %s316, %s319
      %p325 = scmp.eq.s32.totalorder %s34, 0
      %p326 = por %p324, %p325
      %p327 = scmp.ne.s32.totalorder %s316, %s319
      %p328 = scmp.eq.s32.totalorder %s39, 3
      %p329 = por %p327, %p328
      %p330 = scmp.ne.s32.totalorder %s319, %s320
      %p331 = scmp.eq.s32.totalorder %s39, 0
      %p332 = por %p330, %p331
      %p333 = scmp.ne.s32.totalorder %s319, %s320
      %p334 = scmp.eq.s32.totalorder %s40, 3
      %p335 = por %p333, %p334
      %p337 = scmp.ne.s32.totalorder %s320, %s336
      %p338 = scmp.eq.s32.totalorder %s40, 0
      %p339 = por %p337, %p338
      %s340 = ssub.s32 %s42, %s49
      %p341 = scmp.eq.s32.totalorder %s340, 0
      %s343 = sadd.s32 %s342, 1
      %s344 = scalar_select %p341, %s342, %s343
      %p347 = pneg %p341
      %p348 = scmp.eq.s32.totalorder %s34, 3
      %p349 = por %p347, %p348
      %p350 = scmp.ne.s32.totalorder %s342, %s345
      %p351 = scmp.eq.s32.totalorder %s34, 0
      %p352 = por %p350, %p351
      %p353 = scmp.ne.s32.totalorder %s342, %s345
      %p354 = scmp.eq.s32.totalorder %s39, 3
      %p355 = por %p353, %p354
      %p356 = scmp.ne.s32.totalorder %s345, %s346
      %p357 = scmp.eq.s32.totalorder %s39, 0
      %p358 = por %p356, %p357
      %p359 = scmp.ne.s32.totalorder %s345, %s346
      %p360 = scmp.eq.s32.totalorder %s40, 3
      %p361 = por %p359, %p360
      %p363 = scmp.ne.s32.totalorder %s346, %s362
      %p364 = scmp.eq.s32.totalorder %s40, 0
      %p365 = por %p363, %p364
      %s366 = ssub.s32 %s42, %s49
      %p367 = scmp.eq.s32.totalorder %s366, 0
      %s369 = sadd.s32 %s368, 1
      %s370 = scalar_select %p367, %s368, %s369
      %p373 = pneg %p367
      %p374 = scmp.eq.s32.totalorder %s34, 3
      %p375 = por %p373, %p374
      %p376 = scmp.ne.s32.totalorder %s368, %s371
      %p377 = scmp.eq.s32.totalorder %s34, 0
      %p378 = por %p376, %p377
      %p379 = scmp.ne.s32.totalorder %s368, %s371
      %p380 = scmp.eq.s32.totalorder %s39, 3
      %p381 = por %p379, %p380
      %p382 = scmp.ne.s32.totalorder %s371, %s372
      %p383 = scmp.eq.s32.totalorder %s39, 0
      %p384 = por %p382, %p383
      %p385 = scmp.ne.s32.totalorder %s371, %s372
      %p386 = scmp.eq.s32.totalorder %s40, 3
      %p387 = por %p385, %p386
      %p389 = scmp.ne.s32.totalorder %s372, %s388
      %p390 = scmp.eq.s32.totalorder %s40, 0
      %p391 = por %p389, %p390
      %s392 = ssub.s32 %s42, %s49
      %p393 = scmp.eq.s32.totalorder %s392, 0
      %s395 = sadd.s32 %s394, 1
      %s396 = scalar_select %p393, %s394, %s395
      %p399 = pneg %p393
      %p400 = scmp.eq.s32.totalorder %s34, 3
      %p401 = por %p399, %p400
      %p402 = scmp.ne.s32.totalorder %s394, %s397
      %p403 = scmp.eq.s32.totalorder %s34, 0
      %p404 = por %p402, %p403
      %p405 = scmp.ne.s32.totalorder %s394, %s397
      %p406 = scmp.eq.s32.totalorder %s39, 3
      %p407 = por %p405, %p406
      %p408 = scmp.ne.s32.totalorder %s397, %s398
      %p409 = scmp.eq.s32.totalorder %s39, 0
      %p410 = por %p408, %p409
      %p411 = scmp.ne.s32.totalorder %s397, %s398
      %p412 = scmp.eq.s32.totalorder %s40, 3
      %p413 = por %p411, %p412
      %p415 = scmp.ne.s32.totalorder %s398, %s414
      %p416 = scmp.eq.s32.totalorder %s40, 0
      %p417 = por %p415, %p416
      %s419 = sadd.s32 %s418, 1
      %p422 = scmp.eq.s32.totalorder %s34, 3
      %p423 = scmp.ne.s32.totalorder %s418, %s420
      %p424 = scmp.eq.s32.totalorder %s34, 0
      %p425 = por %p423, %p424
      %p426 = scmp.ne.s32.totalorder %s418, %s420
      %p427 = scmp.eq.s32.totalorder %s39, 3
      %p428 = por %p426, %p427
      %p429 = scmp.ne.s32.totalorder %s420, %s421
      %p430 = scmp.eq.s32.totalorder %s39, 0
      %p431 = por %p429, %p430
      %p432 = scmp.ne.s32.totalorder %s420, %s421
      %p433 = scmp.eq.s32.totalorder %s40, 3
      %p434 = por %p432, %p433
      %p436 = scmp.ne.s32.totalorder %s421, %s435
      %p437 = scmp.eq.s32.totalorder %s40, 0
      %p438 = por %p436, %p437
      %s440 = sadd.s32 %s439, 1
      %p443 = scmp.eq.s32.totalorder %s34, 3
      %p444 = scmp.ne.s32.totalorder %s439, %s441
      %p445 = scmp.eq.s32.totalorder %s34, 0
      %p446 = por %p444, %p445
      %p447 = scmp.ne.s32.totalorder %s439, %s441
      %p448 = scmp.eq.s32.totalorder %s39, 3
      %p449 = por %p447, %p448
      %p450 = scmp.ne.s32.totalorder %s441, %s442
      %p451 = scmp.eq.s32.totalorder %s39, 0
      %p452 = por %p450, %p451
      %p453 = scmp.ne.s32.totalorder %s441, %s442
      %p454 = scmp.eq.s32.totalorder %s40, 3
      %p455 = por %p453, %p454
      %p457 = scmp.ne.s32.totalorder %s442, %s456
      %p458 = scmp.eq.s32.totalorder %s40, 0
      %p459 = por %p457, %p458
      %s461 = sadd.s32 %s460, 1
      %p464 = scmp.eq.s32.totalorder %s34, 3
      %p465 = scmp.ne.s32.totalorder %s460, %s462
      %p466 = scmp.eq.s32.totalorder %s34, 0
      %p467 = por %p465, %p466
      %p468 = scmp.ne.s32.totalorder %s460, %s462
      %p469 = scmp.eq.s32.totalorder %s39, 3
      %p470 = por %p468, %p469
      %p471 = scmp.ne.s32.totalorder %s462, %s463
      %p472 = scmp.eq.s32.totalorder %s39, 0
      %p473 = por %p471, %p472
      %p474 = scmp.ne.s32.totalorder %s462, %s463
      %p475 = scmp.eq.s32.totalorder %s40, 3
      %p476 = por %p474, %p475
      %p478 = scmp.ne.s32.totalorder %s463, %s477
      %p479 = scmp.eq.s32.totalorder %s40, 0
      %p480 = por %p478, %p479
      %s482 = sadd.s32 %s481, 1
      %p485 = scmp.eq.s32.totalorder %s34, 3
      %p486 = scmp.ne.s32.totalorder %s481, %s483
      %p487 = scmp.eq.s32.totalorder %s34, 0
      %p488 = por %p486, %p487
      %p489 = scmp.ne.s32.totalorder %s481, %s483
      %p490 = scmp.eq.s32.totalorder %s39, 3
      %p491 = por %p489, %p490
      %p492 = scmp.ne.s32.totalorder %s483, %s484
      %p493 = scmp.eq.s32.totalorder %s39, 0
      %p494 = por %p492, %p493
      %p495 = scmp.ne.s32.totalorder %s483, %s484
      %p496 = scmp.eq.s32.totalorder %s40, 3
      %p497 = por %p495, %p496
      %p499 = scmp.ne.s32.totalorder %s484, %s498
      %p500 = scmp.eq.s32.totalorder %s40, 0
      %p501 = por %p499, %p500
      %s502 = ssub.s32 %s41, %s53
      %p503 = scmp.eq.s32.totalorder %s502, 0
      %s505 = sadd.s32 %s504, 1
      %s506 = scalar_select %p503, %s504, %s505
      %p509 = pneg %p503
      %p510 = scmp.eq.s32.totalorder %s34, 3
      %p511 = por %p509, %p510
      %p512 = scmp.ne.s32.totalorder %s504, %s507
      %p513 = scmp.eq.s32.totalorder %s34, 0
      %p514 = por %p512, %p513
      %p515 = scmp.ne.s32.totalorder %s504, %s507
      %p516 = scmp.eq.s32.totalorder %s39, 3
      %p517 = por %p515, %p516
      %p518 = scmp.ne.s32.totalorder %s507, %s508
      %p519 = scmp.eq.s32.totalorder %s39, 0
      %p520 = por %p518, %p519
      %p521 = scmp.ne.s32.totalorder %s507, %s508
      %p522 = scmp.eq.s32.totalorder %s40, 3
      %p523 = por %p521, %p522
      %p525 = scmp.ne.s32.totalorder %s508, %s524
      %p526 = scmp.eq.s32.totalorder %s40, 0
      %p527 = por %p525, %p526
      %s528 = ssub.s32 %s42, %s49
      %s529 = ssub.s32 %s41, %s53
      %s530 = sor.u32 %s528, %s529
      %p531 = scmp.eq.s32.totalorder %s530, 0
      %s533 = sadd.s32 %s532, 1
      %s534 = scalar_select %p531, %s532, %s533
      %p537 = pneg %p531
      %p538 = scmp.eq.s32.totalorder %s34, 3
      %p539 = por %p537, %p538
      %p540 = scmp.ne.s32.totalorder %s532, %s535
      %p541 = scmp.eq.s32.totalorder %s34, 0
      %p542 = por %p540, %p541
      %p543 = scmp.ne.s32.totalorder %s532, %s535
      %p544 = scmp.eq.s32.totalorder %s39, 3
      %p545 = por %p543, %p544
      %p546 = scmp.ne.s32.totalorder %s535, %s536
      %p547 = scmp.eq.s32.totalorder %s39, 0
      %p548 = por %p546, %p547
      %p549 = scmp.ne.s32.totalorder %s535, %s536
      %p550 = scmp.eq.s32.totalorder %s40, 3
      %p551 = por %p549, %p550
      %p553 = scmp.ne.s32.totalorder %s536, %s552
      %p554 = scmp.eq.s32.totalorder %s40, 0
      %p555 = por %p553, %p554
      %s556 = ssub.s32 %s42, %s49
      %s557 = ssub.s32 %s41, %s53
      %s558 = sor.u32 %s556, %s557
      %p559 = scmp.eq.s32.totalorder %s558, 0
      %s561 = sadd.s32 %s560, 1
      %s562 = scalar_select %p559, %s560, %s561
      %p565 = pneg %p559
      %p566 = scmp.eq.s32.totalorder %s34, 3
      %p567 = por %p565, %p566
      %p568 = scmp.ne.s32.totalorder %s560, %s563
      %p569 = scmp.eq.s32.totalorder %s34, 0
      %p570 = por %p568, %p569
      %p571 = scmp.ne.s32.totalorder %s560, %s563
      %p572 = scmp.eq.s32.totalorder %s39, 3
      %p573 = por %p571, %p572
      %p574 = scmp.ne.s32.totalorder %s563, %s564
      %p575 = scmp.eq.s32.totalorder %s39, 0
      %p576 = por %p574, %p575
      %p577 = scmp.ne.s32.totalorder %s563, %s564
      %p578 = scmp.eq.s32.totalorder %s40, 3
      %p579 = por %p577, %p578
      %p581 = scmp.ne.s32.totalorder %s564, %s580
      %p582 = scmp.eq.s32.totalorder %s40, 0
      %p583 = por %p581, %p582
      %p584 = scmp.le.s32.totalorder 1, %s34
      %p585 = scmp.lt.s32.totalorder %s34, 5
      %p586 = pnand %p584, %p585
      %p587 = pneg %p586
      // Predicated region
      $region9: #{prefill.1} parent=5 // pred_check
        _
      $region10: #{prefill.1} parent=5 // pred_check_branch
        %589 = sbr.rel (%p586) target = $region12
      $region11: #{prefill.1} parent=5 // pred_region
        %s590 = ssub.s32 %s34, 1
        // Predicated region
        $region13: #{prefill.1} parent=11 // pred_check
          %p591 = pneg %p431
        $region14: #{prefill.1} parent=11 // pred_check_branch
          %593 = sbr.rel (%p591) target = $region16
        $region15: #{prefill.1} parent=11 // pred_region
          _
        $region16: #{prefill.1} parent=11 // pred_fallthru
          _
        // Predicated region
        $region17: #{prefill.1} parent=11 // pred_check
          %p594 = pneg %p452
        $region18: #{prefill.1} parent=11 // pred_check_branch
          %596 = sbr.rel (%p594) target = $region20
        $region19: #{prefill.1} parent=11 // pred_region
          _
        $region20: #{prefill.1} parent=11 // pred_fallthru
          _
        // Predicated region
        $region21: #{prefill.1} parent=11 // pred_check
          %p597 = pneg %p473
        $region22: #{prefill.1} parent=11 // pred_check_branch
          %599 = sbr.rel (%p597) target = $region24
        $region23: #{prefill.1} parent=11 // pred_region
          %s601 = ssub.s32 2048, 2048
          %602 = vsyncadd [#allocation9], %s601
          %s603 = sshll.u32 [#allocation8], 4
          %s604 = int_to_ptr.vmem [resolvable:$true] %s603
          %609 = dma.hbm_to_vmem [thread:$0]  %s16, 2048, %s604, [#allocation9], 128, 128, 8
        $region24: #{prefill.1} parent=11 // pred_fallthru
          _
        // Predicated region
        $region25: #{prefill.1} parent=11 // pred_check
          %p610 = pneg %p494
        $region26: #{prefill.1} parent=11 // pred_check_branch
          %612 = sbr.rel (%p610) target = $region28
        $region27: #{prefill.1} parent=11 // pred_region
          _
        $region28: #{prefill.1} parent=11 // pred_fallthru
          _
      $region12: #{prefill.1} parent=5 // pred_fallthru
        _
      %p613 = scmp.lt.s32.totalorder %s34, 4
      // Predicated region
      $region29: #{prefill.1} parent=5 // pred_check
        %p614 = pneg %p613
      $region30: #{prefill.1} parent=5 // pred_check_branch
        %616 = sbr.rel (%p614) target = $region32
      $region31: #{prefill.1} parent=5 // pred_region
        // Predicated region
        $region33: #{prefill.1} parent=31 // pred_check
          %p617 = pneg %p66
        $region34: #{prefill.1} parent=31 // pred_check_branch
          %619 = sbr.rel (%p617) target = $region36
        $region35: #{prefill.1} parent=31 // pred_region
          %p620 = scmp.lt.s32.totalorder %s41, 1
          %s621 = scalar_select %p620, %s41, 1
          %s622 = smul.addr %s621, 8
          %s623 = scalar_lea.vmem %s0, %s622
        $region36: #{prefill.1} parent=31 // pred_fallthru
          _
        // Predicated region
        $region37: #{prefill.1} parent=31 // pred_check
          %p624 = pneg %p92
        $region38: #{prefill.1} parent=31 // pred_check_branch
          %626 = sbr.rel (%p624) target = $region40
        $region39: #{prefill.1} parent=31 // pred_region
          %p627 = scmp.lt.s32.totalorder %s41, 1
          %s628 = scalar_select %p627, %s41, 1
          %s629 = smul.addr %s628, 8
          %s630 = scalar_lea.vmem %s1, %s629
        $region40: #{prefill.1} parent=31 // pred_fallthru
          _
        // Predicated region
        $region41: #{prefill.1} parent=31 // pred_check
          %p631 = pneg %p118
        $region42: #{prefill.1} parent=31 // pred_check_branch
          %633 = sbr.rel (%p631) target = $region44
        $region43: #{prefill.1} parent=31 // pred_region
          %p634 = scmp.lt.s32.totalorder %s42, 1
          %s635 = scalar_select %p634, %s42, 1
          %s636 = scalar_lea.vmem %s2, %s635
        $region44: #{prefill.1} parent=31 // pred_fallthru
          _
        // Predicated region
        $region45: #{prefill.1} parent=31 // pred_check
          %p637 = pneg %p144
        $region46: #{prefill.1} parent=31 // pred_check_branch
          %639 = sbr.rel (%p637) target = $region48
        $region47: #{prefill.1} parent=31 // pred_region
          %p640 = scmp.lt.s32.totalorder %s42, 1
          %s641 = scalar_select %p640, %s42, 1
          %s642 = scalar_lea.vmem %s3, %s641
        $region48: #{prefill.1} parent=31 // pred_fallthru
          _
        // Predicated region
        $region49: #{prefill.1} parent=31 // pred_check
          %p643 = pneg %p170
        $region50: #{prefill.1} parent=31 // pred_check_branch
          %645 = sbr.rel (%p643) target = $region52
        $region51: #{prefill.1} parent=31 // pred_region
          %s646 = sand.u32 %s160, 1
          %s647 = scalar_lea.sflag [#allocation4], %s646
          %s648 = sand.u32 %s160, 1
          %s649 = smul.addr %s648, 192
          %s650 = scalar_lea.vmem [#allocation3], %s649
          %s652 = ssub.s32 3072, 3072
          %653 = vsyncadd %s647, %s652
          %s654 = smul.addr %s42, 48
          %s655 = smul.addr %s654, 64
          %s656 = scalar_lea.hbm %s4, %s655
          %s657 = sshll.u32 %s650, 4
          %s658 = int_to_ptr.vmem [resolvable:$true] %s657
          %663 = dma.hbm_to_vmem [thread:$0]  %s656, 3072, %s658, %s647, 192, 192, 12
        $region52: #{prefill.1} parent=31 // pred_fallthru
          _
        // Predicated region
        $region53: #{prefill.1} parent=31 // pred_check
          %p664 = pneg %p196
        $region54: #{prefill.1} parent=31 // pred_check_branch
          %666 = sbr.rel (%p664) target = $region56
        $region55: #{prefill.1} parent=31 // pred_region
          %p667 = scmp.lt.s32.totalorder %s42, 1
          %s668 = scalar_select %p667, %s42, 1
          %s669 = smul.addr %s668, 3
          %s670 = scalar_lea.vmem %s5, %s669
        $region56: #{prefill.1} parent=31 // pred_fallthru
          _
        // Predicated region
        $region57: #{prefill.1} parent=31 // pred_check
          %p671 = pneg %p222
        $region58: #{prefill.1} parent=31 // pred_check_branch
          %673 = sbr.rel (%p671) target = $region60
        $region59: #{prefill.1} parent=31 // pred_region
          %s674 = sand.u32 %s34, 1
          %s675 = scalar_lea.sflag [#allocation6], %s674
          %s676 = sand.u32 %s212, 1
          %s677 = smul.addr %s676, 64
          %s678 = scalar_lea.vmem [#allocation5], %s677
          %s680 = ssub.s32 1024, 1024
          %681 = vsyncadd %s675, %s680
          %s682 = smul.addr %s42, 16
          %s683 = smul.addr %s682, 64
          %s684 = scalar_lea.hbm %s6, %s683
          %s685 = sshll.u32 %s678, 4
          %s686 = int_to_ptr.vmem [resolvable:$true] %s685
          %691 = dma.hbm_to_vmem [thread:$0]  %s684, 1024, %s686, %s675, 64, 64, 4
        $region60: #{prefill.1} parent=31 // pred_fallthru
          _
        // Predicated region
        $region61: #{prefill.1} parent=31 // pred_check
          %p692 = pneg %p248
        $region62: #{prefill.1} parent=31 // pred_check_branch
          %694 = sbr.rel (%p692) target = $region64
        $region63: #{prefill.1} parent=31 // pred_region
          %p695 = scmp.lt.s32.totalorder %s42, 1
          %s696 = scalar_select %p695, %s42, 1
          %s697 = scalar_lea.vmem %s7, %s696
        $region64: #{prefill.1} parent=31 // pred_fallthru
          _
        // Predicated region
        $region65: #{prefill.1} parent=31 // pred_check
          %p698 = pneg %p274
        $region66: #{prefill.1} parent=31 // pred_check_branch
          %700 = sbr.rel (%p698) target = $region68
        $region67: #{prefill.1} parent=31 // pred_region
          %p701 = scmp.lt.s32.totalorder %s42, 1
          %s702 = scalar_select %p701, %s42, 1
          %s703 = scalar_lea.vmem %s8, %s702
        $region68: #{prefill.1} parent=31 // pred_fallthru
          _
        // Predicated region
        $region69: #{prefill.1} parent=31 // pred_check
          %p704 = pneg %p300
        $region70: #{prefill.1} parent=31 // pred_check_branch
          %706 = sbr.rel (%p704) target = $region72
        $region71: #{prefill.1} parent=31 // pred_region
          %p707 = scmp.lt.s32.totalorder %s42, 1
          %s708 = scalar_select %p707, %s42, 1
          %s709 = scalar_lea.vmem %s9, %s708
        $region72: #{prefill.1} parent=31 // pred_fallthru
          _
        // Predicated region
        $region73: #{prefill.1} parent=31 // pred_check
          %p710 = pneg %p326
        $region74: #{prefill.1} parent=31 // pred_check_branch
          %712 = sbr.rel (%p710) target = $region76
        $region75: #{prefill.1} parent=31 // pred_region
          %p713 = scmp.lt.s32.totalorder %s42, 1
          %s714 = scalar_select %p713, %s42, 1
          %s715 = smul.addr %s714, 32
          %s716 = smul.addr %s715, 4
          %s717 = scalar_lea.vmem %s10, %s716
        $region76: #{prefill.1} parent=31 // pred_fallthru
          _
        // Predicated region
        $region77: #{prefill.1} parent=31 // pred_check
          %p718 = pneg %p352
        $region78: #{prefill.1} parent=31 // pred_check_branch
          %720 = sbr.rel (%p718) target = $region80
        $region79: #{prefill.1} parent=31 // pred_region
          %p721 = scmp.lt.s32.totalorder %s42, 1
          %s722 = scalar_select %p721, %s42, 1
          %s723 = smul.addr %s722, 2
          %s724 = scalar_lea.vmem %s11, %s723
        $region80: #{prefill.1} parent=31 // pred_fallthru
          _
        // Predicated region
        $region81: #{prefill.1} parent=31 // pred_check
          %p725 = pneg %p378
        $region82: #{prefill.1} parent=31 // pred_check_branch
          %727 = sbr.rel (%p725) target = $region84
        $region83: #{prefill.1} parent=31 // pred_region
          %s728 = sand.u32 %s34, 1
          %s729 = scalar_lea.sflag [#allocation6], %s728
          %s730 = sand.u32 %s368, 1
          %s731 = smul.addr %s730, 128
          %s732 = scalar_lea.vmem [#allocation7], %s731
          %s734 = ssub.s32 2048, 2048
          %735 = vsyncadd %s729, %s734
          %s736 = smul.addr %s42, 32
          %s737 = smul.addr %s736, 64
          %s738 = scalar_lea.hbm %s12, %s737
          %s739 = sshll.u32 %s732, 4
          %s740 = int_to_ptr.vmem [resolvable:$true] %s739
          %745 = dma.hbm_to_vmem [thread:$0]  %s738, 2048, %s740, %s729, 64, 64, 4
        $region84: #{prefill.1} parent=31 // pred_fallthru
          _
        // Predicated region
        $region85: #{prefill.1} parent=31 // pred_check
          %p746 = pneg %p404
        $region86: #{prefill.1} parent=31 // pred_check_branch
          %748 = sbr.rel (%p746) target = $region88
        $region87: #{prefill.1} parent=31 // pred_region
          %p749 = scmp.lt.s32.totalorder %s42, 1
          %s750 = scalar_select %p749, %s42, 1
          %s751 = scalar_lea.vmem %s13, %s750
        $region88: #{prefill.1} parent=31 // pred_fallthru
          _
      $region32: #{prefill.1} parent=5 // pred_fallthru
        _
      %p752 = scmp.le.s32.totalorder 1, %s34
      %p753 = scmp.lt.s32.totalorder %s34, 5
      %p754 = pnand %p752, %p753
      %p755 = pneg %p754
      // Predicated region
      $region89: #{prefill.1} parent=5 // pred_check
        _
      $region90: #{prefill.1} parent=5 // pred_check_branch
        %757 = sbr.rel (%p754) target = $region92
      $region91: #{prefill.1} parent=5 // pred_region
        %s758 = ssub.s32 %s34, 1
        %s759 = sand.u32 %s163, 1
        %s760 = scalar_lea.sflag [#allocation4], %s759
        %s761 = sand.u32 %s163, 1
        %s762 = smul.addr %s761, 192
        %s763 = scalar_lea.vmem [#allocation3], %s762
        // Predicated region
        $region93: #{prefill.1} parent=91 // pred_check
          %p764 = pneg %p176
        $region94: #{prefill.1} parent=91 // pred_check_branch
          %766 = sbr.rel (%p764) target = $region96
        $region95: #{prefill.1} parent=91 // pred_region
          %767 = dma.done %s760, 3072
        $region96: #{prefill.1} parent=91 // pred_fallthru
          _
        %s768 = sand.u32 %s39, 1
        %s769 = scalar_lea.sflag [#allocation6], %s768
        %s770 = sand.u32 %s215, 1
        %s771 = smul.addr %s770, 64
        %s772 = scalar_lea.vmem [#allocation5], %s771
        // Predicated region
        $region97: #{prefill.1} parent=91 // pred_check
          %p773 = pneg %p228
        $region98: #{prefill.1} parent=91 // pred_check_branch
          %775 = sbr.rel (%p773) target = $region100
        $region99: #{prefill.1} parent=91 // pred_region
          %776 = dma.done %s769, 1024
        $region100: #{prefill.1} parent=91 // pred_fallthru
          _
        %s777 = sand.u32 %s39, 1
        %s778 = scalar_lea.sflag [#allocation6], %s777
        %s779 = sand.u32 %s371, 1
        %s780 = smul.addr %s779, 128
        %s781 = scalar_lea.vmem [#allocation7], %s780
        // Predicated region
        $region101: #{prefill.1} parent=91 // pred_check
          %p782 = pneg %p384
        $region102: #{prefill.1} parent=91 // pred_check_branch
          %784 = sbr.rel (%p782) target = $region104
        $region103: #{prefill.1} parent=91 // pred_region
          %785 = dma.done %s778, 2048
        $region104: #{prefill.1} parent=91 // pred_fallthru
          _
        // Predicated region
        $region105: #{prefill.1} parent=91 // pred_check
          %p786 = pneg %p473
        $region106: #{prefill.1} parent=91 // pred_check_branch
          %788 = sbr.rel (%p786) target = $region108
        $region107: #{prefill.1} parent=91 // pred_region
          %789 = dma.done [#allocation9], 2048
        $region108: #{prefill.1} parent=91 // pred_fallthru
          _
        %p790 = scmp.lt.s32.totalorder %s43, 1
        %s791 = scalar_select %p790, %s43, 1
        %s792 = smul.addr %s791, 8
        %s793 = scalar_lea.vmem %s0, %s792
        %p794 = pneg %p72
        %p795 = pneg %p69
        %p796 = scmp.lt.s32.totalorder %s43, 1
        %s797 = scalar_select %p796, %s43, 1
        %s798 = smul.addr %s797, 8
        %s799 = scalar_lea.vmem %s1, %s798
        %p800 = pneg %p98
        %p801 = pneg %p95
        %p802 = scmp.lt.s32.totalorder %s44, 1
        %s803 = scalar_select %p802, %s44, 1
        %s804 = scalar_lea.vmem %s2, %s803
        %p805 = pneg %p124
        %p806 = pneg %p121
        %p807 = scmp.lt.s32.totalorder %s44, 1
        %s808 = scalar_select %p807, %s44, 1
        %s809 = scalar_lea.vmem %s3, %s808
        %p810 = pneg %p150
        %p811 = pneg %p147
        %s812 = sand.u32 %s163, 1
        %s813 = scalar_lea.sflag [#allocation4], %s812
        %s814 = sand.u32 %s163, 1
        %s815 = smul.addr %s814, 192
        %s816 = scalar_lea.vmem [#allocation3], %s815
        %p817 = pneg %p176
        %p818 = pneg %p173
        %p819 = scmp.lt.s32.totalorder %s44, 1
        %s820 = scalar_select %p819, %s44, 1
        %s821 = smul.addr %s820, 3
        %s822 = scalar_lea.vmem %s5, %s821
        %p823 = pneg %p202
        %p824 = pneg %p199
        %s825 = sand.u32 %s39, 1
        %s826 = scalar_lea.sflag [#allocation6], %s825
        %s827 = sand.u32 %s215, 1
        %s828 = smul.addr %s827, 64
        %s829 = scalar_lea.vmem [#allocation5], %s828
        %p830 = pneg %p228
        %p831 = pneg %p225
        %p832 = scmp.lt.s32.totalorder %s44, 1
        %s833 = scalar_select %p832, %s44, 1
        %s834 = scalar_lea.vmem %s7, %s833
        %p835 = pneg %p254
        %p836 = pneg %p251
        %p837 = scmp.lt.s32.totalorder %s44, 1
        %s838 = scalar_select %p837, %s44, 1
        %s839 = scalar_lea.vmem %s8, %s838
        %p840 = pneg %p280
        %p841 = pneg %p277
        %p842 = scmp.lt.s32.totalorder %s44, 1
        %s843 = scalar_select %p842, %s44, 1
        %s844 = scalar_lea.vmem %s9, %s843
        %p845 = pneg %p306
        %p846 = pneg %p303
        %p847 = scmp.lt.s32.totalorder %s44, 1
        %s848 = scalar_select %p847, %s44, 1
        %s849 = smul.addr %s848, 32
        %s850 = smul.addr %s849, 4
        %s851 = scalar_lea.vmem %s10, %s850
        %p852 = pneg %p332
        %p853 = pneg %p329
        %p854 = scmp.lt.s32.totalorder %s44, 1
        %s855 = scalar_select %p854, %s44, 1
        %s856 = smul.addr %s855, 2
        %s857 = scalar_lea.vmem %s11, %s856
        %p858 = pneg %p358
        %p859 = pneg %p355
        %s860 = sand.u32 %s39, 1
        %s861 = scalar_lea.sflag [#allocation6], %s860
        %s862 = sand.u32 %s371, 1
        %s863 = smul.addr %s862, 128
        %s864 = scalar_lea.vmem [#allocation7], %s863
        %p865 = pneg %p384
        %p866 = pneg %p381
        %p867 = scmp.lt.s32.totalorder %s44, 1
        %s868 = scalar_select %p867, %s44, 1
        %s869 = scalar_lea.vmem %s13, %s868
        %p870 = pneg %p410
        %p871 = pneg %p407
        %p872 = pneg %p431
        %p873 = pneg %p428
        %p874 = pneg %p452
        %p875 = pneg %p449
        %p876 = pneg %p473
        %p877 = pneg %p470
        %p878 = pneg %p494
        %p879 = pneg %p491
        %p880 = pneg %p520
        %p881 = pneg %p517
        %p882 = scmp.lt.s32.totalorder %s43, 1
        %s883 = scalar_select %p882, %s43, 1
        %s884 = smul.addr %s883, 2
        %s885 = scalar_lea.vmem %s18, %s884
        %p886 = pneg %p548
        %p887 = pneg %p545
        %p888 = scmp.lt.s32.totalorder %s44, 1
        %s889 = scalar_select %p888, %s44, 1
        %p890 = scmp.lt.s32.totalorder %s43, 1
        %s891 = scalar_select %p890, %s43, 1
        %s892 = smul.addr %s889, 2
        %s893 = sadd.s32 %s891, %s892
        %s894 = smul.addr %s893, 8
        %s895 = scalar_lea.vmem %s19, %s894
        %p896 = pneg %p576
        %p897 = pneg %p573
        %p898 = scmp.lt.s32.totalorder %s44, 1
        %s899 = scalar_select %p898, %s44, 1
        %p900 = scmp.lt.s32.totalorder %s43, 1
        %s901 = scalar_select %p900, %s43, 1
        %s902 = smul.addr %s899, 2
        %s903 = sadd.s32 %s901, %s902
        %s904 = smul.addr %s903, 8
        %s905 = scalar_lea.vmem %s20, %s904
        %p906 = scmp.lt.s32.totalorder %s43, 1
        %s907 = scalar_select %p906, %s43, 1
        %s908 = smul.addr %s907, 8
        %s909 = scalar_lea.vmem %s0, %s908
        %p910 = scmp.lt.s32.totalorder %s43, 1
        %s911 = scalar_select %p910, %s43, 1
        %s912 = smul.addr %s911, 8
        %s913 = scalar_lea.vmem %s1, %s912
        %p914 = scmp.lt.s32.totalorder %s44, 1
        %s915 = scalar_select %p914, %s44, 1
        %s916 = scalar_lea.vmem %s2, %s915
        %p917 = scmp.lt.s32.totalorder %s44, 1
        %s918 = scalar_select %p917, %s44, 1
        %s919 = scalar_lea.vmem %s3, %s918
        %p920 = scmp.lt.s32.totalorder %s44, 1
        %s921 = scalar_select %p920, %s44, 1
        %s922 = smul.addr %s921, 3
        %s923 = scalar_lea.vmem %s5, %s922
        %p924 = scmp.lt.s32.totalorder %s44, 1
        %s925 = scalar_select %p924, %s44, 1
        %s926 = scalar_lea.vmem %s7, %s925
        %p927 = scmp.lt.s32.totalorder %s44, 1
        %s928 = scalar_select %p927, %s44, 1
        %s929 = scalar_lea.vmem %s8, %s928
        %p930 = scmp.lt.s32.totalorder %s44, 1
        %s931 = scalar_select %p930, %s44, 1
        %s932 = scalar_lea.vmem %s9, %s931
        %p933 = scmp.lt.s32.totalorder %s44, 1
        %s934 = scalar_select %p933, %s44, 1
        %s935 = smul.addr %s934, 32
        %s936 = smul.addr %s935, 4
        %s937 = scalar_lea.vmem %s10, %s936
        %p938 = scmp.lt.s32.totalorder %s44, 1
        %s939 = scalar_select %p938, %s44, 1
        %s940 = smul.addr %s939, 2
        %s941 = scalar_lea.vmem %s11, %s940
        %p942 = scmp.lt.s32.totalorder %s44, 1
        %s943 = scalar_select %p942, %s44, 1
        %s944 = scalar_lea.vmem %s13, %s943
        %p945 = scmp.lt.s32.totalorder %s43, 1
        %s946 = scalar_select %p945, %s43, 1
        %s947 = smul.addr %s946, 2
        %s948 = scalar_lea.vmem %s18, %s947
        %p949 = scmp.lt.s32.totalorder %s44, 1
        %s950 = scalar_select %p949, %s44, 1
        %p951 = scmp.lt.s32.totalorder %s43, 1
        %s952 = scalar_select %p951, %s43, 1
        %s953 = smul.addr %s950, 2
        %s954 = sadd.s32 %s952, %s953
        %s955 = smul.addr %s954, 8
        %s956 = scalar_lea.vmem %s19, %s955
        %p957 = scmp.lt.s32.totalorder %s44, 1
        %s958 = scalar_select %p957, %s44, 1
        %p959 = scmp.lt.s32.totalorder %s43, 1
        %s960 = scalar_select %p959, %s43, 1
        %s961 = smul.addr %s958, 2
        %s962 = sadd.s32 %s960, %s961
        %s963 = smul.addr %s962, 8
        %s964 = scalar_lea.vmem %s20, %s963
        %p966 = scmp.eq.s32.totalorder %s44, 0
        // Predicated region
        $region109: #{prefill.1} parent=91 // pred_check
          %p967 = pneg %p966
        $region110: #{prefill.1} parent=91 // pred_check_branch
          %969 = sbr.rel (%p967) target = $region112
        $region111: #{prefill.1} parent=91 // pred_region
          %v970 = vld [vmem:[%s909] sm:$0xff]
          %971 = vst [vmem:[#allocation2] sm:$0xff] %v970
        $region112: #{prefill.1} parent=91 // pred_fallthru
          _
        %v972 = vld [vmem:[#allocation2] sm:$0xff]
        %v973 = vld [vmem:[%s913] sm:$0xff]
        %v974 = vld [vmem:[%s916] sm:$0x1]
        %v975 = vld [vmem:[%s919] sm:$0x1]
        %976 = vadd.xlane.f32.xlu0 %v972
        %v977 = vpop.xlane.xlu0 %976
        %v978 = vrcp.pop 128.0
        %v979 = vmul.f32 %v977, %v978
        %v980 = vsub.f32 %v972, %v979
        %v981 = vmul.f32 %v980, %v980
        %982 = vadd.xlane.f32.xlu0 %v981
        %v983 = vpop.xlane.xlu0 %982
        %v984 = vmul.f32 %v983, %v978
        %v985 = vadd.f32 %v984, 1e-05
        %v986 = vrsqrt.pop %v985
        %v987 = vmul.f32 %v980, %v986
        %v989 = vlaneseq
        %v990 = vshrl.u32 %v989, 7
        %v991 = vsub.s32 0, %v990
        %v992 = vrot.slane %v974, %v991
        %v994 = vmul.f32 %v987, %v992
        %v996 = vlaneseq
        %v997 = vshrl.u32 %v996, 7
        %v998 = vsub.s32 0, %v997
        %v999 = vrot.slane %v975, %v998
        %v1001 = vadd.f32 %v994, %v999
        %v1002 = vpack.c.bf16 %v1001, %v1001
        %v1003 = vld [vmem:[%s763] sm:$0xff]
        %v1004 = vld [vmem:[%s763 + $0x8] sm:$0xf]
        %v1005 = vld [vmem:[%s763 + $0xc] sm:$0xff]
        %v1006 = vld [vmem:[%s763 + $0x14] sm:$0xf]
        %v1007 = vld [vmem:[%s763 + $0x18] sm:$0xff]
        %v1008 = vld [vmem:[%s763 + $0x20] sm:$0xf]
        %v1009 = vld [vmem:[%s763 + $0x24] sm:$0xff]
        %v1010 = vld [vmem:[%s763 + $0x2c] sm:$0xf]
        %v1011 = vld [vmem:[%s763 + $0x30] sm:$0xff]
        %v1012 = vld [vmem:[%s763 + $0x38] sm:$0xf]
        %v1013 = vld [vmem:[%s763 + $0x3c] sm:$0xff]
        %v1014 = vld [vmem:[%s763 + $0x44] sm:$0xf]
        %v1015 = vld [vmem:[%s763 + $0x48] sm:$0xff]
        %v1016 = vld [vmem:[%s763 + $0x50] sm:$0xf]
        %v1017 = vld [vmem:[%s763 + $0x54] sm:$0xff]
        %v1018 = vld [vmem:[%s763 + $0x5c] sm:$0xf]
        %v1019 = vld [vmem:[%s763 + $0x60] sm:$0xff]
        %v1020 = vld [vmem:[%s763 + $0x68] sm:$0xf]
        %v1021 = vld [vmem:[%s763 + $0x6c] sm:$0xff]
        %v1022 = vld [vmem:[%s763 + $0x74] sm:$0xf]
        %v1023 = vld [vmem:[%s763 + $0x78] sm:$0xff]
        %v1024 = vld [vmem:[%s763 + $0x80] sm:$0xf]
        %v1025 = vld [vmem:[%s763 + $0x84] sm:$0xff]
        %v1026 = vld [vmem:[%s763 + $0x8c] sm:$0xf]
        %v1027 = vld [vmem:[%s763 + $0x90] sm:$0xff]
        %v1028 = vld [vmem:[%s763 + $0x98] sm:$0xf]
        %v1029 = vld [vmem:[%s763 + $0x9c] sm:$0xff]
        %v1030 = vld [vmem:[%s763 + $0xa4] sm:$0xf]
        %v1031 = vld [vmem:[%s763 + $0xa8] sm:$0xff]
        %v1032 = vld [vmem:[%s763 + $0xb0] sm:$0xf]
        %v1033 = vld [vmem:[%s763 + $0xb4] sm:$0xff]
        %v1034 = vld [vmem:[%s763 + $0xbc] sm:$0xf]
        %v1035 = vld [vmem:[%s923] sm:$0x7]
        %v1037 = vlaneseq
        %v1038 = vshrl.u32 %v1037, 7
        %v1039 = vsub.s32 0, %v1038
        %v1040 = vrot.slane %v1035, %v1039
        %v1041 = vlaneseq
        %v1042 = vshrl.u32 %v1041, 7
        %v1043 = vsub.s32 1, %v1042
        %v1044 = vrot.slane %v1035, %v1043
        %v1045 = vlaneseq
        %v1046 = vshrl.u32 %v1045, 7
        %v1047 = vsub.s32 2, %v1046
        %v1048 = vrot.slane %v1035, %v1047
        %v1084 = vunpack.c.l.b16 %v1003
        %v1085 = vunpack.c.h.b16 %v1003
        %v1086 = vunpack.c.l.b16 %v1004
        %v1087 = vunpack.c.l.b16 %v1005
        %v1088 = vunpack.c.h.b16 %v1005
        %v1089 = vunpack.c.l.b16 %v1006
        %v1090 = vunpack.c.l.b16 %v1007
        %v1091 = vunpack.c.h.b16 %v1007
        %v1092 = vunpack.c.l.b16 %v1008
        %v1093 = vunpack.c.l.b16 %v1009
        %v1094 = vunpack.c.h.b16 %v1009
        %v1095 = vunpack.c.l.b16 %v1010
        %v1096 = vunpack.c.l.b16 %v1011
        %v1097 = vunpack.c.h.b16 %v1011
        %v1098 = vunpack.c.l.b16 %v1012
        %v1099 = vunpack.c.l.b16 %v1013
        %v1100 = vunpack.c.h.b16 %v1013
        %v1101 = vunpack.c.l.b16 %v1014
        %v1102 = vunpack.c.l.b16 %v1015
        %v1103 = vunpack.c.h.b16 %v1015
        %v1104 = vunpack.c.l.b16 %v1016
        %v1105 = vunpack.c.l.b16 %v1017
        %v1106 = vunpack.c.h.b16 %v1017
        %v1107 = vunpack.c.l.b16 %v1018
        %v1108 = vunpack.c.l.b16 %v1019
        %v1109 = vunpack.c.h.b16 %v1019
        %v1110 = vunpack.c.l.b16 %v1020
        %v1111 = vunpack.c.l.b16 %v1021
        %v1112 = vunpack.c.h.b16 %v1021
        %v1113 = vunpack.c.l.b16 %v1022
        %v1114 = vunpack.c.l.b16 %v1023
        %v1115 = vunpack.c.h.b16 %v1023
        %v1116 = vunpack.c.l.b16 %v1024
        %v1117 = vunpack.c.l.b16 %v1025
        %v1118 = vunpack.c.h.b16 %v1025
        %v1119 = vunpack.c.l.b16 %v1026
        %v1120 = vunpack.c.l.b16 %v1027
        %v1121 = vunpack.c.h.b16 %v1027
        %v1122 = vunpack.c.l.b16 %v1028
        %v1123 = vunpack.c.l.b16 %v1029
        %v1124 = vunpack.c.h.b16 %v1029
        %v1125 = vunpack.c.l.b16 %v1030
        %v1126 = vunpack.c.l.b16 %v1031
        %v1127 = vunpack.c.h.b16 %v1031
        %v1128 = vunpack.c.l.b16 %v1032
        %v1129 = vunpack.c.l.b16 %v1033
        %v1130 = vunpack.c.h.b16 %v1033
        %v1131 = vunpack.c.l.b16 %v1034
        %v1132 = vpack.c.b16 %v1087, %v1084
        %v1133 = vpack.c.b16 %v1088, %v1085
        %v1134 = vpack.c.b16 %v1089, %v1086
        %v1135 = vpack.c.b16 %v1093, %v1090
        %v1136 = vpack.c.b16 %v1094, %v1091
        %v1137 = vpack.c.b16 %v1095, %v1092
        %v1138 = vpack.c.b16 %v1099, %v1096
        %v1139 = vpack.c.b16 %v1100, %v1097
        %v1140 = vpack.c.b16 %v1101, %v1098
        %v1141 = vpack.c.b16 %v1105, %v1102
        %v1142 = vpack.c.b16 %v1106, %v1103
        %v1143 = vpack.c.b16 %v1107, %v1104
        %v1144 = vpack.c.b16 %v1111, %v1108
        %v1145 = vpack.c.b16 %v1112, %v1109
        %v1146 = vpack.c.b16 %v1113, %v1110
        %v1147 = vpack.c.b16 %v1117, %v1114
        %v1148 = vpack.c.b16 %v1118, %v1115
        %v1149 = vpack.c.b16 %v1119, %v1116
        %v1150 = vpack.c.b16 %v1123, %v1120
        %v1151 = vpack.c.b16 %v1124, %v1121
        %v1152 = vpack.c.b16 %v1125, %v1122
        %v1153 = vpack.c.b16 %v1129, %v1126
        %v1154 = vpack.c.b16 %v1130, %v1127
        %v1155 = vpack.c.b16 %v1131, %v1128
        %1180 = vmatprep.subr.bf16.mxu0 %v1154
        %1181 = vmatpush1.bf16.msra.mxu0 %v1153
        %1182 = vmatprep.subr.bf16.mxu0 %v1151
        %1183 = vmatpush1.bf16.msra.mxu0 %v1150
        %1184 = vmatprep.subr.bf16.mxu0 %v1148
        %1185 = vmatpush1.bf16.msra.mxu0 %v1147
        %1186 = vmatprep.subr.bf16.mxu0 %v1145
        %1187 = vmatpush1.bf16.msra.mxu0 %v1144
        %1188 = vmatprep.subr.bf16.mxu0 %v1142
        %1189 = vmatpush1.bf16.msra.mxu0 %v1141
        %1190 = vmatprep.subr.bf16.mxu0 %v1139
        %1191 = vmatpush1.bf16.msra.mxu0 %v1138
        %1192 = vmatprep.subr.bf16.mxu0 %v1136
        %1193 = vmatpush1.bf16.msra.mxu0 %v1135
        %1194 = vmatprep.subr.bf16.mxu0 %v1133
        %1195 = vmatpush1.bf16.msra.mxu0 %v1132
        %1196 = vmatprep.subr.bf16.mxu0 0
        %1197 = vmatpush2.bf16.msra.mxu0 0
        %1198 = vmatprep.subr.bf16.mxu0 0
        %1199 = vmatpush2.bf16.msra.mxu0 0
        %1200 = vmatprep.subr.bf16.mxu0 0
        %1201 = vmatpush2.bf16.msra.mxu0 0
        %1202 = vmatprep.subr.bf16.mxu0 0
        %1203 = vmatpush2.bf16.msra.mxu0 0
        %1204 = vmatprep.subr.bf16.mxu0 0
        %1205 = vmatpush2.bf16.msra.mxu0 0
        %1206 = vmatprep.subr.bf16.mxu0 0
        %1207 = vmatpush2.bf16.msra.mxu0 0
        %1208 = vmatprep.subr.bf16.mxu0 0
        %1209 = vmatpush2.bf16.msra.mxu0 0
        %1210 = vmatprep.subr.bf16.mxu0 0
        %1211 = vmatpush2.bf16.msra.mxu0 0
        %1212 = vmatprep.mubr.bf16.mxu0 0
        %1213 = vmatmul.mubr.bf16.gmra.mxu0 %v1002
        %v1214 = vpop.f32.mrf.mxu0
        %v1215 = vadd.f32 %v1040, %v1214
        %v1216 = vpop.f32.mrf.mxu0
        %v1217 = vadd.f32 %v1044, %v1216
        %v1218 = vpop.f32.mrf.mxu0
        %v1219 = vpop.f32.mrf.mxu0
        %1220 = vdwg.mxu0
        %1221 = vmatprep.subr.bf16.mxu0 0
        %1222 = vmatpush1.bf16.msra.mxu0 %v1155
        %1223 = vmatprep.subr.bf16.mxu0 0
        %1224 = vmatpush1.bf16.msra.mxu0 %v1152
        %1225 = vmatprep.subr.bf16.mxu0 0
        %1226 = vmatpush1.bf16.msra.mxu0 %v1149
        %1227 = vmatprep.subr.bf16.mxu0 0
        %1228 = vmatpush1.bf16.msra.mxu0 %v1146
        %1229 = vmatprep.subr.bf16.mxu0 0
        %1230 = vmatpush1.bf16.msra.mxu0 %v1143
        %1231 = vmatprep.subr.bf16.mxu0 0
        %1232 = vmatpush1.bf16.msra.mxu0 %v1140
        %1233 = vmatprep.subr.bf16.mxu0 0
        %1234 = vmatpush1.bf16.msra.mxu0 %v1137
        %1235 = vmatprep.subr.bf16.mxu0 0
        %1236 = vmatpush1.bf16.msra.mxu0 %v1134
        %1237 = vmatprep.subr.bf16.mxu0 0
        %1238 = vmatpush2.bf16.msra.mxu0 0
        %1239 = vmatprep.subr.bf16.mxu0 0
        %1240 = vmatpush2.bf16.msra.mxu0 0
        %1241 = vmatprep.subr.bf16.mxu0 0
        %1242 = vmatpush2.bf16.msra.mxu0 0
        %1243 = vmatprep.subr.bf16.mxu0 0
        %1244 = vmatpush2.bf16.msra.mxu0 0
        %1245 = vmatprep.subr.bf16.mxu0 0
        %1246 = vmatpush2.bf16.msra.mxu0 0
        %1247 = vmatprep.subr.bf16.mxu0 0
        %1248 = vmatpush2.bf16.msra.mxu0 0
        %1249 = vmatprep.subr.bf16.mxu0 0
        %1250 = vmatpush2.bf16.msra.mxu0 0
        %1251 = vmatprep.subr.bf16.mxu0 0
        %1252 = vmatpush2.bf16.msra.mxu0 0
        %1253 = vmatprep.mubr.bf16.mxu0 0
        %1254 = vmatmul.mubr.bf16.gmra.mxu0 %v1002
        %v1255 = vpop.f32.mrf.mxu0
        %v1256 = vadd.f32 %v1048, %v1255
        %v1257 = vpop.f32.mrf.mxu0
        %v1258 = vpop.f32.mrf.mxu0
        %v1259 = vpop.f32.mrf.mxu0
        %1260 = vdwg.mxu0
        %v1261 = vmul.f32 %v1215, 0.17677669
        %1262 = vst [vmem:[%s956] sm:$0xff] %v1217
        %1263 = vst [vmem:[%s964] sm:$0xff] %v1256
        %v1264 = vpack.c.bf16 %v1261, %v1261
        %v1265 = vpack.c.bf16 %v1217, %v1217
        %v1266 = vpack.c.bf16 %v1256, %v1256
        %vm1267 = vcmask 261120
        %v1269 = vsel %vm1267, %v1264, 0
        %v1272 = vsel %vm1267, %v1265, 0
        %1274 = vmatprep.subr.bf16.mxu0 0
        %1275 = vmatpush1.bf16.xpose.msra.mxu0 0
        %1276 = vmatprep.subr.bf16.mxu0 0
        %1277 = vmatpush1.bf16.xpose.msra.mxu0 0
        %1278 = vmatprep.subr.bf16.mxu0 0
        %1279 = vmatpush1.bf16.xpose.msra.mxu0 0
        %1280 = vmatprep.subr.bf16.mxu0 0
        %1281 = vmatpush1.bf16.xpose.msra.mxu0 0
        %1282 = vmatprep.subr.bf16.mxu0 0
        %1283 = vmatpush1.bf16.xpose.msra.mxu0 0
        %1284 = vmatprep.subr.bf16.mxu0 0
        %1285 = vmatpush1.bf16.xpose.msra.mxu0 0
        %1286 = vmatprep.subr.bf16.mxu0 0
        %1287 = vmatpush1.bf16.xpose.msra.mxu0 0
        %1288 = vmatprep.subr.bf16.mxu0 0
        %1289 = vmatpush1.bf16.xpose.msra.mxu0 %v1272
        %1290 = vmatprep.subr.bf16.mxu0 0
        %1291 = vmatpush2.bf16.xpose.msra.mxu0 0
        %1292 = vmatprep.subr.bf16.mxu0 0
        %1293 = vmatpush2.bf16.xpose.msra.mxu0 0
        %1294 = vmatprep.subr.bf16.mxu0 0
        %1295 = vmatpush2.bf16.xpose.msra.mxu0 0
        %1296 = vmatprep.subr.bf16.mxu0 0
        %1297 = vmatpush2.bf16.xpose.msra.mxu0 0
        %1298 = vmatprep.subr.bf16.mxu0 0
        %1299 = vmatpush2.bf16.xpose.msra.mxu0 0
        %1300 = vmatprep.subr.bf16.mxu0 0
        %1301 = vmatpush2.bf16.xpose.msra.mxu0 0
        %1302 = vmatprep.subr.bf16.mxu0 0
        %1303 = vmatpush2.bf16.xpose.msra.mxu0 0
        %1304 = vmatprep.subr.bf16.mxu0 0
        %1305 = vmatpush2.bf16.xpose.msra.mxu0 0
        %1306 = vmatprep.mubr.bf16.mxu0 0
        %1307 = vmatmul.mubr.bf16.gmra.mxu0 %v1269
        %v1308 = vpop.f32.mrf.mxu0
        %v1309 = vadd.f32 %v973, %v1308
        %v1310 = vpop.f32.mrf.mxu0
        %v1311 = vpop.f32.mrf.mxu0
        %v1312 = vpop.f32.mrf.mxu0
        %1313 = vdwg.mxu0
        %vm1314 = vcmask 64512
        %v1315 = vsel %vm1314, %v1309, -inf
        %1316 = vmax.xlane.f32.xlu0 %v1315
        %v1317 = vpop.xlane.xlu0 %1316
        %v1318 = vsub.f32 %v1309, %v1317
        %v1319 = vmul.f32 %v1318, 1.442695
        %v1320 = vpow.pop %v1319
        %v1321 = vsel %vm1314, %v1320, 0.0
        %1322 = vadd.xlane.f32.xlu0 %v1321
        %v1323 = vpop.xlane.xlu0 %1322
        %v1324 = vrcp.pop %v1323
        %v1325 = vmul.f32 %v1320, %v1324
        %v1326 = vpack.c.bf16 %v1325, %v1325
        %v1328 = vsel %vm1314, %v1326, 0
        %vm1330 = vcmask 1043456
        %v1332 = vsel %vm1330, %v1266, 0
        %1334 = vmatprep.subr.bf16.mxu0 0
        %1335 = vmatpush1.bf16.msra.mxu0 0
        %1336 = vmatprep.subr.bf16.mxu0 0
        %1337 = vmatpush1.bf16.msra.mxu0 0
        %1338 = vmatprep.subr.bf16.mxu0 0
        %1339 = vmatpush1.bf16.msra.mxu0 0
        %1340 = vmatprep.subr.bf16.mxu0 0
        %1341 = vmatpush1.bf16.msra.mxu0 0
        %1342 = vmatprep.subr.bf16.mxu0 0
        %1343 = vmatpush1.bf16.msra.mxu0 0
        %1344 = vmatprep.subr.bf16.mxu0 0
        %1345 = vmatpush1.bf16.msra.mxu0 0
        %1346 = vmatprep.subr.bf16.mxu0 0
        %1347 = vmatpush1.bf16.msra.mxu0 0
        %1348 = vmatprep.subr.bf16.mxu0 0
        %1349 = vmatpush1.bf16.msra.mxu0 %v1332
        %1350 = vmatprep.subr.bf16.mxu0 0
        %1351 = vmatpush2.bf16.msra.mxu0 0
        %1352 = vmatprep.subr.bf16.mxu0 0
        %1353 = vmatpush2.bf16.msra.mxu0 0
        %1354 = vmatprep.subr.bf16.mxu0 0
        %1355 = vmatpush2.bf16.msra.mxu0 0
        %1356 = vmatprep.subr.bf16.mxu0 0
        %1357 = vmatpush2.bf16.msra.mxu0 0
        %1358 = vmatprep.subr.bf16.mxu0 0
        %1359 = vmatpush2.bf16.msra.mxu0 0
        %1360 = vmatprep.subr.bf16.mxu0 0
        %1361 = vmatpush2.bf16.msra.mxu0 0
        %1362 = vmatprep.subr.bf16.mxu0 0
        %1363 = vmatpush2.bf16.msra.mxu0 0
        %1364 = vmatprep.subr.bf16.mxu0 0
        %1365 = vmatpush2.bf16.msra.mxu0 0
        %1366 = vmatprep.mubr.bf16.mxu0 0
        %1367 = vmatmul.mubr.bf16.gmra.mxu0 %v1328
        %v1368 = vpop.f32.mrf.mxu0
        %v1369 = vadd.f32 0.0, %v1368
        %v1370 = vpop.f32.mrf.mxu0
        %v1371 = vpop.f32.mrf.mxu0
        %v1372 = vpop.f32.mrf.mxu0
        %1373 = vdwg.mxu0
        %1375 = vrot.lane.b32.xlu0 %v1264, 96
        %v1376 = vpop.permute.xlu0 %1375
        %1378 = vrot.lane.b32.xlu0 %v1265, 96
        %v1379 = vpop.permute.xlu0 %1378
        %v1381 = vsel %vm1267, %v1376, 0
        %v1384 = vsel %vm1267, %v1379, 0
        %1386 = vmatprep.subr.bf16.mxu0 0
        %1387 = vmatpush1.bf16.xpose.msra.mxu0 0
        %1388 = vmatprep.subr.bf16.mxu0 0
        %1389 = vmatpush1.bf16.xpose.msra.mxu0 0
        %1390 = vmatprep.subr.bf16.mxu0 0
        %1391 = vmatpush1.bf16.xpose.msra.mxu0 0
        %1392 = vmatprep.subr.bf16.mxu0 0
        %1393 = vmatpush1.bf16.xpose.msra.mxu0 0
        %1394 = vmatprep.subr.bf16.mxu0 0
        %1395 = vmatpush1.bf16.xpose.msra.mxu0 0
        %1396 = vmatprep.subr.bf16.mxu0 0
        %1397 = vmatpush1.bf16.xpose.msra.mxu0 0
        %1398 = vmatprep.subr.bf16.mxu0 0
        %1399 = vmatpush1.bf16.xpose.msra.mxu0 0
        %1400 = vmatprep.subr.bf16.mxu0 0
        %1401 = vmatpush1.bf16.xpose.msra.mxu0 %v1384
        %1402 = vmatprep.subr.bf16.mxu0 0
        %1403 = vmatpush2.bf16.xpose.msra.mxu0 0
        %1404 = vmatprep.subr.bf16.mxu0 0
        %1405 = vmatpush2.bf16.xpose.msra.mxu0 0
        %1406 = vmatprep.subr.bf16.mxu0 0
        %1407 = vmatpush2.bf16.xpose.msra.mxu0 0
        %1408 = vmatprep.subr.bf16.mxu0 0
        %1409 = vmatpush2.bf16.xpose.msra.mxu0 0
        %1410 = vmatprep.subr.bf16.mxu0 0
        %1411 = vmatpush2.bf16.xpose.msra.mxu0 0
        %1412 = vmatprep.subr.bf16.mxu0 0
        %1413 = vmatpush2.bf16.xpose.msra.mxu0 0
        %1414 = vmatprep.subr.bf16.mxu0 0
        %1415 = vmatpush2.bf16.xpose.msra.mxu0 0
        %1416 = vmatprep.subr.bf16.mxu0 0
        %1417 = vmatpush2.bf16.xpose.msra.mxu0 0
        %1418 = vmatprep.mubr.bf16.mxu0 0
        %1419 = vmatmul.mubr.bf16.gmra.mxu0 %v1381
        %v1420 = vpop.f32.mrf.mxu0
        %v1421 = vadd.f32 %v973, %v1420
        %v1422 = vpop.f32.mrf.mxu0
        %v1423 = vpop.f32.mrf.mxu0
        %v1424 = vpop.f32.mrf.mxu0
        %1425 = vdwg.mxu0
        %v1426 = vsel %vm1314, %v1421, -inf
        %1427 = vmax.xlane.f32.xlu0 %v1426
        %v1428 = vpop.xlane.xlu0 %1427
        %v1429 = vsub.f32 %v1421, %v1428
        %v1430 = vmul.f32 %v1429, 1.442695
        %v1431 = vpow.pop %v1430
        %v1432 = vsel %vm1314, %v1431, 0.0
        %1433 = vadd.xlane.f32.xlu0 %v1432
        %v1434 = vpop.xlane.xlu0 %1433
        %v1435 = vrcp.pop %v1434
        %v1436 = vmul.f32 %v1431, %v1435
        %v1437 = vpack.c.bf16 %v1436, %v1436
        %1439 = vrot.lane.b32.xlu0 %v1266, 96
        %v1440 = vpop.permute.xlu0 %1439
        %v1442 = vsel %vm1314, %v1437, 0
        %v1445 = vsel %vm1330, %v1440, 0
        %1447 = vmatprep.subr.bf16.mxu0 0
        %1448 = vmatpush1.bf16.msra.mxu0 0
        %1449 = vmatprep.subr.bf16.mxu0 0
        %1450 = vmatpush1.bf16.msra.mxu0 0
        %1451 = vmatprep.subr.bf16.mxu0 0
        %1452 = vmatpush1.bf16.msra.mxu0 0
        %1453 = vmatprep.subr.bf16.mxu0 0
        %1454 = vmatpush1.bf16.msra.mxu0 0
        %1455 = vmatprep.subr.bf16.mxu0 0
        %1456 = vmatpush1.bf16.msra.mxu0 0
        %1457 = vmatprep.subr.bf16.mxu0 0
        %1458 = vmatpush1.bf16.msra.mxu0 0
        %1459 = vmatprep.subr.bf16.mxu0 0
        %1460 = vmatpush1.bf16.msra.mxu0 0
        %1461 = vmatprep.subr.bf16.mxu0 0
        %1462 = vmatpush1.bf16.msra.mxu0 %v1445
        %1463 = vmatprep.subr.bf16.mxu0 0
        %1464 = vmatpush2.bf16.msra.mxu0 0
        %1465 = vmatprep.subr.bf16.mxu0 0
        %1466 = vmatpush2.bf16.msra.mxu0 0
        %1467 = vmatprep.subr.bf16.mxu0 0
        %1468 = vmatpush2.bf16.msra.mxu0 0
        %1469 = vmatprep.subr.bf16.mxu0 0
        %1470 = vmatpush2.bf16.msra.mxu0 0
        %1471 = vmatprep.subr.bf16.mxu0 0
        %1472 = vmatpush2.bf16.msra.mxu0 0
        %1473 = vmatprep.subr.bf16.mxu0 0
        %1474 = vmatpush2.bf16.msra.mxu0 0
        %1475 = vmatprep.subr.bf16.mxu0 0
        %1476 = vmatpush2.bf16.msra.mxu0 0
        %1477 = vmatprep.subr.bf16.mxu0 0
        %1478 = vmatpush2.bf16.msra.mxu0 0
        %1479 = vmatprep.mubr.bf16.mxu0 0
        %1480 = vmatmul.mubr.bf16.gmra.mxu0 %v1442
        %v1481 = vpop.f32.mrf.mxu0
        %v1482 = vadd.f32 0.0, %v1481
        %v1483 = vpop.f32.mrf.mxu0
        %v1484 = vpop.f32.mrf.mxu0
        %v1485 = vpop.f32.mrf.mxu0
        %1486 = vdwg.mxu0
        %1487 = vrot.lane.b32.xlu0 %v1264, 64
        %v1488 = vpop.permute.xlu0 %1487
        %1489 = vrot.lane.b32.xlu0 %v1265, 64
        %v1490 = vpop.permute.xlu0 %1489
        %v1492 = vsel %vm1267, %v1488, 0
        %v1495 = vsel %vm1267, %v1490, 0
        %1497 = vmatprep.subr.bf16.mxu0 0
        %1498 = vmatpush1.bf16.xpose.msra.mxu0 0
        %1499 = vmatprep.subr.bf16.mxu0 0
        %1500 = vmatpush1.bf16.xpose.msra.mxu0 0
        %1501 = vmatprep.subr.bf16.mxu0 0
        %1502 = vmatpush1.bf16.xpose.msra.mxu0 0
        %1503 = vmatprep.subr.bf16.mxu0 0
        %1504 = vmatpush1.bf16.xpose.msra.mxu0 0
        %1505 = vmatprep.subr.bf16.mxu0 0
        %1506 = vmatpush1.bf16.xpose.msra.mxu0 0
        %1507 = vmatprep.subr.bf16.mxu0 0
        %1508 = vmatpush1.bf16.xpose.msra.mxu0 0
        %1509 = vmatprep.subr.bf16.mxu0 0
        %1510 = vmatpush1.bf16.xpose.msra.mxu0 0
        %1511 = vmatprep.subr.bf16.mxu0 0
        %1512 = vmatpush1.bf16.xpose.msra.mxu0 %v1495
        %1513 = vmatprep.subr.bf16.mxu0 0
        %1514 = vmatpush2.bf16.xpose.msra.mxu0 0
        %1515 = vmatprep.subr.bf16.mxu0 0
        %1516 = vmatpush2.bf16.xpose.msra.mxu0 0
        %1517 = vmatprep.subr.bf16.mxu0 0
        %1518 = vmatpush2.bf16.xpose.msra.mxu0 0
        %1519 = vmatprep.subr.bf16.mxu0 0
        %1520 = vmatpush2.bf16.xpose.msra.mxu0 0
        %1521 = vmatprep.subr.bf16.mxu0 0
        %1522 = vmatpush2.bf16.xpose.msra.mxu0 0
        %1523 = vmatprep.subr.bf16.mxu0 0
        %1524 = vmatpush2.bf16.xpose.msra.mxu0 0
        %1525 = vmatprep.subr.bf16.mxu0 0
        %1526 = vmatpush2.bf16.xpose.msra.mxu0 0
        %1527 = vmatprep.subr.bf16.mxu0 0
        %1528 = vmatpush2.bf16.xpose.msra.mxu0 0
        %1529 = vmatprep.mubr.bf16.mxu0 0
        %1530 = vmatmul.mubr.bf16.gmra.mxu0 %v1492
        %v1531 = vpop.f32.mrf.mxu0
        %v1532 = vadd.f32 %v973, %v1531
        %v1533 = vpop.f32.mrf.mxu0
        %v1534 = vpop.f32.mrf.mxu0
        %v1535 = vpop.f32.mrf.mxu0
        %1536 = vdwg.mxu0
        %v1537 = vsel %vm1314, %v1532, -inf
        %1538 = vmax.xlane.f32.xlu0 %v1537
        %v1539 = vpop.xlane.xlu0 %1538
        %v1540 = vsub.f32 %v1532, %v1539
        %v1541 = vmul.f32 %v1540, 1.442695
        %v1542 = vpow.pop %v1541
        %v1543 = vsel %vm1314, %v1542, 0.0
        %1544 = vadd.xlane.f32.xlu0 %v1543
        %v1545 = vpop.xlane.xlu0 %1544
        %v1546 = vrcp.pop %v1545
        %v1547 = vmul.f32 %v1542, %v1546
        %v1548 = vpack.c.bf16 %v1547, %v1547
        %1549 = vrot.lane.b32.xlu0 %v1266, 64
        %v1550 = vpop.permute.xlu0 %1549
        %v1552 = vsel %vm1314, %v1548, 0
        %v1555 = vsel %vm1330, %v1550, 0
        %1557 = vmatprep.subr.bf16.mxu0 0
        %1558 = vmatpush1.bf16.msra.mxu0 0
        %1559 = vmatprep.subr.bf16.mxu0 0
        %1560 = vmatpush1.bf16.msra.mxu0 0
        %1561 = vmatprep.subr.bf16.mxu0 0
        %1562 = vmatpush1.bf16.msra.mxu0 0
        %1563 = vmatprep.subr.bf16.mxu0 0
        %1564 = vmatpush1.bf16.msra.mxu0 0
        %1565 = vmatprep.subr.bf16.mxu0 0
        %1566 = vmatpush1.bf16.msra.mxu0 0
        %1567 = vmatprep.subr.bf16.mxu0 0
        %1568 = vmatpush1.bf16.msra.mxu0 0
        %1569 = vmatprep.subr.bf16.mxu0 0
        %1570 = vmatpush1.bf16.msra.mxu0 0
        %1571 = vmatprep.subr.bf16.mxu0 0
        %1572 = vmatpush1.bf16.msra.mxu0 %v1555
        %1573 = vmatprep.subr.bf16.mxu0 0
        %1574 = vmatpush2.bf16.msra.mxu0 0
        %1575 = vmatprep.subr.bf16.mxu0 0
        %1576 = vmatpush2.bf16.msra.mxu0 0
        %1577 = vmatprep.subr.bf16.mxu0 0
        %1578 = vmatpush2.bf16.msra.mxu0 0
        %1579 = vmatprep.subr.bf16.mxu0 0
        %1580 = vmatpush2.bf16.msra.mxu0 0
        %1581 = vmatprep.subr.bf16.mxu0 0
        %1582 = vmatpush2.bf16.msra.mxu0 0
        %1583 = vmatprep.subr.bf16.mxu0 0
        %1584 = vmatpush2.bf16.msra.mxu0 0
        %1585 = vmatprep.subr.bf16.mxu0 0
        %1586 = vmatpush2.bf16.msra.mxu0 0
        %1587 = vmatprep.subr.bf16.mxu0 0
        %1588 = vmatpush2.bf16.msra.mxu0 0
        %1589 = vmatprep.mubr.bf16.mxu0 0
        %1590 = vmatmul.mubr.bf16.gmra.mxu0 %v1552
        %v1591 = vpop.f32.mrf.mxu0
        %v1592 = vadd.f32 0.0, %v1591
        %v1593 = vpop.f32.mrf.mxu0
        %v1594 = vpop.f32.mrf.mxu0
        %v1595 = vpop.f32.mrf.mxu0
        %1596 = vdwg.mxu0
        %1597 = vrot.lane.b32.xlu0 %v1264, 32
        %v1598 = vpop.permute.xlu0 %1597
        %1599 = vrot.lane.b32.xlu0 %v1265, 32
        %v1600 = vpop.permute.xlu0 %1599
        %v1602 = vsel %vm1267, %v1598, 0
        %v1605 = vsel %vm1267, %v1600, 0
        %1607 = vmatprep.subr.bf16.mxu0 0
        %1608 = vmatpush1.bf16.xpose.msra.mxu0 0
        %1609 = vmatprep.subr.bf16.mxu0 0
        %1610 = vmatpush1.bf16.xpose.msra.mxu0 0
        %1611 = vmatprep.subr.bf16.mxu0 0
        %1612 = vmatpush1.bf16.xpose.msra.mxu0 0
        %1613 = vmatprep.subr.bf16.mxu0 0
        %1614 = vmatpush1.bf16.xpose.msra.mxu0 0
        %1615 = vmatprep.subr.bf16.mxu0 0
        %1616 = vmatpush1.bf16.xpose.msra.mxu0 0
        %1617 = vmatprep.subr.bf16.mxu0 0
        %1618 = vmatpush1.bf16.xpose.msra.mxu0 0
        %1619 = vmatprep.subr.bf16.mxu0 0
        %1620 = vmatpush1.bf16.xpose.msra.mxu0 0
        %1621 = vmatprep.subr.bf16.mxu0 0
        %1622 = vmatpush1.bf16.xpose.msra.mxu0 %v1605
        %1623 = vmatprep.subr.bf16.mxu0 0
        %1624 = vmatpush2.bf16.xpose.msra.mxu0 0
        %1625 = vmatprep.subr.bf16.mxu0 0
        %1626 = vmatpush2.bf16.xpose.msra.mxu0 0
        %1627 = vmatprep.subr.bf16.mxu0 0
        %1628 = vmatpush2.bf16.xpose.msra.mxu0 0
        %1629 = vmatprep.subr.bf16.mxu0 0
        %1630 = vmatpush2.bf16.xpose.msra.mxu0 0
        %1631 = vmatprep.subr.bf16.mxu0 0
        %1632 = vmatpush2.bf16.xpose.msra.mxu0 0
        %1633 = vmatprep.subr.bf16.mxu0 0
        %1634 = vmatpush2.bf16.xpose.msra.mxu0 0
        %1635 = vmatprep.subr.bf16.mxu0 0
        %1636 = vmatpush2.bf16.xpose.msra.mxu0 0
        %1637 = vmatprep.subr.bf16.mxu0 0
        %1638 = vmatpush2.bf16.xpose.msra.mxu0 0
        %1639 = vmatprep.mubr.bf16.mxu0 0
        %1640 = vmatmul.mubr.bf16.gmra.mxu0 %v1602
        %v1641 = vpop.f32.mrf.mxu0
        %v1642 = vadd.f32 %v973, %v1641
        %v1643 = vpop.f32.mrf.mxu0
        %v1644 = vpop.f32.mrf.mxu0
        %v1645 = vpop.f32.mrf.mxu0
        %1646 = vdwg.mxu0
        %v1647 = vsel %vm1314, %v1642, -inf
        %1648 = vmax.xlane.f32.xlu0 %v1647
        %v1649 = vpop.xlane.xlu0 %1648
        %v1650 = vsub.f32 %v1642, %v1649
        %v1651 = vmul.f32 %v1650, 1.442695
        %v1652 = vpow.pop %v1651
        %v1653 = vsel %vm1314, %v1652, 0.0
        %1654 = vadd.xlane.f32.xlu0 %v1653
        %v1655 = vpop.xlane.xlu0 %1654
        %v1656 = vrcp.pop %v1655
        %v1657 = vmul.f32 %v1652, %v1656
        %v1658 = vpack.c.bf16 %v1657, %v1657
        %1659 = vrot.lane.b32.xlu0 %v1266, 32
        %v1660 = vpop.permute.xlu0 %1659
        %v1662 = vsel %vm1314, %v1658, 0
        %v1665 = vsel %vm1330, %v1660, 0
        %1667 = vmatprep.subr.bf16.mxu0 0
        %1668 = vmatpush1.bf16.msra.mxu0 0
        %1669 = vmatprep.subr.bf16.mxu0 0
        %1670 = vmatpush1.bf16.msra.mxu0 0
        %1671 = vmatprep.subr.bf16.mxu0 0
        %1672 = vmatpush1.bf16.msra.mxu0 0
        %1673 = vmatprep.subr.bf16.mxu0 0
        %1674 = vmatpush1.bf16.msra.mxu0 0
        %1675 = vmatprep.subr.bf16.mxu0 0
        %1676 = vmatpush1.bf16.msra.mxu0 0
        %1677 = vmatprep.subr.bf16.mxu0 0
        %1678 = vmatpush1.bf16.msra.mxu0 0
        %1679 = vmatprep.subr.bf16.mxu0 0
        %1680 = vmatpush1.bf16.msra.mxu0 0
        %1681 = vmatprep.subr.bf16.mxu0 0
        %1682 = vmatpush1.bf16.msra.mxu0 %v1665
        %1683 = vmatprep.subr.bf16.mxu0 0
        %1684 = vmatpush2.bf16.msra.mxu0 0
        %1685 = vmatprep.subr.bf16.mxu0 0
        %1686 = vmatpush2.bf16.msra.mxu0 0
        %1687 = vmatprep.subr.bf16.mxu0 0
        %1688 = vmatpush2.bf16.msra.mxu0 0
        %1689 = vmatprep.subr.bf16.mxu0 0
        %1690 = vmatpush2.bf16.msra.mxu0 0
        %1691 = vmatprep.subr.bf16.mxu0 0
        %1692 = vmatpush2.bf16.msra.mxu0 0
        %1693 = vmatprep.subr.bf16.mxu0 0
        %1694 = vmatpush2.bf16.msra.mxu0 0
        %1695 = vmatprep.subr.bf16.mxu0 0
        %1696 = vmatpush2.bf16.msra.mxu0 0
        %1697 = vmatprep.subr.bf16.mxu0 0
        %1698 = vmatpush2.bf16.msra.mxu0 0
        %1699 = vmatprep.mubr.bf16.mxu0 0
        %1700 = vmatmul.mubr.bf16.gmra.mxu0 %v1662
        %v1701 = vpop.f32.mrf.mxu0
        %v1702 = vadd.f32 0.0, %v1701
        %v1703 = vpop.f32.mrf.mxu0
        %v1704 = vpop.f32.mrf.mxu0
        %v1705 = vpop.f32.mrf.mxu0
        %1706 = vdwg.mxu0
        %1708 = vrot.lane.b32.xlu0 %v1482, 32
        %v1709 = vpop.permute.xlu0 %1708
        %1712 = vrot.lane.b32.xlu0 %v1592, 64
        %v1713 = vpop.permute.xlu0 %1712
        %1716 = vrot.lane.b32.xlu0 %v1702, 96
        %v1717 = vpop.permute.xlu0 %1716
        %v1719 = vsel %vm1267, %v1369, %v1709
        %vm1720 = vcmask 523264
        %v1721 = vsel %vm1720, %v1719, %v1713
        %vm1722 = vcmask 785408
        %v1723 = vsel %vm1722, %v1721, %v1717
        %v1724 = vpack.c.bf16 %v1723, %v1723
        %v1725 = vld [vmem:[%s772] sm:$0xf]
        %v1726 = vld [vmem:[%s772 + $0x4] sm:$0xf]
        %v1727 = vld [vmem:[%s772 + $0x8] sm:$0xf]
        %v1728 = vld [vmem:[%s772 + $0xc] sm:$0xf]
        %v1729 = vld [vmem:[%s772 + $0x10] sm:$0xf]
        %v1730 = vld [vmem:[%s772 + $0x14] sm:$0xf]
        %v1731 = vld [vmem:[%s772 + $0x18] sm:$0xf]
        %v1732 = vld [vmem:[%s772 + $0x1c] sm:$0xf]
        %v1733 = vld [vmem:[%s772 + $0x20] sm:$0xf]
        %v1734 = vld [vmem:[%s772 + $0x24] sm:$0xf]
        %v1735 = vld [vmem:[%s772 + $0x28] sm:$0xf]
        %v1736 = vld [vmem:[%s772 + $0x2c] sm:$0xf]
        %v1737 = vld [vmem:[%s772 + $0x30] sm:$0xf]
        %v1738 = vld [vmem:[%s772 + $0x34] sm:$0xf]
        %v1739 = vld [vmem:[%s772 + $0x38] sm:$0xf]
        %v1740 = vld [vmem:[%s772 + $0x3c] sm:$0xf]
        %v1757 = vunpack.c.l.b16 %v1725
        %v1758 = vunpack.c.l.b16 %v1726
        %v1759 = vunpack.c.l.b16 %v1727
        %v1760 = vunpack.c.l.b16 %v1728
        %v1761 = vunpack.c.l.b16 %v1729
        %v1762 = vunpack.c.l.b16 %v1730
        %v1763 = vunpack.c.l.b16 %v1731
        %v1764 = vunpack.c.l.b16 %v1732
        %v1765 = vunpack.c.l.b16 %v1733
        %v1766 = vunpack.c.l.b16 %v1734
        %v1767 = vunpack.c.l.b16 %v1735
        %v1768 = vunpack.c.l.b16 %v1736
        %v1769 = vunpack.c.l.b16 %v1737
        %v1770 = vunpack.c.l.b16 %v1738
        %v1771 = vunpack.c.l.b16 %v1739
        %v1772 = vunpack.c.l.b16 %v1740
        %v1773 = vpack.c.b16 %v1758, %v1757
        %v1774 = vpack.c.b16 %v1760, %v1759
        %v1775 = vpack.c.b16 %v1762, %v1761
        %v1776 = vpack.c.b16 %v1764, %v1763
        %v1777 = vpack.c.b16 %v1766, %v1765
        %v1778 = vpack.c.b16 %v1768, %v1767
        %v1779 = vpack.c.b16 %v1770, %v1769
        %v1780 = vpack.c.b16 %v1772, %v1771
        %1789 = vmatprep.subr.bf16.mxu0 0
        %1790 = vmatpush1.bf16.msra.mxu0 %v1780
        %1791 = vmatprep.subr.bf16.mxu0 0
        %1792 = vmatpush1.bf16.msra.mxu0 %v1779
        %1793 = vmatprep.subr.bf16.mxu0 0
        %1794 = vmatpush1.bf16.msra.mxu0 %v1778
        %1795 = vmatprep.subr.bf16.mxu0 0
        %1796 = vmatpush1.bf16.msra.mxu0 %v1777
        %1797 = vmatprep.subr.bf16.mxu0 0
        %1798 = vmatpush1.bf16.msra.mxu0 %v1776
        %1799 = vmatprep.subr.bf16.mxu0 0
        %1800 = vmatpush1.bf16.msra.mxu0 %v1775
        %1801 = vmatprep.subr.bf16.mxu0 0
        %1802 = vmatpush1.bf16.msra.mxu0 %v1774
        %1803 = vmatprep.subr.bf16.mxu0 0
        %1804 = vmatpush1.bf16.msra.mxu0 %v1773
        %1805 = vmatprep.subr.bf16.mxu0 0
        %1806 = vmatpush2.bf16.msra.mxu0 0
        %1807 = vmatprep.subr.bf16.mxu0 0
        %1808 = vmatpush2.bf16.msra.mxu0 0
        %1809 = vmatprep.subr.bf16.mxu0 0
        %1810 = vmatpush2.bf16.msra.mxu0 0
        %1811 = vmatprep.subr.bf16.mxu0 0
        %1812 = vmatpush2.bf16.msra.mxu0 0
        %1813 = vmatprep.subr.bf16.mxu0 0
        %1814 = vmatpush2.bf16.msra.mxu0 0
        %1815 = vmatprep.subr.bf16.mxu0 0
        %1816 = vmatpush2.bf16.msra.mxu0 0
        %1817 = vmatprep.subr.bf16.mxu0 0
        %1818 = vmatpush2.bf16.msra.mxu0 0
        %1819 = vmatprep.subr.bf16.mxu0 0
        %1820 = vmatpush2.bf16.msra.mxu0 0
        %1821 = vmatprep.mubr.bf16.mxu0 0
        %1822 = vmatmul.mubr.bf16.gmra.mxu0 %v1724
        %v1823 = vpop.f32.mrf.mxu0
        %v1824 = vadd.f32 0.0, %v1823
        %v1825 = vpop.f32.mrf.mxu0
        %v1826 = vpop.f32.mrf.mxu0
        %v1827 = vpop.f32.mrf.mxu0
        %1828 = vdwg.mxu0
        %v1829 = vadd.f32 %v972, %v1824
        %v1830 = vld [vmem:[%s926] sm:$0x1]
        %v1832 = vlaneseq
        %v1833 = vshrl.u32 %v1832, 7
        %v1834 = vsub.s32 0, %v1833
        %v1835 = vrot.slane %v1830, %v1834
        %v1837 = vadd.f32 %v1829, %v1835
        %v1838 = vld [vmem:[%s929] sm:$0x1]
        %v1839 = vld [vmem:[%s932] sm:$0x1]
        %1840 = vadd.xlane.f32.xlu0 %v1837
        %v1841 = vpop.xlane.xlu0 %1840
        %v1842 = vmul.f32 %v1841, %v978
        %v1843 = vsub.f32 %v1837, %v1842
        %v1844 = vmul.f32 %v1843, %v1843
        %1845 = vadd.xlane.f32.xlu0 %v1844
        %v1846 = vpop.xlane.xlu0 %1845
        %v1847 = vmul.f32 %v1846, %v978
        %v1848 = vadd.f32 %v1847, 1e-05
        %v1849 = vrsqrt.pop %v1848
        %v1850 = vmul.f32 %v1843, %v1849
        %v1852 = vlaneseq
        %v1853 = vshrl.u32 %v1852, 7
        %v1854 = vsub.s32 0, %v1853
        %v1855 = vrot.slane %v1838, %v1854
        %v1857 = vmul.f32 %v1850, %v1855
        %v1859 = vlaneseq
        %v1860 = vshrl.u32 %v1859, 7
        %v1861 = vsub.s32 0, %v1860
        %v1862 = vrot.slane %v1839, %v1861
        %v1864 = vadd.f32 %v1857, %v1862
        %v1865 = vpack.c.bf16 %v1864, %v1864
        %v1866 = vld [vmem:[%s937] sm:$0xff]
        %v1867 = vld [vmem:[%s937 + $0x8] sm:$0xff]
        %v1868 = vld [vmem:[%s937 + $0x10] sm:$0xff]
        %v1869 = vld [vmem:[%s937 + $0x18] sm:$0xff]
        %v1870 = vld [vmem:[%s937 + $0x20] sm:$0xff]
        %v1871 = vld [vmem:[%s937 + $0x28] sm:$0xff]
        %v1872 = vld [vmem:[%s937 + $0x30] sm:$0xff]
        %v1873 = vld [vmem:[%s937 + $0x38] sm:$0xff]
        %v1874 = vld [vmem:[%s937 + $0x40] sm:$0xff]
        %v1875 = vld [vmem:[%s937 + $0x48] sm:$0xff]
        %v1876 = vld [vmem:[%s937 + $0x50] sm:$0xff]
        %v1877 = vld [vmem:[%s937 + $0x58] sm:$0xff]
        %v1878 = vld [vmem:[%s937 + $0x60] sm:$0xff]
        %v1879 = vld [vmem:[%s937 + $0x68] sm:$0xff]
        %v1880 = vld [vmem:[%s937 + $0x70] sm:$0xff]
        %v1881 = vld [vmem:[%s937 + $0x78] sm:$0xff]
        %v1882 = vld [vmem:[%s941] sm:$0x3]
        %v1884 = vlaneseq
        %v1885 = vshrl.u32 %v1884, 7
        %v1886 = vsub.s32 0, %v1885
        %v1887 = vrot.slane %v1882, %v1886
        %v1888 = vlaneseq
        %v1889 = vshrl.u32 %v1888, 7
        %v1890 = vsub.s32 1, %v1889
        %v1891 = vrot.slane %v1882, %v1890
        %v1910 = vunpack.c.l.b16 %v1866
        %v1911 = vunpack.c.h.b16 %v1866
        %v1912 = vunpack.c.l.b16 %v1867
        %v1913 = vunpack.c.h.b16 %v1867
        %v1914 = vunpack.c.l.b16 %v1868
        %v1915 = vunpack.c.h.b16 %v1868
        %v1916 = vunpack.c.l.b16 %v1869
        %v1917 = vunpack.c.h.b16 %v1869
        %v1918 = vunpack.c.l.b16 %v1870
        %v1919 = vunpack.c.h.b16 %v1870
        %v1920 = vunpack.c.l.b16 %v1871
        %v1921 = vunpack.c.h.b16 %v1871
        %v1922 = vunpack.c.l.b16 %v1872
        %v1923 = vunpack.c.h.b16 %v1872
        %v1924 = vunpack.c.l.b16 %v1873
        %v1925 = vunpack.c.h.b16 %v1873
        %v1926 = vunpack.c.l.b16 %v1874
        %v1927 = vunpack.c.h.b16 %v1874
        %v1928 = vunpack.c.l.b16 %v1875
        %v1929 = vunpack.c.h.b16 %v1875
        %v1930 = vunpack.c.l.b16 %v1876
        %v1931 = vunpack.c.h.b16 %v1876
        %v1932 = vunpack.c.l.b16 %v1877
        %v1933 = vunpack.c.h.b16 %v1877
        %v1934 = vunpack.c.l.b16 %v1878
        %v1935 = vunpack.c.h.b16 %v1878
        %v1936 = vunpack.c.l.b16 %v1879
        %v1937 = vunpack.c.h.b16 %v1879
        %v1938 = vunpack.c.l.b16 %v1880
        %v1939 = vunpack.c.h.b16 %v1880
        %v1940 = vunpack.c.l.b16 %v1881
        %v1941 = vunpack.c.h.b16 %v1881
        %v1942 = vpack.c.b16 %v1912, %v1910
        %v1943 = vpack.c.b16 %v1913, %v1911
        %v1944 = vpack.c.b16 %v1916, %v1914
        %v1945 = vpack.c.b16 %v1917, %v1915
        %v1946 = vpack.c.b16 %v1920, %v1918
        %v1947 = vpack.c.b16 %v1921, %v1919
        %v1948 = vpack.c.b16 %v1924, %v1922
        %v1949 = vpack.c.b16 %v1925, %v1923
        %v1950 = vpack.c.b16 %v1928, %v1926
        %v1951 = vpack.c.b16 %v1929, %v1927
        %v1952 = vpack.c.b16 %v1932, %v1930
        %v1953 = vpack.c.b16 %v1933, %v1931
        %v1954 = vpack.c.b16 %v1936, %v1934
        %v1955 = vpack.c.b16 %v1937, %v1935
        %v1956 = vpack.c.b16 %v1940, %v1938
        %v1957 = vpack.c.b16 %v1941, %v1939
        %1974 = vmatprep.subr.bf16.mxu0 %v1957
        %1975 = vmatpush1.bf16.msra.mxu0 %v1956
        %1976 = vmatprep.subr.bf16.mxu0 %v1955
        %1977 = vmatpush1.bf16.msra.mxu0 %v1954
        %1978 = vmatprep.subr.bf16.mxu0 %v1953
        %1979 = vmatpush1.bf16.msra.mxu0 %v1952
        %1980 = vmatprep.subr.bf16.mxu0 %v1951
        %1981 = vmatpush1.bf16.msra.mxu0 %v1950
        %1982 = vmatprep.subr.bf16.mxu0 %v1949
        %1983 = vmatpush1.bf16.msra.mxu0 %v1948
        %1984 = vmatprep.subr.bf16.mxu0 %v1947
        %1985 = vmatpush1.bf16.msra.mxu0 %v1946
        %1986 = vmatprep.subr.bf16.mxu0 %v1945
        %1987 = vmatpush1.bf16.msra.mxu0 %v1944
        %1988 = vmatprep.subr.bf16.mxu0 %v1943
        %1989 = vmatpush1.bf16.msra.mxu0 %v1942
        %1990 = vmatprep.subr.bf16.mxu0 0
        %1991 = vmatpush2.bf16.msra.mxu0 0
        %1992 = vmatprep.subr.bf16.mxu0 0
        %1993 = vmatpush2.bf16.msra.mxu0 0
        %1994 = vmatprep.subr.bf16.mxu0 0
        %1995 = vmatpush2.bf16.msra.mxu0 0
        %1996 = vmatprep.subr.bf16.mxu0 0
        %1997 = vmatpush2.bf16.msra.mxu0 0
        %1998 = vmatprep.subr.bf16.mxu0 0
        %1999 = vmatpush2.bf16.msra.mxu0 0
        %2000 = vmatprep.subr.bf16.mxu0 0
        %2001 = vmatpush2.bf16.msra.mxu0 0
        %2002 = vmatprep.subr.bf16.mxu0 0
        %2003 = vmatpush2.bf16.msra.mxu0 0
        %2004 = vmatprep.subr.bf16.mxu0 0
        %2005 = vmatpush2.bf16.msra.mxu0 0
        %2006 = vmatprep.mubr.bf16.mxu0 0
        %2007 = vmatmul.mubr.bf16.gmra.mxu0 %v1865
        %v2008 = vpop.f32.mrf.mxu0
        %v2009 = vadd.f32 %v1887, %v2008
        %v2010 = vpop.f32.mrf.mxu0
        %v2011 = vadd.f32 %v1891, %v2010
        %v2012 = vpop.f32.mrf.mxu0
        %v2013 = vpop.f32.mrf.mxu0
        %2014 = vdwg.mxu0
        %v2015 = vmul.f32 %v2009, 0.5
        %v2016 = vmul.f32 %v2011, 0.5
        %v2017 = vmul.f32 %v2009, 0.044715
        %v2018 = vmul.f32 %v2011, 0.044715
        %v2019 = vmul.f32 %v2017, %v2009
        %v2020 = vmul.f32 %v2018, %v2011
        %v2021 = vmul.f32 %v2019, %v2009
        %v2022 = vmul.f32 %v2020, %v2011
        %v2023 = vadd.f32 %v2009, %v2021
        %v2024 = vadd.f32 %v2011, %v2022
        %v2025 = vmul.f32 %v2023, 0.7978846
        %v2026 = vmul.f32 %v2024, 0.7978846
        %v2027 = vtanh.pop %v2025
        %v2028 = vtanh.pop %v2026
        %v2029 = vadd.f32 %v2027, 1.0
        %v2030 = vadd.f32 %v2028, 1.0
        %v2031 = vmul.f32 %v2015, %v2029
        %v2032 = vmul.f32 %v2016, %v2030
        %v2033 = vpack.c.bf16 %v2031, %v2031
        %v2034 = vpack.c.bf16 %v2032, %v2032
        %v2035 = vld [vmem:[%s781] sm:$0xf]
        %v2036 = vld [vmem:[%s781 + $0x4] sm:$0xf]
        %v2037 = vld [vmem:[%s781 + $0x8] sm:$0xf]
        %v2038 = vld [vmem:[%s781 + $0xc] sm:$0xf]
        %v2039 = vld [vmem:[%s781 + $0x10] sm:$0xf]
        %v2040 = vld [vmem:[%s781 + $0x14] sm:$0xf]
        %v2041 = vld [vmem:[%s781 + $0x18] sm:$0xf]
        %v2042 = vld [vmem:[%s781 + $0x1c] sm:$0xf]
        %v2043 = vld [vmem:[%s781 + $0x20] sm:$0xf]
        %v2044 = vld [vmem:[%s781 + $0x24] sm:$0xf]
        %v2045 = vld [vmem:[%s781 + $0x28] sm:$0xf]
        %v2046 = vld [vmem:[%s781 + $0x2c] sm:$0xf]
        %v2047 = vld [vmem:[%s781 + $0x30] sm:$0xf]
        %v2048 = vld [vmem:[%s781 + $0x34] sm:$0xf]
        %v2049 = vld [vmem:[%s781 + $0x38] sm:$0xf]
        %v2050 = vld [vmem:[%s781 + $0x3c] sm:$0xf]
        %v2051 = vld [vmem:[%s781 + $0x40] sm:$0xf]
        %v2052 = vld [vmem:[%s781 + $0x44] sm:$0xf]
        %v2053 = vld [vmem:[%s781 + $0x48] sm:$0xf]
        %v2054 = vld [vmem:[%s781 + $0x4c] sm:$0xf]
        %v2055 = vld [vmem:[%s781 + $0x50] sm:$0xf]
        %v2056 = vld [vmem:[%s781 + $0x54] sm:$0xf]
        %v2057 = vld [vmem:[%s781 + $0x58] sm:$0xf]
        %v2058 = vld [vmem:[%s781 + $0x5c] sm:$0xf]
        %v2059 = vld [vmem:[%s781 + $0x60] sm:$0xf]
        %v2060 = vld [vmem:[%s781 + $0x64] sm:$0xf]
        %v2061 = vld [vmem:[%s781 + $0x68] sm:$0xf]
        %v2062 = vld [vmem:[%s781 + $0x6c] sm:$0xf]
        %v2063 = vld [vmem:[%s781 + $0x70] sm:$0xf]
        %v2064 = vld [vmem:[%s781 + $0x74] sm:$0xf]
        %v2065 = vld [vmem:[%s781 + $0x78] sm:$0xf]
        %v2066 = vld [vmem:[%s781 + $0x7c] sm:$0xf]
        %v2099 = vunpack.c.l.b16 %v2035
        %v2100 = vunpack.c.l.b16 %v2036
        %v2101 = vunpack.c.l.b16 %v2037
        %v2102 = vunpack.c.l.b16 %v2038
        %v2103 = vunpack.c.l.b16 %v2039
        %v2104 = vunpack.c.l.b16 %v2040
        %v2105 = vunpack.c.l.b16 %v2041
        %v2106 = vunpack.c.l.b16 %v2042
        %v2107 = vunpack.c.l.b16 %v2043
        %v2108 = vunpack.c.l.b16 %v2044
        %v2109 = vunpack.c.l.b16 %v2045
        %v2110 = vunpack.c.l.b16 %v2046
        %v2111 = vunpack.c.l.b16 %v2047
        %v2112 = vunpack.c.l.b16 %v2048
        %v2113 = vunpack.c.l.b16 %v2049
        %v2114 = vunpack.c.l.b16 %v2050
        %v2115 = vunpack.c.l.b16 %v2051
        %v2116 = vunpack.c.l.b16 %v2052
        %v2117 = vunpack.c.l.b16 %v2053
        %v2118 = vunpack.c.l.b16 %v2054
        %v2119 = vunpack.c.l.b16 %v2055
        %v2120 = vunpack.c.l.b16 %v2056
        %v2121 = vunpack.c.l.b16 %v2057
        %v2122 = vunpack.c.l.b16 %v2058
        %v2123 = vunpack.c.l.b16 %v2059
        %v2124 = vunpack.c.l.b16 %v2060
        %v2125 = vunpack.c.l.b16 %v2061
        %v2126 = vunpack.c.l.b16 %v2062
        %v2127 = vunpack.c.l.b16 %v2063
        %v2128 = vunpack.c.l.b16 %v2064
        %v2129 = vunpack.c.l.b16 %v2065
        %v2130 = vunpack.c.l.b16 %v2066
        %v2131 = vpack.c.b16 %v2100, %v2099
        %v2132 = vpack.c.b16 %v2102, %v2101
        %v2133 = vpack.c.b16 %v2104, %v2103
        %v2134 = vpack.c.b16 %v2106, %v2105
        %v2135 = vpack.c.b16 %v2108, %v2107
        %v2136 = vpack.c.b16 %v2110, %v2109
        %v2137 = vpack.c.b16 %v2112, %v2111
        %v2138 = vpack.c.b16 %v2114, %v2113
        %v2139 = vpack.c.b16 %v2116, %v2115
        %v2140 = vpack.c.b16 %v2118, %v2117
        %v2141 = vpack.c.b16 %v2120, %v2119
        %v2142 = vpack.c.b16 %v2122, %v2121
        %v2143 = vpack.c.b16 %v2124, %v2123
        %v2144 = vpack.c.b16 %v2126, %v2125
        %v2145 = vpack.c.b16 %v2128, %v2127
        %v2146 = vpack.c.b16 %v2130, %v2129
        %2163 = vmatprep.subr.bf16.mxu0 0
        %2164 = vmatpush1.bf16.msra.mxu0 %v2138
        %2165 = vmatprep.subr.bf16.mxu0 0
        %2166 = vmatpush1.bf16.msra.mxu0 %v2137
        %2167 = vmatprep.subr.bf16.mxu0 0
        %2168 = vmatpush1.bf16.msra.mxu0 %v2136
        %2169 = vmatprep.subr.bf16.mxu0 0
        %2170 = vmatpush1.bf16.msra.mxu0 %v2135
        %2171 = vmatprep.subr.bf16.mxu0 0
        %2172 = vmatpush1.bf16.msra.mxu0 %v2134
        %2173 = vmatprep.subr.bf16.mxu0 0
        %2174 = vmatpush1.bf16.msra.mxu0 %v2133
        %2175 = vmatprep.subr.bf16.mxu0 0
        %2176 = vmatpush1.bf16.msra.mxu0 %v2132
        %2177 = vmatprep.subr.bf16.mxu0 0
        %2178 = vmatpush1.bf16.msra.mxu0 %v2131
        %2179 = vmatprep.subr.bf16.mxu0 0
        %2180 = vmatpush2.bf16.msra.mxu0 %v2146
        %2181 = vmatprep.subr.bf16.mxu0 0
        %2182 = vmatpush2.bf16.msra.mxu0 %v2145
        %2183 = vmatprep.subr.bf16.mxu0 0
        %2184 = vmatpush2.bf16.msra.mxu0 %v2144
        %2185 = vmatprep.subr.bf16.mxu0 0
        %2186 = vmatpush2.bf16.msra.mxu0 %v2143
        %2187 = vmatprep.subr.bf16.mxu0 0
        %2188 = vmatpush2.bf16.msra.mxu0 %v2142
        %2189 = vmatprep.subr.bf16.mxu0 0
        %2190 = vmatpush2.bf16.msra.mxu0 %v2141
        %2191 = vmatprep.subr.bf16.mxu0 0
        %2192 = vmatpush2.bf16.msra.mxu0 %v2140
        %2193 = vmatprep.subr.bf16.mxu0 0
        %2194 = vmatpush2.bf16.msra.mxu0 %v2139
        %2195 = vmatprep.mubr.bf16.mxu0 %v2034
        %2196 = vmatmul.mubr.bf16.gmra.mxu0 %v2033
        %v2197 = vpop.f32.mrf.mxu0
        %v2198 = vadd.f32 0.0, %v2197
        %v2199 = vpop.f32.mrf.mxu0
        %v2200 = vpop.f32.mrf.mxu0
        %v2201 = vpop.f32.mrf.mxu0
        %2202 = vdwg.mxu0
        %v2203 = vadd.f32 %v1837, %v2198
        %v2204 = vld [vmem:[%s944] sm:$0x1]
        %v2206 = vlaneseq
        %v2207 = vshrl.u32 %v2206, 7
        %v2208 = vsub.s32 0, %v2207
        %v2209 = vrot.slane %v2204, %v2208
        %v2211 = vadd.f32 %v2203, %v2209
        %2212 = vst [vmem:[#allocation2] sm:$0xff] %v2211
        %p2213 = scmp.eq.s32.totalorder %s44, 1
        // Predicated region
        $region113: #{prefill.1} parent=91 // pred_check
          %p2214 = pneg %p2213
        $region114: #{prefill.1} parent=91 // pred_check_branch
          %2216 = sbr.rel (%p2214) target = $region116
        $region115: #{prefill.1} parent=91 // pred_region
          %v2217 = vld [vmem:[%s14] sm:$0x1]
          %v2218 = vld [vmem:[%s15] sm:$0x1]
          %vm2219 = vcmask 1047559
          %v2220 = vsel %vm2219, %v2211, 0.0
          %2221 = vadd.xlane.f32.xlu0 %v2220
          %v2222 = vpop.xlane.xlu0 %2221
          %v2223 = vmul.f32 %v2222, %v978
          %v2224 = vsub.f32 %v2211, %v2223
          %v2225 = vmul.f32 %v2224, %v2224
          %v2226 = vsel %vm2219, %v2225, 0.0
          %2227 = vadd.xlane.f32.xlu0 %v2226
          %v2228 = vpop.xlane.xlu0 %2227
          %v2229 = vmul.f32 %v2228, %v978
          %v2230 = vadd.f32 %v2229, 1e-05
          %v2231 = vrsqrt.pop %v2230
          %v2232 = vmul.f32 %v2224, %v2231
          %v2234 = vlaneseq
          %v2235 = vshrl.u32 %v2234, 7
          %v2236 = vsub.s32 0, %v2235
          %v2237 = vrot.slane %v2217, %v2236
          %v2239 = vmul.f32 %v2232, %v2237
          %v2241 = vlaneseq
          %v2242 = vshrl.u32 %v2241, 7
          %v2243 = vsub.s32 0, %v2242
          %v2244 = vrot.slane %v2218, %v2243
          %v2246 = vadd.f32 %v2239, %v2244
          %v2247 = vpack.c.bf16 %v2246, %v2246
          %v2248 = vld [vmem:[#allocation8] sm:$0xff]
          %v2249 = vld [vmem:[#allocation8 + $0x8] sm:$0xff]
          %v2250 = vld [vmem:[#allocation8 + $0x10] sm:$0xff]
          %v2251 = vld [vmem:[#allocation8 + $0x18] sm:$0xff]
          %v2252 = vld [vmem:[#allocation8 + $0x20] sm:$0xff]
          %v2253 = vld [vmem:[#allocation8 + $0x28] sm:$0xff]
          %v2254 = vld [vmem:[#allocation8 + $0x30] sm:$0xff]
          %v2255 = vld [vmem:[#allocation8 + $0x38] sm:$0xff]
          %v2256 = vld [vmem:[#allocation8 + $0x40] sm:$0xff]
          %v2257 = vld [vmem:[#allocation8 + $0x48] sm:$0xff]
          %v2258 = vld [vmem:[#allocation8 + $0x50] sm:$0xff]
          %v2259 = vld [vmem:[#allocation8 + $0x58] sm:$0xff]
          %v2260 = vld [vmem:[#allocation8 + $0x60] sm:$0xff]
          %v2261 = vld [vmem:[#allocation8 + $0x68] sm:$0xff]
          %v2262 = vld [vmem:[#allocation8 + $0x70] sm:$0xff]
          %v2263 = vld [vmem:[#allocation8 + $0x78] sm:$0xff]
          %v2264 = vld [vmem:[%s17] sm:$0x3]
          %v2266 = vshrl.u32 %v2247, 16
          %v2268 = vrot.slane %v2266, 3
          %v2286 = vunpack.c.l.b16 %v2248
          %v2287 = vunpack.c.h.b16 %v2248
          %v2288 = vunpack.c.l.b16 %v2249
          %v2289 = vunpack.c.h.b16 %v2249
          %v2290 = vunpack.c.l.b16 %v2250
          %v2291 = vunpack.c.h.b16 %v2250
          %v2292 = vunpack.c.l.b16 %v2251
          %v2293 = vunpack.c.h.b16 %v2251
          %v2294 = vunpack.c.l.b16 %v2252
          %v2295 = vunpack.c.h.b16 %v2252
          %v2296 = vunpack.c.l.b16 %v2253
          %v2297 = vunpack.c.h.b16 %v2253
          %v2298 = vunpack.c.l.b16 %v2254
          %v2299 = vunpack.c.h.b16 %v2254
          %v2300 = vunpack.c.l.b16 %v2255
          %v2301 = vunpack.c.h.b16 %v2255
          %v2302 = vunpack.c.l.b16 %v2256
          %v2303 = vunpack.c.h.b16 %v2256
          %v2304 = vunpack.c.l.b16 %v2257
          %v2305 = vunpack.c.h.b16 %v2257
          %v2306 = vunpack.c.l.b16 %v2258
          %v2307 = vunpack.c.h.b16 %v2258
          %v2308 = vunpack.c.l.b16 %v2259
          %v2309 = vunpack.c.h.b16 %v2259
          %v2310 = vunpack.c.l.b16 %v2260
          %v2311 = vunpack.c.h.b16 %v2260
          %v2312 = vunpack.c.l.b16 %v2261
          %v2313 = vunpack.c.h.b16 %v2261
          %v2314 = vunpack.c.l.b16 %v2262
          %v2315 = vunpack.c.h.b16 %v2262
          %v2316 = vunpack.c.l.b16 %v2263
          %v2317 = vunpack.c.h.b16 %v2263
          %v2318 = vpack.c.b16 %v2288, %v2286
          %v2319 = vpack.c.b16 %v2289, %v2287
          %v2320 = vpack.c.b16 %v2292, %v2290
          %v2321 = vpack.c.b16 %v2293, %v2291
          %v2322 = vpack.c.b16 %v2296, %v2294
          %v2323 = vpack.c.b16 %v2297, %v2295
          %v2324 = vpack.c.b16 %v2300, %v2298
          %v2325 = vpack.c.b16 %v2301, %v2299
          %v2326 = vpack.c.b16 %v2304, %v2302
          %v2327 = vpack.c.b16 %v2305, %v2303
          %v2328 = vpack.c.b16 %v2308, %v2306
          %v2329 = vpack.c.b16 %v2309, %v2307
          %v2330 = vpack.c.b16 %v2312, %v2310
          %v2331 = vpack.c.b16 %v2313, %v2311
          %v2332 = vpack.c.b16 %v2316, %v2314
          %v2333 = vpack.c.b16 %v2317, %v2315
          %v2351 = vlaneseq
          %v2352 = vshrl.u32 %v2351, 7
          %v2353 = vsub.s32 0, %v2352
          %v2354 = vrot.slane %v2264, %v2353
          %v2355 = vlaneseq
          %v2356 = vshrl.u32 %v2355, 7
          %v2357 = vsub.s32 1, %v2356
          %v2358 = vrot.slane %v2264, %v2357
          %2361 = vmatprep.subr.bf16.mxu0 %v2333
          %2362 = vmatpush1.bf16.msra.mxu0 %v2332
          %2363 = vmatprep.subr.bf16.mxu0 %v2331
          %2364 = vmatpush1.bf16.msra.mxu0 %v2330
          %2365 = vmatprep.subr.bf16.mxu0 %v2329
          %2366 = vmatpush1.bf16.msra.mxu0 %v2328
          %2367 = vmatprep.subr.bf16.mxu0 %v2327
          %2368 = vmatpush1.bf16.msra.mxu0 %v2326
          %2369 = vmatprep.subr.bf16.mxu0 %v2325
          %2370 = vmatpush1.bf16.msra.mxu0 %v2324
          %2371 = vmatprep.subr.bf16.mxu0 %v2323
          %2372 = vmatpush1.bf16.msra.mxu0 %v2322
          %2373 = vmatprep.subr.bf16.mxu0 %v2321
          %2374 = vmatpush1.bf16.msra.mxu0 %v2320
          %2375 = vmatprep.subr.bf16.mxu0 %v2319
          %2376 = vmatpush1.bf16.msra.mxu0 %v2318
          %2377 = vmatprep.subr.bf16.mxu0 0
          %2378 = vmatpush2.bf16.msra.mxu0 0
          %2379 = vmatprep.subr.bf16.mxu0 0
          %2380 = vmatpush2.bf16.msra.mxu0 0
          %2381 = vmatprep.subr.bf16.mxu0 0
          %2382 = vmatpush2.bf16.msra.mxu0 0
          %2383 = vmatprep.subr.bf16.mxu0 0
          %2384 = vmatpush2.bf16.msra.mxu0 0
          %2385 = vmatprep.subr.bf16.mxu0 0
          %2386 = vmatpush2.bf16.msra.mxu0 0
          %2387 = vmatprep.subr.bf16.mxu0 0
          %2388 = vmatpush2.bf16.msra.mxu0 0
          %2389 = vmatprep.subr.bf16.mxu0 0
          %2390 = vmatpush2.bf16.msra.mxu0 0
          %2391 = vmatprep.subr.bf16.mxu0 0
          %2392 = vmatpush2.bf16.msra.mxu0 0
          %2393 = vmatprep.mubr.bf16.mxu0 0
          %2394 = vmatmul.mubr.bf16.gmra.mxu0 %v2268
          %v2395 = vpop.f32.mrf.mxu0
          %v2396 = vadd.f32 %v2354, %v2395
          %v2397 = vpop.f32.mrf.mxu0
          %v2398 = vadd.f32 %v2358, %v2397
          %v2399 = vpop.f32.mrf.mxu0
          %v2400 = vpop.f32.mrf.mxu0
          %2401 = vdwg.mxu0
          %v2404 = vcombine.low %v2396, %v2398
          %v2406 = vunpack.c.l.s4 1966171168
          %v2407 = vunpack.c.0.s8 %v2406
          %v2408 = vlaneseq
          %v2409 = vshrl.u32 %v2408, 7
          %v2410 = vsub.s32 %v2407, %v2409
          %v2411 = vrot.slane %v2404, %v2410
          %v2413 = vunpack.c.l.s4 1966171168
          %v2414 = vunpack.c.0.s8 %v2413
          %v2415 = vlaneseq
          %v2416 = vshrl.u32 %v2415, 7
          %v2417 = vsub.s32 %v2414, %v2416
          %v2418 = vrot.slane %v2411, %v2417
          %v2420 = vlaneseq
          %vm2421 = vcmp.ge.s32.totalorder %v2420, 0
          %vm2422 = vcmp.lt.s32.totalorder %v2420, 256
          %vm2423 = vmand %vm2421, %vm2422
          %2424 = vst.msk [vmem:[%s948] sm:$0x3] %vm2423, %v2418
        $region116: #{prefill.1} parent=91 // pred_fallthru
          _
        %p2425 = scmp.lt.s32.totalorder %s43, 1
        %s2426 = scalar_select %p2425, %s43, 1
        %s2427 = smul.addr %s2426, 2
        %s2428 = scalar_lea.vmem %s18, %s2427
        %p2429 = scmp.lt.s32.totalorder %s44, 1
        %s2430 = scalar_select %p2429, %s44, 1
        %p2431 = scmp.lt.s32.totalorder %s43, 1
        %s2432 = scalar_select %p2431, %s43, 1
        %s2433 = smul.addr %s2430, 2
        %s2434 = sadd.s32 %s2432, %s2433
        %s2435 = smul.addr %s2434, 8
        %s2436 = scalar_lea.vmem %s19, %s2435
        %p2437 = scmp.lt.s32.totalorder %s44, 1
        %s2438 = scalar_select %p2437, %s44, 1
        %p2439 = scmp.lt.s32.totalorder %s43, 1
        %s2440 = scalar_select %p2439, %s43, 1
        %s2441 = smul.addr %s2438, 2
        %s2442 = sadd.s32 %s2440, %s2441
        %s2443 = smul.addr %s2442, 8
        %s2444 = scalar_lea.vmem %s20, %s2443
        // Predicated region
        $region117: #{prefill.1} parent=91 // pred_check
          %p2445 = pneg %p517
        $region118: #{prefill.1} parent=91 // pred_check_branch
          %2447 = sbr.rel (%p2445) target = $region120
        $region119: #{prefill.1} parent=91 // pred_region
          _
        $region120: #{prefill.1} parent=91 // pred_fallthru
          _
        // Predicated region
        $region121: #{prefill.1} parent=91 // pred_check
          %p2448 = pneg %p545
        $region122: #{prefill.1} parent=91 // pred_check_branch
          %2450 = sbr.rel (%p2448) target = $region124
        $region123: #{prefill.1} parent=91 // pred_region
          _
        $region124: #{prefill.1} parent=91 // pred_fallthru
          _
        // Predicated region
        $region125: #{prefill.1} parent=91 // pred_check
          %p2451 = pneg %p573
        $region126: #{prefill.1} parent=91 // pred_check_branch
          %2453 = sbr.rel (%p2451) target = $region128
        $region127: #{prefill.1} parent=91 // pred_region
          _
        $region128: #{prefill.1} parent=91 // pred_fallthru
          _
      $region92: #{prefill.1} parent=5 // pred_fallthru
        _
      %p2454 = scmp.le.s32.totalorder 2, %s34
      // Predicated region
      $region129: #{prefill.1} parent=5 // pred_check
        %p2455 = pneg %p2454
      $region130: #{prefill.1} parent=5 // pred_check_branch
        %2457 = sbr.rel (%p2455) target = $region132
      $region131: #{prefill.1} parent=5 // pred_region
        %s2458 = ssub.s32 %s34, 2
        // Predicated region
        $region133: #{prefill.1} parent=131 // pred_check
          %p2459 = pneg %p523
        $region134: #{prefill.1} parent=131 // pred_check_branch
          %2461 = sbr.rel (%p2459) target = $region136
        $region135: #{prefill.1} parent=131 // pred_region
          %p2462 = scmp.lt.s32.totalorder %s45, 1
          %s2463 = scalar_select %p2462, %s45, 1
          %s2464 = smul.addr %s2463, 2
          %s2465 = scalar_lea.vmem %s18, %s2464
        $region136: #{prefill.1} parent=131 // pred_fallthru
          _
        // Predicated region
        $region137: #{prefill.1} parent=131 // pred_check
          %p2466 = pneg %p551
        $region138: #{prefill.1} parent=131 // pred_check_branch
          %2468 = sbr.rel (%p2466) target = $region140
        $region139: #{prefill.1} parent=131 // pred_region
          %p2469 = scmp.lt.s32.totalorder %s46, 1
          %s2470 = scalar_select %p2469, %s46, 1
          %p2471 = scmp.lt.s32.totalorder %s45, 1
          %s2472 = scalar_select %p2471, %s45, 1
          %s2473 = smul.addr %s2470, 2
          %s2474 = sadd.s32 %s2472, %s2473
          %s2475 = smul.addr %s2474, 8
          %s2476 = scalar_lea.vmem %s19, %s2475
        $region140: #{prefill.1} parent=131 // pred_fallthru
          _
        // Predicated region
        $region141: #{prefill.1} parent=131 // pred_check
          %p2477 = pneg %p579
        $region142: #{prefill.1} parent=131 // pred_check_branch
          %2479 = sbr.rel (%p2477) target = $region144
        $region143: #{prefill.1} parent=131 // pred_region
          %p2480 = scmp.lt.s32.totalorder %s46, 1
          %s2481 = scalar_select %p2480, %s46, 1
          %p2482 = scmp.lt.s32.totalorder %s45, 1
          %s2483 = scalar_select %p2482, %s45, 1
          %s2484 = smul.addr %s2481, 2
          %s2485 = sadd.s32 %s2483, %s2484
          %s2486 = smul.addr %s2485, 8
          %s2487 = scalar_lea.vmem %s20, %s2486
        $region144: #{prefill.1} parent=131 // pred_fallthru
          _
      $region132: #{prefill.1} parent=5 // pred_fallthru
        _
    $region6: #{prefill.1} parent=1 // loop_footer
      %s38 = sadd.s32 1, %s34
    $region7: #{prefill.1} parent=1 // loop_footer_branch
      %33 = sbr.rel target = $region3
    $region8: #{prefill.1} parent=1 // loop_exit
      _
    %2488 = vsyncpa [#allocation4], 1
    %s2489 = scalar_lea.sflag [#allocation4], 1
    %2490 = vsyncpa %s2489, 1
    %2491 = vsyncpa [#allocation6], 1
    %s2492 = scalar_lea.sflag [#allocation6], 1
    %2493 = vsyncpa %s2492, 1
    %2494 = vsyncpa [#allocation9], 1

</llo_original>
